<compile_context>
chip_gen: v7x
topology: tpu7x:2x2x1
jax: 0.10.0
libtpu: 0.0.40
codegen_flags: <defaults>
</compile_context>

<pallas_src>
import functools

import jax
import jax.numpy as jnp
from jax import lax
from jax.experimental import pallas as pl
from jax.experimental.pallas import tpu as pltpu


# ----------------------------- Pallas kernel ------------------------------- #
def _pinn_mlp_kernel(x_ref,
                     w1_ref, b1_ref,
                     w2_ref, b2_ref,
                     w3_ref, b3_ref,
                     w4_ref, b4_ref,
                     o_ref,
                     *, sub_n, num_subtiles, use_bf16):
    """Forward pass for one lane-tile of batch points.

    x_ref : (num_inputs, tile_n) f32   batch on the lane axis
    w*    : (out, in)            f32
    b*    : (out, 1)             f32   broadcasts over lanes
    o_ref : (num_outputs, tile_n) f32
    """
    # Params: loaded once per grid step, loop-invariant vregs (~7 KiB total).
    w1 = w1_ref[...]
    b1 = b1_ref[...]
    w2 = w2_ref[...]
    b2 = b2_ref[...]
    w3 = w3_ref[...]
    b3 = b3_ref[...]
    w4 = w4_ref[...]
    b4 = b4_ref[...]

    if use_bf16:
        # bf16 EUP/VPU path (v6e / v7x only); dots still accumulate in f32.
        w2, w3, w4 = (w.astype(jnp.bfloat16) for w in (w2, w3, w4))

    dot = functools.partial(
        jnp.dot,
        preferred_element_type=jnp.float32,
        precision=jax.lax.Precision.HIGHEST,   # free here: MXU has huge slack
    )

    def act(h):
        # jnp.tanh lowers to the single hardware tanh on the EUP (the saturated
        # VLIW slot for this kernel: ~80 tanh per point).
        if use_bf16:
            h = h.astype(jnp.bfloat16)
        return jnp.tanh(h)

    def body(s, carry):
        start = pl.multiple_of(s * sub_n, sub_n)
        xs = x_ref[:, pl.ds(start, sub_n)]                  # (num_inputs, sub_n)

        # Layer 1: K = num_inputs = 2 -> VPU broadcast-FMAs (skip the MXU).
        h = b1
        for c in range(w1.shape[1]):                         # static trip count
            h = h + w1[:, c:c + 1] * xs[c:c + 1, :]
        h = act(h)                                           # (32, sub_n)

        h = act(dot(w2, h) + b2)                             # (16, sub_n)
        h = act(dot(w3, h) + b3)                             # (32, sub_n)

        # Output layer (no activation); lane-dense store.
        o_ref[:, pl.ds(start, sub_n)] = (dot(w4, h) + b4).astype(o_ref.dtype)
        return carry

    # Unrolled inner loop over lane sub-columns: keeps the per-sub-block live set
    # small and gives the LLO scheduler EUP/MXU/VPU overlap across sub-blocks.
    lax.fori_loop(0, num_subtiles, body, 0, unroll=True)


# ------------------------------ wrappers ------------------------------------ #
@functools.partial(jax.jit, static_argnames=("tile_n", "sub_n", "use_bf16"))
def pinn_forward_t(xt, params, *, tile_n=2048, sub_n=512, use_bf16=False):
    """Core entry point: xt is (num_inputs, N) f32; returns (num_outputs, N) f32.

    Keep collocation points stored as (num_inputs, N) across training steps so no
    per-step pad/transpose XLA ops are needed.  N need not be a multiple of the
    tile: the last grid block is partial (masked store; tail lanes never read back).
    """
    num_inputs, n = xt.shape
    w1, b1 = params["w1"], params["b1"]
    w2, b2 = params["w2"], params["b2"]
    w3, b3 = params["w3"], params["b3"]
    w4, b4 = params["w4"], params["b4"]
    num_outputs = w4.shape[0]

    assert sub_n % 128 == 0, "sub_n must be a multiple of 128 (lane-dense)"
    assert tile_n % sub_n == 0, "tile_n must be a multiple of sub_n"

    # Keep every block inside the array bounds and give v7x's two TensorCores
    # >= 2 grid steps when N allows, by shrinking the lane tile for small N.
    if n < sub_n:
        sub_n = tile_n = n                       # single full-extent block
    else:
        tile_n = min(tile_n, (n // sub_n) * sub_n)
    num_subtiles = tile_n // sub_n
    grid = (pl.cdiv(n, tile_n),)

    params_list = [w1, b1, w2, b2, w3, b3, w4, b4]

    # Full-extent blocks with constant index_map -> DMA'd once, held in VMEM.
    def full_spec(arr):
        nd = arr.ndim
        return pl.BlockSpec(arr.shape, lambda i, _nd=nd: (0,) * _nd)

    # Advisory cost so XLA schedules the surrounding (PINN residual) ops sensibly.
    macs = sum(w.shape[0] * w.shape[1] for w in (w1, w2, w3, w4))       # 1120/pt
    n_tanh = b1.shape[0] + b2.shape[0] + b3.shape[0]                    # 80/pt
    param_bytes = sum(a.size * a.dtype.itemsize for a in params_list)
    cost = pl.CostEstimate(
        flops=2 * macs * n,
        transcendentals=n_tanh * n,
        bytes_accessed=(num_inputs + num_outputs) * 4 * n + param_bytes,
    )

    kernel = functools.partial(
        _pinn_mlp_kernel,
        sub_n=sub_n,
        num_subtiles=num_subtiles,
        use_bf16=use_bf16,
    )

    return pl.pallas_call(
        kernel,
        out_shape=jax.ShapeDtypeStruct((num_outputs, n), jnp.float32),
        grid_spec=pltpu.PrefetchScalarGridSpec(
            num_scalar_prefetch=0,
            grid=grid,
            in_specs=[pl.BlockSpec((num_inputs, tile_n), lambda i: (0, i))]
                     + [full_spec(a) for a in params_list],
            out_specs=pl.BlockSpec((num_outputs, tile_n), lambda i: (0, i)),
        ),
        compiler_params=pltpu.CompilerParams(
            dimension_semantics=("parallel",),    # shards grid across v7x's 2 TCs
        ),
        cost_estimate=cost,
    )(xt, *params_list)


def pinn_forward(x, params, *, tile_n=2048, sub_n=512, use_bf16=False):
    """nn.Module-compatible entry: x (N, num_inputs) -> (N, num_outputs).

    The transposes here are layout plumbing only; in a training loop keep the
    points stored as (num_inputs, N) and call `pinn_forward_t` directly.
    """
    out_t = pinn_forward_t(x.T, params, tile_n=tile_n, sub_n=sub_n,
                           use_bf16=use_bf16)
    return out_t.T


# -------------------------- parameter init --------------------------------- #
def init_params(key, num_inputs=2, layers=(32, 16, 32), num_outputs=1):
    """nn.Linear-style init U(-1/sqrt(fan_in), +1/sqrt(fan_in)).

    Weights stored PyTorch-style as (out_features, in_features); biases as
    (out_features, 1) so they broadcast over the lane (batch) axis in-kernel.
    Layer sizes implied by the module's get_model():
      Linear(2,32), Linear(32,16), Linear(16,32), Linear(32,1)
    """
    dims = [
        (layers[0], num_inputs),
        (layers[1], layers[0]),
        (layers[2], layers[1]),
        (num_outputs, layers[2]),
    ]
    params = {}
    for idx, (fan_out, fan_in) in enumerate(dims, start=1):
        key, kw, kb = jax.random.split(key, 3)
        bound = 1.0 / float(fan_in) ** 0.5
        params[f"w{idx}"] = jax.random.uniform(
            kw, (fan_out, fan_in), jnp.float32, -bound, bound
        )
        params[f"b{idx}"] = jax.random.uniform(
            kb, (fan_out, 1), jnp.float32, -bound, bound
        )
    return params


# pure-JAX reference for verification (same HIGHEST matmul precision)
def pinn_forward_ref(x, p):
    hp = jax.lax.Precision.HIGHEST
    h = jnp.tanh(jnp.dot(x, p["w1"].T, precision=hp) + p["b1"].T)
    h = jnp.tanh(jnp.dot(h, p["w2"].T, precision=hp) + p["b2"].T)
    h = jnp.tanh(jnp.dot(h, p["w3"].T, precision=hp) + p["b3"].T)
    return jnp.dot(h, p["w4"].T, precision=hp) + p["b4"].T


if __name__ == "__main__":
    key = jax.random.PRNGKey(0)
    kp, kx = jax.random.split(key)

    params = init_params(kp)

    # (N, 2) collocation points (t, x) for Burgers' PINN.  N is deliberately not
    # a multiple of the tile so the partial-last-block path is exercised, and the
    # tile/sub-tile choice gives a 2-step "parallel" grid (both v7x cores get
    # work) with 2 strip-mined sub-columns per grid step.
    N = 1000
    x = jax.random.normal(kx, (N, 2), jnp.float32)

    out = pinn_forward(x, params, tile_n=512, sub_n=256)
    out = jax.block_until_ready(out)

    ref = pinn_forward_ref(x, params)
    assert out.shape == (N, 1)
    assert jnp.allclose(out, ref, atol=1e-4, rtol=1e-4), float(
        jnp.max(jnp.abs(out - ref))
    )

    print("KERNEL_OK")
</pallas_src>

<mosaic_0001>
module attributes {stable_mosaic.version = 11 : i64} {
  func.func @_pinn_mlp_kernel(%arg0: i32, %arg1: memref<2x512xf32, #tpu.memory_space<vmem>>, %arg2: memref<32x2xf32, #tpu.memory_space<vmem>>, %arg3: memref<32x1xf32, #tpu.memory_space<vmem>>, %arg4: memref<16x32xf32, #tpu.memory_space<vmem>>, %arg5: memref<16x1xf32, #tpu.memory_space<vmem>>, %arg6: memref<32x16xf32, #tpu.memory_space<vmem>>, %arg7: memref<32x1xf32, #tpu.memory_space<vmem>>, %arg8: memref<1x32xf32, #tpu.memory_space<vmem>>, %arg9: memref<1x1xf32, #tpu.memory_space<vmem>>, %arg10: memref<1x512xf32, #tpu.memory_space<vmem>>) attributes {dimension_semantics = [#tpu.dimension_semantics<parallel>], iteration_bounds = array<i64: 2>, scalar_prefetch = 0 : i64, scratch_operands = 0 : i64, tpu.core_type = #tpu.core_type<tc>, window_params = [{transform_indices = @transform_0, window_bounds = array<i64: 2, 512>}, {pipeline_mode = #tpu.pipeline_mode<synchronous>, transform_indices = @transform_1, window_bounds = array<i64: 32, 2>}, {pipeline_mode = #tpu.pipeline_mode<synchronous>, transform_indices = @transform_2, window_bounds = array<i64: 32, 1>}, {pipeline_mode = #tpu.pipeline_mode<synchronous>, transform_indices = @transform_3, window_bounds = array<i64: 16, 32>}, {pipeline_mode = #tpu.pipeline_mode<synchronous>, transform_indices = @transform_4, window_bounds = array<i64: 16, 1>}, {pipeline_mode = #tpu.pipeline_mode<synchronous>, transform_indices = @transform_5, window_bounds = array<i64: 32, 16>}, {pipeline_mode = #tpu.pipeline_mode<synchronous>, transform_indices = @transform_6, window_bounds = array<i64: 32, 1>}, {pipeline_mode = #tpu.pipeline_mode<synchronous>, transform_indices = @transform_7, window_bounds = array<i64: 1, 32>}, {pipeline_mode = #tpu.pipeline_mode<synchronous>, transform_indices = @transform_8, window_bounds = array<i64: 1, 1>}, {transform_indices = @transform_9, window_bounds = array<i64: 1, 512>}]} {
    %c0 = arith.constant 0 : index
    %c0_0 = arith.constant 0 : index
    %0 = vector.load %arg2[%c0, %c0_0] : memref<32x2xf32, #tpu.memory_space<vmem>>, vector<32x2xf32>
    %c0_1 = arith.constant 0 : index
    %c0_2 = arith.constant 0 : index
    %1 = vector.load %arg3[%c0_1, %c0_2] : memref<32x1xf32, #tpu.memory_space<vmem>>, vector<32x1xf32>
    %c0_3 = arith.constant 0 : index
    %c0_4 = arith.constant 0 : index
    %2 = vector.load %arg4[%c0_3, %c0_4] : memref<16x32xf32, #tpu.memory_space<vmem>>, vector<16x32xf32>
    %c0_5 = arith.constant 0 : index
    %c0_6 = arith.constant 0 : index
    %3 = vector.load %arg5[%c0_5, %c0_6] : memref<16x1xf32, #tpu.memory_space<vmem>>, vector<16x1xf32>
    %c0_7 = arith.constant 0 : index
    %c0_8 = arith.constant 0 : index
    %4 = vector.load %arg6[%c0_7, %c0_8] : memref<32x16xf32, #tpu.memory_space<vmem>>, vector<32x16xf32>
    %c0_9 = arith.constant 0 : index
    %c0_10 = arith.constant 0 : index
    %5 = vector.load %arg7[%c0_9, %c0_10] : memref<32x1xf32, #tpu.memory_space<vmem>>, vector<32x1xf32>
    %c0_11 = arith.constant 0 : index
    %c0_12 = arith.constant 0 : index
    %6 = vector.load %arg8[%c0_11, %c0_12] : memref<1x32xf32, #tpu.memory_space<vmem>>, vector<1x32xf32>
    %c0_13 = arith.constant 0 : index
    %c0_14 = arith.constant 0 : index
    %7 = vector.load %arg9[%c0_13, %c0_14] : memref<1x1xf32, #tpu.memory_space<vmem>>, vector<1x1xf32>
    %c0_i32 = arith.constant 0 : i32
    %c256_i32 = arith.constant 256 : i32
    %8 = arith.muli %c0_i32, %c256_i32 : i32
    %9 = tpu.assume_multiple %8, 256 : i32
    %c0_15 = arith.constant 0 : index
    %10 = arith.index_cast %9 : i32 to index
    %11 = vector.load %arg1[%c0_15, %10] : memref<2x512xf32, #tpu.memory_space<vmem>>, vector<2x256xf32>
    %12 = vector.extract_strided_slice %0 {offsets = [0, 0], sizes = [32, 1], strides = [1, 1]} : vector<32x2xf32> to vector<32x1xf32>
    %13 = vector.extract_strided_slice %11 {offsets = [0, 0], sizes = [1, 256], strides = [1, 1]} : vector<2x256xf32> to vector<1x256xf32>
    %14 = vector.broadcast %12 : vector<32x1xf32> to vector<32x256xf32>
    %15 = vector.broadcast %13 : vector<1x256xf32> to vector<32x256xf32>
    %16 = arith.mulf %14, %15 : vector<32x256xf32>
    %17 = vector.broadcast %1 : vector<32x1xf32> to vector<32x256xf32>
    %18 = arith.addf %17, %16 : vector<32x256xf32>
    %19 = vector.extract_strided_slice %0 {offsets = [0, 1], sizes = [32, 1], strides = [1, 1]} : vector<32x2xf32> to vector<32x1xf32>
    %20 = vector.extract_strided_slice %11 {offsets = [1, 0], sizes = [1, 256], strides = [1, 1]} : vector<2x256xf32> to vector<1x256xf32>
    %21 = vector.broadcast %19 : vector<32x1xf32> to vector<32x256xf32>
    %22 = vector.broadcast %20 : vector<1x256xf32> to vector<32x256xf32>
    %23 = arith.mulf %21, %22 : vector<32x256xf32>
    %24 = arith.addf %18, %23 : vector<32x256xf32>
    %25 = math.tanh %24 : vector<32x256xf32>
    %cst = arith.constant dense<0.000000e+00> : vector<16x256xf32>
    %26 = tpu.matmul %2, %25, %cst {dimension_numbers = #tpu.dot_dimension_numbers<[1], [0], [0], [1], [0, 0, 1, 1], [], []>, precision = #tpu.contract_precision<fp32>} : vector<16x32xf32>, vector<32x256xf32>, vector<16x256xf32> -> vector<16x256xf32>
    %27 = vector.broadcast %3 : vector<16x1xf32> to vector<16x256xf32>
    %28 = arith.addf %26, %27 : vector<16x256xf32>
    %29 = math.tanh %28 : vector<16x256xf32>
    %cst_16 = arith.constant dense<0.000000e+00> : vector<32x256xf32>
    %30 = tpu.matmul %4, %29, %cst_16 {dimension_numbers = #tpu.dot_dimension_numbers<[1], [0], [0], [1], [0, 0, 1, 1], [], []>, precision = #tpu.contract_precision<fp32>} : vector<32x16xf32>, vector<16x256xf32>, vector<32x256xf32> -> vector<32x256xf32>
    %31 = vector.broadcast %5 : vector<32x1xf32> to vector<32x256xf32>
    %32 = arith.addf %30, %31 : vector<32x256xf32>
    %33 = math.tanh %32 : vector<32x256xf32>
    %cst_17 = arith.constant dense<0.000000e+00> : vector<1x256xf32>
    %34 = tpu.matmul %6, %33, %cst_17 {dimension_numbers = #tpu.dot_dimension_numbers<[1], [0], [0], [1], [0, 0, 1, 1], [], []>, precision = #tpu.contract_precision<fp32>} : vector<1x32xf32>, vector<32x256xf32>, vector<1x256xf32> -> vector<1x256xf32>
    %35 = vector.broadcast %7 : vector<1x1xf32> to vector<1x256xf32>
    %36 = arith.addf %34, %35 : vector<1x256xf32>
    %c0_18 = arith.constant 0 : index
    %37 = arith.index_cast %9 : i32 to index
    %38 = vector.load %arg10[%c0_18, %37] : memref<1x512xf32, #tpu.memory_space<vmem>>, vector<1x256xf32>
    tpu.vector_store %arg10[%c0_18, %37], %36 {strides = array<i32>} : memref<1x512xf32, #tpu.memory_space<vmem>>, vector<1x256xf32>,
    %c1_i32 = arith.constant 1 : i32
    %c256_i32_19 = arith.constant 256 : i32
    %39 = arith.muli %c1_i32, %c256_i32_19 : i32
    %40 = tpu.assume_multiple %39, 256 : i32
    %c0_20 = arith.constant 0 : index
    %41 = arith.index_cast %40 : i32 to index
    %42 = vector.load %arg1[%c0_20, %41] : memref<2x512xf32, #tpu.memory_space<vmem>>, vector<2x256xf32>
    %43 = vector.extract_strided_slice %0 {offsets = [0, 0], sizes = [32, 1], strides = [1, 1]} : vector<32x2xf32> to vector<32x1xf32>
    %44 = vector.extract_strided_slice %42 {offsets = [0, 0], sizes = [1, 256], strides = [1, 1]} : vector<2x256xf32> to vector<1x256xf32>
    %45 = vector.broadcast %43 : vector<32x1xf32> to vector<32x256xf32>
    %46 = vector.broadcast %44 : vector<1x256xf32> to vector<32x256xf32>
    %47 = arith.mulf %45, %46 : vector<32x256xf32>
    %48 = vector.broadcast %1 : vector<32x1xf32> to vector<32x256xf32>
    %49 = arith.addf %48, %47 : vector<32x256xf32>
    %50 = vector.extract_strided_slice %0 {offsets = [0, 1], sizes = [32, 1], strides = [1, 1]} : vector<32x2xf32> to vector<32x1xf32>
    %51 = vector.extract_strided_slice %42 {offsets = [1, 0], sizes = [1, 256], strides = [1, 1]} : vector<2x256xf32> to vector<1x256xf32>
    %52 = vector.broadcast %50 : vector<32x1xf32> to vector<32x256xf32>
    %53 = vector.broadcast %51 : vector<1x256xf32> to vector<32x256xf32>
    %54 = arith.mulf %52, %53 : vector<32x256xf32>
    %55 = arith.addf %49, %54 : vector<32x256xf32>
    %56 = math.tanh %55 : vector<32x256xf32>
    %cst_21 = arith.constant dense<0.000000e+00> : vector<16x256xf32>
    %57 = tpu.matmul %2, %56, %cst_21 {dimension_numbers = #tpu.dot_dimension_numbers<[1], [0], [0], [1], [0, 0, 1, 1], [], []>, precision = #tpu.contract_precision<fp32>} : vector<16x32xf32>, vector<32x256xf32>, vector<16x256xf32> -> vector<16x256xf32>
    %58 = vector.broadcast %3 : vector<16x1xf32> to vector<16x256xf32>
    %59 = arith.addf %57, %58 : vector<16x256xf32>
    %60 = math.tanh %59 : vector<16x256xf32>
    %cst_22 = arith.constant dense<0.000000e+00> : vector<32x256xf32>
    %61 = tpu.matmul %4, %60, %cst_22 {dimension_numbers = #tpu.dot_dimension_numbers<[1], [0], [0], [1], [0, 0, 1, 1], [], []>, precision = #tpu.contract_precision<fp32>} : vector<32x16xf32>, vector<16x256xf32>, vector<32x256xf32> -> vector<32x256xf32>
    %62 = vector.broadcast %5 : vector<32x1xf32> to vector<32x256xf32>
    %63 = arith.addf %61, %62 : vector<32x256xf32>
    %64 = math.tanh %63 : vector<32x256xf32>
    %cst_23 = arith.constant dense<0.000000e+00> : vector<1x256xf32>
    %65 = tpu.matmul %6, %64, %cst_23 {dimension_numbers = #tpu.dot_dimension_numbers<[1], [0], [0], [1], [0, 0, 1, 1], [], []>, precision = #tpu.contract_precision<fp32>} : vector<1x32xf32>, vector<32x256xf32>, vector<1x256xf32> -> vector<1x256xf32>
    %66 = vector.broadcast %7 : vector<1x1xf32> to vector<1x256xf32>
    %67 = arith.addf %65, %66 : vector<1x256xf32>
    %c0_24 = arith.constant 0 : index
    %68 = arith.index_cast %40 : i32 to index
    %69 = vector.load %arg10[%c0_24, %68] : memref<1x512xf32, #tpu.memory_space<vmem>>, vector<1x256xf32>
    tpu.vector_store %arg10[%c0_24, %68], %67 {strides = array<i32>} : memref<1x512xf32, #tpu.memory_space<vmem>>, vector<1x256xf32>,
    %c2_i32 = arith.constant 2 : i32
    return
  }
  func.func @transform_0(%arg0: i32) -> (i32, i32) {
    %c0_i32 = arith.constant 0 : i32
    %c0_i32_0 = arith.constant 0 : i32
    return %c0_i32, %arg0 : i32, i32
  }
  func.func @transform_1(%arg0: i32) -> (i32, i32) {
    %c0_i32 = arith.constant 0 : i32
    %c0_i32_0 = arith.constant 0 : i32
    %c0_i32_1 = arith.constant 0 : i32
    return %c0_i32, %c0_i32_0 : i32, i32
  }
  func.func @transform_2(%arg0: i32) -> (i32, i32) {
    %c0_i32 = arith.constant 0 : i32
    %c0_i32_0 = arith.constant 0 : i32
    %c0_i32_1 = arith.constant 0 : i32
    return %c0_i32, %c0_i32_0 : i32, i32
  }
  func.func @transform_3(%arg0: i32) -> (i32, i32) {
    %c0_i32 = arith.constant 0 : i32
    %c0_i32_0 = arith.constant 0 : i32
    %c0_i32_1 = arith.constant 0 : i32
    return %c0_i32, %c0_i32_0 : i32, i32
  }
  func.func @transform_4(%arg0: i32) -> (i32, i32) {
    %c0_i32 = arith.constant 0 : i32
    %c0_i32_0 = arith.constant 0 : i32
    %c0_i32_1 = arith.constant 0 : i32
    return %c0_i32, %c0_i32_0 : i32, i32
  }
  func.func @transform_5(%arg0: i32) -> (i32, i32) {
    %c0_i32 = arith.constant 0 : i32
    %c0_i32_0 = arith.constant 0 : i32
    %c0_i32_1 = arith.constant 0 : i32
    return %c0_i32, %c0_i32_0 : i32, i32
  }
  func.func @transform_6(%arg0: i32) -> (i32, i32) {
    %c0_i32 = arith.constant 0 : i32
    %c0_i32_0 = arith.constant 0 : i32
    %c0_i32_1 = arith.constant 0 : i32
    return %c0_i32, %c0_i32_0 : i32, i32
  }
  func.func @transform_7(%arg0: i32) -> (i32, i32) {
    %c0_i32 = arith.constant 0 : i32
    %c0_i32_0 = arith.constant 0 : i32
    %c0_i32_1 = arith.constant 0 : i32
    return %c0_i32, %c0_i32_0 : i32, i32
  }
  func.func @transform_8(%arg0: i32) -> (i32, i32) {
    %c0_i32 = arith.constant 0 : i32
    %c0_i32_0 = arith.constant 0 : i32
    %c0_i32_1 = arith.constant 0 : i32
    return %c0_i32, %c0_i32_0 : i32, i32
  }
  func.func @transform_9(%arg0: i32) -> (i32, i32) {
    %c0_i32 = arith.constant 0 : i32
    %c0_i32_0 = arith.constant 0 : i32
    return %c0_i32, %arg0 : i32, i32
  }
}

</mosaic_0001>

<llo_original>
// kernel: pinn_forward_t.1
$region0: #{pinn_forward_t.1}
  #allocation0 [shape = 'u32[]', space=smem, size = 0x4, offset = 0x4, fixed_abs, tag = 'smem constant byte address 0x4 - core index']
  #allocation1 [shape = 'u32[144,128]{1,0:T(1,128)}', space=vmem, size = 0x12000, scoped, tag = 'internal scratch']
  #allocation2 [shape = 'f32[1,1]{1,0:T(1,128)S(1)}', space=vmem, size = 0x200, scoped, tag = 'scoped memory for pinn_forward_t.1']
  %s0 = inlined_call_operand.vmem [shape: f32[2,1000], index: 0, kind: input, shape index: {}]
  %s1 = inlined_call_operand.vmem [shape: f32[32,2], index: 1, kind: input, shape index: {}]
  %s2 = inlined_call_operand.vmem [shape: f32[32,1], index: 2, kind: input, shape index: {}]
  %s3 = inlined_call_operand.vmem [shape: f32[16,32], index: 3, kind: input, shape index: {}]
  %s4 = inlined_call_operand.vmem [shape: f32[16,1], index: 4, kind: input, shape index: {}]
  %s5 = inlined_call_operand.vmem [shape: f32[32,16], index: 5, kind: input, shape index: {}]
  %s6 = inlined_call_operand.vmem [shape: f32[32,1], index: 6, kind: input, shape index: {}]
  %s7 = inlined_call_operand.vmem [shape: f32[1,32], index: 7, kind: input, shape index: {}]
  %s8 = inlined_call_operand.<no memory space> [shape: f32[1,1], index: 8, kind: input, shape index: {}]
  %s9 = inlined_call_operand.hbm [shape: f32[1,1000], index: 9, kind: output, shape index: {}]
  %s10 = sld [smem:[#allocation0]]
  $region69: #{pinn_forward_t.1} parent=0
    _
  %s12 = ssub.s32 1, %s10
  %s13 = scalar_select 0, %s12, %s10
  %v14 = vstv %s8
  %15 = vst [vmem:[#allocation2] sm:$0x1] %v14
  $region1: #{pinn_forward_t.1} parent=0
    #allocation3 [shape = 'u8[4096]{0}', space=vmem, size = 0x1000, scoped, tag = 'output window, operand 0']
    #allocation4 [shape = 's32[2]{0}', space=sflag, size = 0x8, scoped, tag = 'scoped memory for pinn_forward_t.1']
    %16 = vsyncpa [#allocation4], 0
    %s17 = scalar_lea.sflag [#allocation4], 1
    %18 = vsyncpa %s17, 0
    loop: start=0, step=1, limit=4
    $region2: #{pinn_forward_t.1} parent=1 // loop_pre_header
      _
    $region3: #{pinn_forward_t.1} parent=1 // loop_header
      %s20 = sphi 0, %s24
      %p21 = scmp.ge.s32.totalorder %s20, 4
      %s30 = sphi 0, %s32
      %s33 = sphi 0, %s30
      %s34 = sphi 0, %s33
      %s50 = sphi 0, %s34
      %s54 = sphi 0, %s54
      %s56 = sphi 0, %s54
      %s57 = sphi 0, %s56
      %s71 = sphi 0, %s57
      %s75 = sphi 0, %s75
      %s77 = sphi 0, %s75
      %s78 = sphi 0, %s77
      %s92 = sphi 0, %s78
      %s96 = sphi 0, %s96
      %s98 = sphi 0, %s96
      %s99 = sphi 0, %s98
      %s113 = sphi 0, %s99
      %s117 = sphi 0, %s117
      %s119 = sphi 0, %s117
      %s120 = sphi 0, %s119
      %s134 = sphi 0, %s120
      %s138 = sphi 0, %s138
      %s140 = sphi 0, %s138
      %s141 = sphi 0, %s140
      %s155 = sphi 0, %s141
      %s159 = sphi 0, %s159
      %s161 = sphi 0, %s159
      %s162 = sphi 0, %s161
      %s176 = sphi 0, %s162
      %s180 = sphi 0, %s180
      %s182 = sphi 0, %s180
      %s183 = sphi 0, %s182
      %s197 = sphi 0, %s183
      %s201 = sphi 0, %s201
      %s203 = sphi 0, %s201
      %s204 = sphi 0, %s203
      %s218 = sphi 0, %s204
      %s224 = sphi 0, %s226
      %s227 = sphi 0, %s224
      %s228 = sphi 0, %s227
      %s244 = sphi 0, %s228
    $region4: #{pinn_forward_t.1} parent=1 // loop_header_branch
      %23 = sbr.rel (%p21) target = $region8
    $region5: #{pinn_forward_t.1} parent=1 // loop_body
      %s25 = ssub.s32 %s20, 1
      %s26 = ssub.s32 %s20, 2
      %s27 = sadd.s32 %s20, 1
      %s28 = ssub.s32 %s20, %s27
      %p29 = scmp.eq.s32.totalorder %s28, 0
      %s31 = sadd.s32 %s30, 1
      %s32 = scalar_select %p29, %s30, %s31
      %p35 = pneg %p29
      %p36 = scmp.eq.s32.totalorder %s20, 1
      %p37 = por %p35, %p36
      %p38 = scmp.ne.s32.totalorder %s30, %s33
      %p39 = scmp.eq.s32.totalorder %s20, 0
      %p40 = por %p38, %p39
      %p41 = scmp.ne.s32.totalorder %s30, %s33
      %p42 = scmp.eq.s32.totalorder %s25, 1
      %p43 = por %p41, %p42
      %p44 = scmp.ne.s32.totalorder %s33, %s34
      %p45 = scmp.eq.s32.totalorder %s25, 0
      %p46 = por %p44, %p45
      %p47 = scmp.ne.s32.totalorder %s33, %s34
      %p48 = scmp.eq.s32.totalorder %s26, 1
      %p49 = por %p47, %p48
      %p51 = scmp.ne.s32.totalorder %s34, %s50
      %p52 = scmp.eq.s32.totalorder %s26, 0
      %p53 = por %p51, %p52
      %s55 = sadd.s32 %s54, 1
      %p58 = scmp.eq.s32.totalorder %s20, 1
      %p59 = scmp.ne.s32.totalorder %s54, %s56
      %p60 = scmp.eq.s32.totalorder %s20, 0
      %p61 = por %p59, %p60
      %p62 = scmp.ne.s32.totalorder %s54, %s56
      %p63 = scmp.eq.s32.totalorder %s25, 1
      %p64 = por %p62, %p63
      %p65 = scmp.ne.s32.totalorder %s56, %s57
      %p66 = scmp.eq.s32.totalorder %s25, 0
      %p67 = por %p65, %p66
      %p68 = scmp.ne.s32.totalorder %s56, %s57
      %p69 = scmp.eq.s32.totalorder %s26, 1
      %p70 = por %p68, %p69
      %p72 = scmp.ne.s32.totalorder %s57, %s71
      %p73 = scmp.eq.s32.totalorder %s26, 0
      %p74 = por %p72, %p73
      %s76 = sadd.s32 %s75, 1
      %p79 = scmp.eq.s32.totalorder %s20, 1
      %p80 = scmp.ne.s32.totalorder %s75, %s77
      %p81 = scmp.eq.s32.totalorder %s20, 0
      %p82 = por %p80, %p81
      %p83 = scmp.ne.s32.totalorder %s75, %s77
      %p84 = scmp.eq.s32.totalorder %s25, 1
      %p85 = por %p83, %p84
      %p86 = scmp.ne.s32.totalorder %s77, %s78
      %p87 = scmp.eq.s32.totalorder %s25, 0
      %p88 = por %p86, %p87
      %p89 = scmp.ne.s32.totalorder %s77, %s78
      %p90 = scmp.eq.s32.totalorder %s26, 1
      %p91 = por %p89, %p90
      %p93 = scmp.ne.s32.totalorder %s78, %s92
      %p94 = scmp.eq.s32.totalorder %s26, 0
      %p95 = por %p93, %p94
      %s97 = sadd.s32 %s96, 1
      %p100 = scmp.eq.s32.totalorder %s20, 1
      %p101 = scmp.ne.s32.totalorder %s96, %s98
      %p102 = scmp.eq.s32.totalorder %s20, 0
      %p103 = por %p101, %p102
      %p104 = scmp.ne.s32.totalorder %s96, %s98
      %p105 = scmp.eq.s32.totalorder %s25, 1
      %p106 = por %p104, %p105
      %p107 = scmp.ne.s32.totalorder %s98, %s99
      %p108 = scmp.eq.s32.totalorder %s25, 0
      %p109 = por %p107, %p108
      %p110 = scmp.ne.s32.totalorder %s98, %s99
      %p111 = scmp.eq.s32.totalorder %s26, 1
      %p112 = por %p110, %p111
      %p114 = scmp.ne.s32.totalorder %s99, %s113
      %p115 = scmp.eq.s32.totalorder %s26, 0
      %p116 = por %p114, %p115
      %s118 = sadd.s32 %s117, 1
      %p121 = scmp.eq.s32.totalorder %s20, 1
      %p122 = scmp.ne.s32.totalorder %s117, %s119
      %p123 = scmp.eq.s32.totalorder %s20, 0
      %p124 = por %p122, %p123
      %p125 = scmp.ne.s32.totalorder %s117, %s119
      %p126 = scmp.eq.s32.totalorder %s25, 1
      %p127 = por %p125, %p126
      %p128 = scmp.ne.s32.totalorder %s119, %s120
      %p129 = scmp.eq.s32.totalorder %s25, 0
      %p130 = por %p128, %p129
      %p131 = scmp.ne.s32.totalorder %s119, %s120
      %p132 = scmp.eq.s32.totalorder %s26, 1
      %p133 = por %p131, %p132
      %p135 = scmp.ne.s32.totalorder %s120, %s134
      %p136 = scmp.eq.s32.totalorder %s26, 0
      %p137 = por %p135, %p136
      %s139 = sadd.s32 %s138, 1
      %p142 = scmp.eq.s32.totalorder %s20, 1
      %p143 = scmp.ne.s32.totalorder %s138, %s140
      %p144 = scmp.eq.s32.totalorder %s20, 0
      %p145 = por %p143, %p144
      %p146 = scmp.ne.s32.totalorder %s138, %s140
      %p147 = scmp.eq.s32.totalorder %s25, 1
      %p148 = por %p146, %p147
      %p149 = scmp.ne.s32.totalorder %s140, %s141
      %p150 = scmp.eq.s32.totalorder %s25, 0
      %p151 = por %p149, %p150
      %p152 = scmp.ne.s32.totalorder %s140, %s141
      %p153 = scmp.eq.s32.totalorder %s26, 1
      %p154 = por %p152, %p153
      %p156 = scmp.ne.s32.totalorder %s141, %s155
      %p157 = scmp.eq.s32.totalorder %s26, 0
      %p158 = por %p156, %p157
      %s160 = sadd.s32 %s159, 1
      %p163 = scmp.eq.s32.totalorder %s20, 1
      %p164 = scmp.ne.s32.totalorder %s159, %s161
      %p165 = scmp.eq.s32.totalorder %s20, 0
      %p166 = por %p164, %p165
      %p167 = scmp.ne.s32.totalorder %s159, %s161
      %p168 = scmp.eq.s32.totalorder %s25, 1
      %p169 = por %p167, %p168
      %p170 = scmp.ne.s32.totalorder %s161, %s162
      %p171 = scmp.eq.s32.totalorder %s25, 0
      %p172 = por %p170, %p171
      %p173 = scmp.ne.s32.totalorder %s161, %s162
      %p174 = scmp.eq.s32.totalorder %s26, 1
      %p175 = por %p173, %p174
      %p177 = scmp.ne.s32.totalorder %s162, %s176
      %p178 = scmp.eq.s32.totalorder %s26, 0
      %p179 = por %p177, %p178
      %s181 = sadd.s32 %s180, 1
      %p184 = scmp.eq.s32.totalorder %s20, 1
      %p185 = scmp.ne.s32.totalorder %s180, %s182
      %p186 = scmp.eq.s32.totalorder %s20, 0
      %p187 = por %p185, %p186
      %p188 = scmp.ne.s32.totalorder %s180, %s182
      %p189 = scmp.eq.s32.totalorder %s25, 1
      %p190 = por %p188, %p189
      %p191 = scmp.ne.s32.totalorder %s182, %s183
      %p192 = scmp.eq.s32.totalorder %s25, 0
      %p193 = por %p191, %p192
      %p194 = scmp.ne.s32.totalorder %s182, %s183
      %p195 = scmp.eq.s32.totalorder %s26, 1
      %p196 = por %p194, %p195
      %p198 = scmp.ne.s32.totalorder %s183, %s197
      %p199 = scmp.eq.s32.totalorder %s26, 0
      %p200 = por %p198, %p199
      %s202 = sadd.s32 %s201, 1
      %p205 = scmp.eq.s32.totalorder %s20, 1
      %p206 = scmp.ne.s32.totalorder %s201, %s203
      %p207 = scmp.eq.s32.totalorder %s20, 0
      %p208 = por %p206, %p207
      %p209 = scmp.ne.s32.totalorder %s201, %s203
      %p210 = scmp.eq.s32.totalorder %s25, 1
      %p211 = por %p209, %p210
      %p212 = scmp.ne.s32.totalorder %s203, %s204
      %p213 = scmp.eq.s32.totalorder %s25, 0
      %p214 = por %p212, %p213
      %p215 = scmp.ne.s32.totalorder %s203, %s204
      %p216 = scmp.eq.s32.totalorder %s26, 1
      %p217 = por %p215, %p216
      %p219 = scmp.ne.s32.totalorder %s204, %s218
      %p220 = scmp.eq.s32.totalorder %s26, 0
      %p221 = por %p219, %p220
      %s222 = ssub.s32 %s20, %s27
      %p223 = scmp.eq.s32.totalorder %s222, 0
      %s225 = sadd.s32 %s224, 1
      %s226 = scalar_select %p223, %s224, %s225
      %p229 = pneg %p223
      %p230 = scmp.eq.s32.totalorder %s20, 1
      %p231 = por %p229, %p230
      %p232 = scmp.ne.s32.totalorder %s224, %s227
      %p233 = scmp.eq.s32.totalorder %s20, 0
      %p234 = por %p232, %p233
      %p235 = scmp.ne.s32.totalorder %s224, %s227
      %p236 = scmp.eq.s32.totalorder %s25, 1
      %p237 = por %p235, %p236
      %p238 = scmp.ne.s32.totalorder %s227, %s228
      %p239 = scmp.eq.s32.totalorder %s25, 0
      %p240 = por %p238, %p239
      %p241 = scmp.ne.s32.totalorder %s227, %s228
      %p242 = scmp.eq.s32.totalorder %s26, 1
      %p243 = por %p241, %p242
      %p245 = scmp.ne.s32.totalorder %s228, %s244
      %p246 = scmp.eq.s32.totalorder %s26, 0
      %p247 = por %p245, %p246
      %p248 = scmp.le.s32.totalorder 1, %s20
      %p249 = scmp.lt.s32.totalorder %s20, 3
      %p250 = pnand %p248, %p249
      %p251 = pneg %p250
      // Predicated region
      $region9: #{pinn_forward_t.1} parent=5 // pred_check
        _
      $region10: #{pinn_forward_t.1} parent=5 // pred_check_branch
        %253 = sbr.rel (%p250) target = $region12
      $region11: #{pinn_forward_t.1} parent=5 // pred_region
        %s254 = ssub.s32 %s20, 1
        // Predicated region
        $region13: #{pinn_forward_t.1} parent=11 // pred_check
          %p255 = pneg %p67
        $region14: #{pinn_forward_t.1} parent=11 // pred_check_branch
          %257 = sbr.rel (%p255) target = $region16
        $region15: #{pinn_forward_t.1} parent=11 // pred_region
          _
        $region16: #{pinn_forward_t.1} parent=11 // pred_fallthru
          _
        // Predicated region
        $region17: #{pinn_forward_t.1} parent=11 // pred_check
          %p258 = pneg %p88
        $region18: #{pinn_forward_t.1} parent=11 // pred_check_branch
          %260 = sbr.rel (%p258) target = $region20
        $region19: #{pinn_forward_t.1} parent=11 // pred_region
          _
        $region20: #{pinn_forward_t.1} parent=11 // pred_fallthru
          _
        // Predicated region
        $region21: #{pinn_forward_t.1} parent=11 // pred_check
          %p261 = pneg %p109
        $region22: #{pinn_forward_t.1} parent=11 // pred_check_branch
          %263 = sbr.rel (%p261) target = $region24
        $region23: #{pinn_forward_t.1} parent=11 // pred_region
          _
        $region24: #{pinn_forward_t.1} parent=11 // pred_fallthru
          _
        // Predicated region
        $region25: #{pinn_forward_t.1} parent=11 // pred_check
          %p264 = pneg %p130
        $region26: #{pinn_forward_t.1} parent=11 // pred_check_branch
          %266 = sbr.rel (%p264) target = $region28
        $region27: #{pinn_forward_t.1} parent=11 // pred_region
          _
        $region28: #{pinn_forward_t.1} parent=11 // pred_fallthru
          _
        // Predicated region
        $region29: #{pinn_forward_t.1} parent=11 // pred_check
          %p267 = pneg %p151
        $region30: #{pinn_forward_t.1} parent=11 // pred_check_branch
          %269 = sbr.rel (%p267) target = $region32
        $region31: #{pinn_forward_t.1} parent=11 // pred_region
          _
        $region32: #{pinn_forward_t.1} parent=11 // pred_fallthru
          _
        // Predicated region
        $region33: #{pinn_forward_t.1} parent=11 // pred_check
          %p270 = pneg %p172
        $region34: #{pinn_forward_t.1} parent=11 // pred_check_branch
          %272 = sbr.rel (%p270) target = $region36
        $region35: #{pinn_forward_t.1} parent=11 // pred_region
          _
        $region36: #{pinn_forward_t.1} parent=11 // pred_fallthru
          _
        // Predicated region
        $region37: #{pinn_forward_t.1} parent=11 // pred_check
          %p273 = pneg %p193
        $region38: #{pinn_forward_t.1} parent=11 // pred_check_branch
          %275 = sbr.rel (%p273) target = $region40
        $region39: #{pinn_forward_t.1} parent=11 // pred_region
          _
        $region40: #{pinn_forward_t.1} parent=11 // pred_fallthru
          _
        // Predicated region
        $region41: #{pinn_forward_t.1} parent=11 // pred_check
          %p276 = pneg %p214
        $region42: #{pinn_forward_t.1} parent=11 // pred_check_branch
          %278 = sbr.rel (%p276) target = $region44
        $region43: #{pinn_forward_t.1} parent=11 // pred_region
          _
        $region44: #{pinn_forward_t.1} parent=11 // pred_fallthru
          _
      $region12: #{pinn_forward_t.1} parent=5 // pred_fallthru
        _
      %p279 = scmp.lt.s32.totalorder %s20, 2
      // Predicated region
      $region45: #{pinn_forward_t.1} parent=5 // pred_check
        %p280 = pneg %p279
      $region46: #{pinn_forward_t.1} parent=5 // pred_check_branch
        %282 = sbr.rel (%p280) target = $region48
      $region47: #{pinn_forward_t.1} parent=5 // pred_region
        // Predicated region
        $region49: #{pinn_forward_t.1} parent=47 // pred_check
          %p283 = pneg %p40
        $region50: #{pinn_forward_t.1} parent=47 // pred_check_branch
          %285 = sbr.rel (%p283) target = $region52
        $region51: #{pinn_forward_t.1} parent=47 // pred_region
          %s286 = smul.u32 4, %s20
          %p287 = scmp.lt.s32.totalorder %s286, 7
          %s288 = scalar_select %p287, %s286, 7
          %s289 = smul.addr %s288, 2
          %s290 = scalar_lea.vmem %s0, %s289
          %s291 = smul.u32 4, %s20
        $region52: #{pinn_forward_t.1} parent=47 // pred_fallthru
          _
      $region48: #{pinn_forward_t.1} parent=5 // pred_fallthru
        _
      %p292 = scmp.le.s32.totalorder 1, %s20
      %p293 = scmp.lt.s32.totalorder %s20, 3
      %p294 = pnand %p292, %p293
      %p295 = pneg %p294
      // Predicated region
      $region53: #{pinn_forward_t.1} parent=5 // pred_check
        _
      $region54: #{pinn_forward_t.1} parent=5 // pred_check_branch
        %297 = sbr.rel (%p294) target = $region56
      $region55: #{pinn_forward_t.1} parent=5 // pred_region
        %s298 = ssub.s32 %s20, 1
        %s299 = smul.u32 4, %s25
        %p300 = scmp.lt.s32.totalorder %s299, 7
        %s301 = scalar_select %p300, %s299, 7
        %s302 = smul.addr %s301, 2
        %s303 = scalar_lea.vmem %s0, %s302
        %p304 = pneg %p46
        %p305 = pneg %p43
        %p306 = pneg %p67
        %p307 = pneg %p64
        %p308 = pneg %p88
        %p309 = pneg %p85
        %p310 = pneg %p109
        %p311 = pneg %p106
        %p312 = pneg %p130
        %p313 = pneg %p127
        %p314 = pneg %p151
        %p315 = pneg %p148
        %p316 = pneg %p172
        %p317 = pneg %p169
        %p318 = pneg %p193
        %p319 = pneg %p190
        %p320 = pneg %p214
        %p321 = pneg %p211
        %p322 = pneg %p240
        %p323 = pneg %p237
        %s324 = sand.u32 %s227, 1
        %s325 = scalar_lea.sflag [#allocation4], %s324
        %s326 = sand.u32 %s227, 1
        %s327 = smul.addr %s326, 4
        %s328 = scalar_lea.vmem [#allocation3], %s327
        %s329 = smul.u32 4, %s25
        %p330 = scmp.lt.s32.totalorder %s329, 7
        %s331 = scalar_select %p330, %s329, 7
        %s332 = smul.addr %s331, 2
        %s333 = scalar_lea.vmem %s0, %s332
        %s334 = smul.u32 4, %s25
        %s335 = smul.u32 4, %s25
        %v336 = vld [vmem:[%s1] sm:$0xff]
        %v337 = vld [vmem:[%s1 + $0x8] sm:$0xff]
        %v338 = vld [vmem:[%s1 + $0x10] sm:$0xff]
        %v339 = vld [vmem:[%s1 + $0x18] sm:$0xff]
        %v340 = vld [vmem:[%s2] sm:$0xff]
        %v341 = vld [vmem:[%s2 + $0x8] sm:$0xff]
        %v342 = vld [vmem:[%s2 + $0x10] sm:$0xff]
        %v343 = vld [vmem:[%s2 + $0x18] sm:$0xff]
        %v344 = vld [vmem:[%s3] sm:$0xff]
        %v345 = vld [vmem:[%s3 + $0x8] sm:$0xff]
        %v346 = vld [vmem:[%s4] sm:$0xff]
        %v347 = vld [vmem:[%s4 + $0x8] sm:$0xff]
        %v348 = vld [vmem:[%s5] sm:$0xff]
        %v349 = vld [vmem:[%s5 + $0x8] sm:$0xff]
        %v350 = vld [vmem:[%s5 + $0x10] sm:$0xff]
        %v351 = vld [vmem:[%s5 + $0x18] sm:$0xff]
        %v352 = vld [vmem:[%s6] sm:$0xff]
        %v353 = vld [vmem:[%s6 + $0x8] sm:$0xff]
        %v354 = vld [vmem:[%s6 + $0x10] sm:$0xff]
        %v355 = vld [vmem:[%s6 + $0x18] sm:$0xff]
        %v356 = vld [vmem:[%s7] sm:$0x1]
        %v357 = vld [vmem:[#allocation2] sm:$0x1]
        %v358 = vld [vmem:[%s333] sm:$0xf]
        %360 = vset.pattern.permute.xlu0 0
        %361 = vperm.xlu0 %360, %v336
        %v362 = vpop.permute.xlu0 %361
        %365 = vset.pattern.permute.xlu0 0
        %366 = vperm.xlu0 %365, %v337
        %v367 = vpop.permute.xlu0 %366
        %370 = vset.pattern.permute.xlu0 0
        %371 = vperm.xlu0 %370, %v338
        %v372 = vpop.permute.xlu0 %371
        %375 = vset.pattern.permute.xlu0 0
        %376 = vperm.xlu0 %375, %v339
        %v377 = vpop.permute.xlu0 %376
        %v380 = vlaneseq
        %v381 = vshrl.u32 %v380, 7
        %v382 = vsub.s32 0, %v381
        %v383 = vrot.slane %v358, %v382
        %v384 = vlaneseq
        %v385 = vshrl.u32 %v384, 7
        %v386 = vsub.s32 2, %v385
        %v387 = vrot.slane %v358, %v386
        %v390 = vlaneseq
        %v391 = vshrl.u32 %v390, 7
        %v392 = vsub.s32 0, %v391
        %v393 = vrot.slane %v383, %v392
        %v394 = vlaneseq
        %v395 = vshrl.u32 %v394, 7
        %v396 = vsub.s32 0, %v395
        %v397 = vrot.slane %v387, %v396
        %v398 = vmul.f32 %v362, %v393
        %v399 = vmul.f32 %v362, %v397
        %v400 = vmul.f32 %v367, %v393
        %v401 = vmul.f32 %v367, %v397
        %v402 = vmul.f32 %v372, %v393
        %v403 = vmul.f32 %v372, %v397
        %v404 = vmul.f32 %v377, %v393
        %v405 = vmul.f32 %v377, %v397
        %407 = vset.pattern.permute.xlu0 0
        %408 = vperm.xlu0 %407, %v340
        %v409 = vpop.permute.xlu0 %408
        %412 = vset.pattern.permute.xlu0 0
        %413 = vperm.xlu0 %412, %v341
        %v414 = vpop.permute.xlu0 %413
        %417 = vset.pattern.permute.xlu0 0
        %418 = vperm.xlu0 %417, %v342
        %v419 = vpop.permute.xlu0 %418
        %422 = vset.pattern.permute.xlu0 0
        %423 = vperm.xlu0 %422, %v343
        %v424 = vpop.permute.xlu0 %423
        %v426 = vadd.f32 %v409, %v398
        %v427 = vadd.f32 %v409, %v399
        %v428 = vadd.f32 %v414, %v400
        %v429 = vadd.f32 %v414, %v401
        %v430 = vadd.f32 %v419, %v402
        %v431 = vadd.f32 %v419, %v403
        %v432 = vadd.f32 %v424, %v404
        %v433 = vadd.f32 %v424, %v405
        %434 = vset.pattern.permute.xlu0 1
        %435 = vperm.xlu0 %434, %v336
        %v436 = vpop.permute.xlu0 %435
        %438 = vset.pattern.permute.xlu0 1
        %439 = vperm.xlu0 %438, %v337
        %v440 = vpop.permute.xlu0 %439
        %442 = vset.pattern.permute.xlu0 1
        %443 = vperm.xlu0 %442, %v338
        %v444 = vpop.permute.xlu0 %443
        %446 = vset.pattern.permute.xlu0 1
        %447 = vperm.xlu0 %446, %v339
        %v448 = vpop.permute.xlu0 %447
        %v450 = vlaneseq
        %v451 = vshrl.u32 %v450, 7
        %v452 = vsub.s32 1, %v451
        %v453 = vrot.slane %v358, %v452
        %v454 = vlaneseq
        %v455 = vshrl.u32 %v454, 7
        %v456 = vsub.s32 3, %v455
        %v457 = vrot.slane %v358, %v456
        %v460 = vlaneseq
        %v461 = vshrl.u32 %v460, 7
        %v462 = vsub.s32 1, %v461
        %v463 = vrot.slane %v453, %v462
        %v464 = vlaneseq
        %v465 = vshrl.u32 %v464, 7
        %v466 = vsub.s32 1, %v465
        %v467 = vrot.slane %v457, %v466
        %v468 = vmul.f32 %v436, %v463
        %v469 = vmul.f32 %v436, %v467
        %v470 = vmul.f32 %v440, %v463
        %v471 = vmul.f32 %v440, %v467
        %v472 = vmul.f32 %v444, %v463
        %v473 = vmul.f32 %v444, %v467
        %v474 = vmul.f32 %v448, %v463
        %v475 = vmul.f32 %v448, %v467
        %v476 = vadd.f32 %v426, %v468
        %v477 = vadd.f32 %v427, %v469
        %v478 = vadd.f32 %v428, %v470
        %v479 = vadd.f32 %v429, %v471
        %v480 = vadd.f32 %v430, %v472
        %v481 = vadd.f32 %v431, %v473
        %v482 = vadd.f32 %v432, %v474
        %v483 = vadd.f32 %v433, %v475
        %v484 = vtanh.pop %v476
        %v485 = vtanh.pop %v477
        %v486 = vtanh.pop %v478
        %v487 = vtanh.pop %v479
        %v488 = vtanh.pop %v480
        %v489 = vtanh.pop %v481
        %v490 = vtanh.pop %v482
        %v491 = vtanh.pop %v483
        %493 = vset.pattern.permute.xlu0 0
        %494 = vperm.xlu0 %493, %v346
        %v495 = vpop.permute.xlu0 %494
        %498 = vset.pattern.permute.xlu0 0
        %499 = vperm.xlu0 %498, %v347
        %v500 = vpop.permute.xlu0 %499
        %vm502 = vcmask 261120
        %v504 = vsel %vm502, %v344, 0
        %v507 = vsel %vm502, %v345, 0
        %v509 = vand.u32 %v485, 4294901760
        %510 = vmatprep.subr.mxu0 %v509
        %v511 = vand.u32 %v484, 4294901760
        %512 = vmatpush1.msra.mxu0 %v511
        %v513 = vand.u32 %v487, 4294901760
        %514 = vmatprep.subr.mxu0 %v513
        %v515 = vand.u32 %v486, 4294901760
        %516 = vmatpush1.msra.mxu0 %v515
        %v517 = vand.u32 %v489, 4294901760
        %518 = vmatprep.subr.mxu0 %v517
        %v519 = vand.u32 %v488, 4294901760
        %520 = vmatpush1.msra.mxu0 %v519
        %v521 = vand.u32 %v491, 4294901760
        %522 = vmatprep.subr.mxu0 %v521
        %v523 = vand.u32 %v490, 4294901760
        %524 = vmatpush1.msra.mxu0 %v523
        %525 = vmatprep.subr.mxu0 0.0
        %526 = vmatpush1.msra.mxu0 0.0
        %527 = vmatprep.subr.mxu0 0.0
        %528 = vmatpush1.msra.mxu0 0.0
        %529 = vmatprep.subr.mxu0 0.0
        %530 = vmatpush1.msra.mxu0 0.0
        %531 = vmatprep.subr.mxu0 0.0
        %532 = vmatpush1.msra.mxu0 0.0
        %533 = vmatprep.subr.mxu0 0.0
        %534 = vmatpush1.msra.mxu0 0.0
        %535 = vmatprep.subr.mxu0 0.0
        %536 = vmatpush1.msra.mxu0 0.0
        %537 = vmatprep.subr.mxu0 0.0
        %538 = vmatpush1.msra.mxu0 0.0
        %539 = vmatprep.subr.mxu0 0.0
        %540 = vmatpush1.msra.mxu0 0.0
        %541 = vmatprep.subr.mxu0 0.0
        %542 = vmatpush1.msra.mxu0 0.0
        %543 = vmatprep.subr.mxu0 0.0
        %544 = vmatpush1.msra.mxu0 0.0
        %545 = vmatprep.subr.mxu0 0.0
        %546 = vmatpush1.msra.mxu0 0.0
        %547 = vmatprep.subr.mxu0 0.0
        %548 = vmatpush1.msra.mxu0 0.0
        %549 = vmatprep.subr.mxu0 0.0
        %550 = vmatpush1.msra.mxu0 0.0
        %551 = vmatprep.subr.mxu0 0.0
        %552 = vmatpush1.msra.mxu0 0.0
        %553 = vmatprep.subr.mxu0 0.0
        %554 = vmatpush1.msra.mxu0 0.0
        %555 = vmatprep.subr.mxu0 0.0
        %556 = vmatpush1.msra.mxu0 0.0
        %557 = vmatprep.subr.mxu0 0.0
        %558 = vmatpush1.msra.mxu0 0.0
        %559 = vmatprep.subr.mxu0 0.0
        %560 = vmatpush1.msra.mxu0 0.0
        %561 = vmatprep.subr.mxu0 0.0
        %562 = vmatpush1.msra.mxu0 0.0
        %563 = vmatprep.subr.mxu0 0.0
        %564 = vmatpush1.msra.mxu0 0.0
        %565 = vmatprep.subr.mxu0 0.0
        %566 = vmatpush1.msra.mxu0 0.0
        %567 = vmatprep.subr.mxu0 0.0
        %568 = vmatpush1.msra.mxu0 0.0
        %569 = vmatprep.subr.mxu0 0.0
        %570 = vmatpush1.msra.mxu0 0.0
        %571 = vmatprep.subr.mxu0 0.0
        %572 = vmatpush1.msra.mxu0 0.0
        %573 = vmatprep.subr.mxu0 0.0
        %574 = vmatpush1.msra.mxu0 0.0
        %575 = vmatprep.subr.mxu0 0.0
        %576 = vmatpush1.msra.mxu0 0.0
        %577 = vmatprep.subr.mxu0 0.0
        %578 = vmatpush1.msra.mxu0 0.0
        %579 = vmatprep.subr.mxu0 0.0
        %580 = vmatpush1.msra.mxu0 0.0
        %581 = vmatprep.mubr.f32.mxu0 0.0
        %v582 = vand.u32 %v504, 4294901760
        %v583 = vsub.f32 %v504, %v582
        %v584 = vand.u32 %v583, 4294901760
        %v585 = vsub.f32 %v583, %v584
        %v586 = vand.u32 %v585, 4294901760
        %587 = vmatmul.mubr.f32.gmra.mrb[0].mxu0 %v586
        %v588 = vpop.f32.mrb[0].mxu0
        %v589 = vadd.f32 %v495, %v588
        %v590 = vpop.f32.mrb[0].mxu0
        %v591 = vadd.f32 %v495, %v590
        %592 = vmatprep.mubr.f32.mxu0 0.0
        %v593 = vand.u32 %v507, 4294901760
        %v594 = vsub.f32 %v507, %v593
        %v595 = vand.u32 %v594, 4294901760
        %v596 = vsub.f32 %v594, %v595
        %v597 = vand.u32 %v596, 4294901760
        %598 = vmatmul.mubr.f32.gmra.mrb[0].mxu0 %v597
        %v599 = vpop.f32.mrb[0].mxu0
        %v600 = vadd.f32 %v500, %v599
        %v601 = vpop.f32.mrb[0].mxu0
        %v602 = vadd.f32 %v500, %v601
        %603 = vdwg.mxu0
        %v604 = vand.u32 %v485, 4294901760
        %v605 = vsub.f32 %v485, %v604
        %v606 = vand.u32 %v605, 4294901760
        %v607 = vsub.f32 %v605, %v606
        %v608 = vand.u32 %v607, 4294901760
        %609 = vmatprep.subr.mxu0 %v608
        %v610 = vand.u32 %v484, 4294901760
        %v611 = vsub.f32 %v484, %v610
        %v612 = vand.u32 %v611, 4294901760
        %v613 = vsub.f32 %v611, %v612
        %v614 = vand.u32 %v613, 4294901760
        %615 = vmatpush1.msra.mxu0 %v614
        %v616 = vand.u32 %v487, 4294901760
        %v617 = vsub.f32 %v487, %v616
        %v618 = vand.u32 %v617, 4294901760
        %v619 = vsub.f32 %v617, %v618
        %v620 = vand.u32 %v619, 4294901760
        %621 = vmatprep.subr.mxu0 %v620
        %v622 = vand.u32 %v486, 4294901760
        %v623 = vsub.f32 %v486, %v622
        %v624 = vand.u32 %v623, 4294901760
        %v625 = vsub.f32 %v623, %v624
        %v626 = vand.u32 %v625, 4294901760
        %627 = vmatpush1.msra.mxu0 %v626
        %v628 = vand.u32 %v489, 4294901760
        %v629 = vsub.f32 %v489, %v628
        %v630 = vand.u32 %v629, 4294901760
        %v631 = vsub.f32 %v629, %v630
        %v632 = vand.u32 %v631, 4294901760
        %633 = vmatprep.subr.mxu0 %v632
        %v634 = vand.u32 %v488, 4294901760
        %v635 = vsub.f32 %v488, %v634
        %v636 = vand.u32 %v635, 4294901760
        %v637 = vsub.f32 %v635, %v636
        %v638 = vand.u32 %v637, 4294901760
        %639 = vmatpush1.msra.mxu0 %v638
        %v640 = vand.u32 %v491, 4294901760
        %v641 = vsub.f32 %v491, %v640
        %v642 = vand.u32 %v641, 4294901760
        %v643 = vsub.f32 %v641, %v642
        %v644 = vand.u32 %v643, 4294901760
        %645 = vmatprep.subr.mxu0 %v644
        %v646 = vand.u32 %v490, 4294901760
        %v647 = vsub.f32 %v490, %v646
        %v648 = vand.u32 %v647, 4294901760
        %v649 = vsub.f32 %v647, %v648
        %v650 = vand.u32 %v649, 4294901760
        %651 = vmatpush1.msra.mxu0 %v650
        %652 = vmatprep.subr.mxu0 0.0
        %653 = vmatpush1.msra.mxu0 0.0
        %654 = vmatprep.subr.mxu0 0.0
        %655 = vmatpush1.msra.mxu0 0.0
        %656 = vmatprep.subr.mxu0 0.0
        %657 = vmatpush1.msra.mxu0 0.0
        %658 = vmatprep.subr.mxu0 0.0
        %659 = vmatpush1.msra.mxu0 0.0
        %660 = vmatprep.subr.mxu0 0.0
        %661 = vmatpush1.msra.mxu0 0.0
        %662 = vmatprep.subr.mxu0 0.0
        %663 = vmatpush1.msra.mxu0 0.0
        %664 = vmatprep.subr.mxu0 0.0
        %665 = vmatpush1.msra.mxu0 0.0
        %666 = vmatprep.subr.mxu0 0.0
        %667 = vmatpush1.msra.mxu0 0.0
        %668 = vmatprep.subr.mxu0 0.0
        %669 = vmatpush1.msra.mxu0 0.0
        %670 = vmatprep.subr.mxu0 0.0
        %671 = vmatpush1.msra.mxu0 0.0
        %672 = vmatprep.subr.mxu0 0.0
        %673 = vmatpush1.msra.mxu0 0.0
        %674 = vmatprep.subr.mxu0 0.0
        %675 = vmatpush1.msra.mxu0 0.0
        %676 = vmatprep.subr.mxu0 0.0
        %677 = vmatpush1.msra.mxu0 0.0
        %678 = vmatprep.subr.mxu0 0.0
        %679 = vmatpush1.msra.mxu0 0.0
        %680 = vmatprep.subr.mxu0 0.0
        %681 = vmatpush1.msra.mxu0 0.0
        %682 = vmatprep.subr.mxu0 0.0
        %683 = vmatpush1.msra.mxu0 0.0
        %684 = vmatprep.subr.mxu0 0.0
        %685 = vmatpush1.msra.mxu0 0.0
        %686 = vmatprep.subr.mxu0 0.0
        %687 = vmatpush1.msra.mxu0 0.0
        %688 = vmatprep.subr.mxu0 0.0
        %689 = vmatpush1.msra.mxu0 0.0
        %690 = vmatprep.subr.mxu0 0.0
        %691 = vmatpush1.msra.mxu0 0.0
        %692 = vmatprep.subr.mxu0 0.0
        %693 = vmatpush1.msra.mxu0 0.0
        %694 = vmatprep.subr.mxu0 0.0
        %695 = vmatpush1.msra.mxu0 0.0
        %696 = vmatprep.subr.mxu0 0.0
        %697 = vmatpush1.msra.mxu0 0.0
        %698 = vmatprep.subr.mxu0 0.0
        %699 = vmatpush1.msra.mxu0 0.0
        %700 = vmatprep.subr.mxu0 0.0
        %701 = vmatpush1.msra.mxu0 0.0
        %702 = vmatprep.subr.mxu0 0.0
        %703 = vmatpush1.msra.mxu0 0.0
        %704 = vmatprep.subr.mxu0 0.0
        %705 = vmatpush1.msra.mxu0 0.0
        %706 = vmatprep.subr.mxu0 0.0
        %707 = vmatpush1.msra.mxu0 0.0
        %708 = vmatprep.mubr.f32.mxu0 0.0
        %v709 = vand.u32 %v504, 4294901760
        %710 = vmatmul.mubr.f32.gmra.mrb[0].mxu0 %v709
        %v711 = vpop.f32.mrb[0].mxu0
        %v712 = vadd.f32 %v589, %v711
        %v713 = vpop.f32.mrb[0].mxu0
        %v714 = vadd.f32 %v591, %v713
        %715 = vmatprep.mubr.f32.mxu0 0.0
        %v716 = vand.u32 %v507, 4294901760
        %717 = vmatmul.mubr.f32.gmra.mrb[0].mxu0 %v716
        %v718 = vpop.f32.mrb[0].mxu0
        %v719 = vadd.f32 %v600, %v718
        %v720 = vpop.f32.mrb[0].mxu0
        %v721 = vadd.f32 %v602, %v720
        %722 = vdwg.mxu0
        %v723 = vand.u32 %v485, 4294901760
        %v724 = vsub.f32 %v485, %v723
        %725 = vmatprep.subr.mxu0 %v724
        %v726 = vand.u32 %v484, 4294901760
        %v727 = vsub.f32 %v484, %v726
        %728 = vmatpush1.msra.mxu0 %v727
        %v729 = vand.u32 %v487, 4294901760
        %v730 = vsub.f32 %v487, %v729
        %731 = vmatprep.subr.mxu0 %v730
        %v732 = vand.u32 %v486, 4294901760
        %v733 = vsub.f32 %v486, %v732
        %734 = vmatpush1.msra.mxu0 %v733
        %v735 = vand.u32 %v489, 4294901760
        %v736 = vsub.f32 %v489, %v735
        %737 = vmatprep.subr.mxu0 %v736
        %v738 = vand.u32 %v488, 4294901760
        %v739 = vsub.f32 %v488, %v738
        %740 = vmatpush1.msra.mxu0 %v739
        %v741 = vand.u32 %v491, 4294901760
        %v742 = vsub.f32 %v491, %v741
        %743 = vmatprep.subr.mxu0 %v742
        %v744 = vand.u32 %v490, 4294901760
        %v745 = vsub.f32 %v490, %v744
        %746 = vmatpush1.msra.mxu0 %v745
        %747 = vmatprep.subr.mxu0 0.0
        %748 = vmatpush1.msra.mxu0 0.0
        %749 = vmatprep.subr.mxu0 0.0
        %750 = vmatpush1.msra.mxu0 0.0
        %751 = vmatprep.subr.mxu0 0.0
        %752 = vmatpush1.msra.mxu0 0.0
        %753 = vmatprep.subr.mxu0 0.0
        %754 = vmatpush1.msra.mxu0 0.0
        %755 = vmatprep.subr.mxu0 0.0
        %756 = vmatpush1.msra.mxu0 0.0
        %757 = vmatprep.subr.mxu0 0.0
        %758 = vmatpush1.msra.mxu0 0.0
        %759 = vmatprep.subr.mxu0 0.0
        %760 = vmatpush1.msra.mxu0 0.0
        %761 = vmatprep.subr.mxu0 0.0
        %762 = vmatpush1.msra.mxu0 0.0
        %763 = vmatprep.subr.mxu0 0.0
        %764 = vmatpush1.msra.mxu0 0.0
        %765 = vmatprep.subr.mxu0 0.0
        %766 = vmatpush1.msra.mxu0 0.0
        %767 = vmatprep.subr.mxu0 0.0
        %768 = vmatpush1.msra.mxu0 0.0
        %769 = vmatprep.subr.mxu0 0.0
        %770 = vmatpush1.msra.mxu0 0.0
        %771 = vmatprep.subr.mxu0 0.0
        %772 = vmatpush1.msra.mxu0 0.0
        %773 = vmatprep.subr.mxu0 0.0
        %774 = vmatpush1.msra.mxu0 0.0
        %775 = vmatprep.subr.mxu0 0.0
        %776 = vmatpush1.msra.mxu0 0.0
        %777 = vmatprep.subr.mxu0 0.0
        %778 = vmatpush1.msra.mxu0 0.0
        %779 = vmatprep.subr.mxu0 0.0
        %780 = vmatpush1.msra.mxu0 0.0
        %781 = vmatprep.subr.mxu0 0.0
        %782 = vmatpush1.msra.mxu0 0.0
        %783 = vmatprep.subr.mxu0 0.0
        %784 = vmatpush1.msra.mxu0 0.0
        %785 = vmatprep.subr.mxu0 0.0
        %786 = vmatpush1.msra.mxu0 0.0
        %787 = vmatprep.subr.mxu0 0.0
        %788 = vmatpush1.msra.mxu0 0.0
        %789 = vmatprep.subr.mxu0 0.0
        %790 = vmatpush1.msra.mxu0 0.0
        %791 = vmatprep.subr.mxu0 0.0
        %792 = vmatpush1.msra.mxu0 0.0
        %793 = vmatprep.subr.mxu0 0.0
        %794 = vmatpush1.msra.mxu0 0.0
        %795 = vmatprep.subr.mxu0 0.0
        %796 = vmatpush1.msra.mxu0 0.0
        %797 = vmatprep.subr.mxu0 0.0
        %798 = vmatpush1.msra.mxu0 0.0
        %799 = vmatprep.subr.mxu0 0.0
        %800 = vmatpush1.msra.mxu0 0.0
        %801 = vmatprep.subr.mxu0 0.0
        %802 = vmatpush1.msra.mxu0 0.0
        %803 = vmatprep.mubr.f32.mxu0 0.0
        %v804 = vand.u32 %v504, 4294901760
        %v805 = vsub.f32 %v504, %v804
        %806 = vmatmul.mubr.f32.gmra.mrb[0].mxu0 %v805
        %v807 = vpop.f32.mrb[0].mxu0
        %v808 = vadd.f32 %v712, %v807
        %v809 = vpop.f32.mrb[0].mxu0
        %v810 = vadd.f32 %v714, %v809
        %811 = vmatprep.mubr.f32.mxu0 0.0
        %v812 = vand.u32 %v507, 4294901760
        %v813 = vsub.f32 %v507, %v812
        %814 = vmatmul.mubr.f32.gmra.mrb[0].mxu0 %v813
        %v815 = vpop.f32.mrb[0].mxu0
        %v816 = vadd.f32 %v719, %v815
        %v817 = vpop.f32.mrb[0].mxu0
        %v818 = vadd.f32 %v721, %v817
        %819 = vdwg.mxu0
        %v820 = vand.u32 %v485, 4294901760
        %821 = vmatprep.subr.mxu0 %v820
        %v822 = vand.u32 %v484, 4294901760
        %823 = vmatpush1.msra.mxu0 %v822
        %v824 = vand.u32 %v487, 4294901760
        %825 = vmatprep.subr.mxu0 %v824
        %v826 = vand.u32 %v486, 4294901760
        %827 = vmatpush1.msra.mxu0 %v826
        %v828 = vand.u32 %v489, 4294901760
        %829 = vmatprep.subr.mxu0 %v828
        %v830 = vand.u32 %v488, 4294901760
        %831 = vmatpush1.msra.mxu0 %v830
        %v832 = vand.u32 %v491, 4294901760
        %833 = vmatprep.subr.mxu0 %v832
        %v834 = vand.u32 %v490, 4294901760
        %835 = vmatpush1.msra.mxu0 %v834
        %836 = vmatprep.subr.mxu0 0.0
        %837 = vmatpush1.msra.mxu0 0.0
        %838 = vmatprep.subr.mxu0 0.0
        %839 = vmatpush1.msra.mxu0 0.0
        %840 = vmatprep.subr.mxu0 0.0
        %841 = vmatpush1.msra.mxu0 0.0
        %842 = vmatprep.subr.mxu0 0.0
        %843 = vmatpush1.msra.mxu0 0.0
        %844 = vmatprep.subr.mxu0 0.0
        %845 = vmatpush1.msra.mxu0 0.0
        %846 = vmatprep.subr.mxu0 0.0
        %847 = vmatpush1.msra.mxu0 0.0
        %848 = vmatprep.subr.mxu0 0.0
        %849 = vmatpush1.msra.mxu0 0.0
        %850 = vmatprep.subr.mxu0 0.0
        %851 = vmatpush1.msra.mxu0 0.0
        %852 = vmatprep.subr.mxu0 0.0
        %853 = vmatpush1.msra.mxu0 0.0
        %854 = vmatprep.subr.mxu0 0.0
        %855 = vmatpush1.msra.mxu0 0.0
        %856 = vmatprep.subr.mxu0 0.0
        %857 = vmatpush1.msra.mxu0 0.0
        %858 = vmatprep.subr.mxu0 0.0
        %859 = vmatpush1.msra.mxu0 0.0
        %860 = vmatprep.subr.mxu0 0.0
        %861 = vmatpush1.msra.mxu0 0.0
        %862 = vmatprep.subr.mxu0 0.0
        %863 = vmatpush1.msra.mxu0 0.0
        %864 = vmatprep.subr.mxu0 0.0
        %865 = vmatpush1.msra.mxu0 0.0
        %866 = vmatprep.subr.mxu0 0.0
        %867 = vmatpush1.msra.mxu0 0.0
        %868 = vmatprep.subr.mxu0 0.0
        %869 = vmatpush1.msra.mxu0 0.0
        %870 = vmatprep.subr.mxu0 0.0
        %871 = vmatpush1.msra.mxu0 0.0
        %872 = vmatprep.subr.mxu0 0.0
        %873 = vmatpush1.msra.mxu0 0.0
        %874 = vmatprep.subr.mxu0 0.0
        %875 = vmatpush1.msra.mxu0 0.0
        %876 = vmatprep.subr.mxu0 0.0
        %877 = vmatpush1.msra.mxu0 0.0
        %878 = vmatprep.subr.mxu0 0.0
        %879 = vmatpush1.msra.mxu0 0.0
        %880 = vmatprep.subr.mxu0 0.0
        %881 = vmatpush1.msra.mxu0 0.0
        %882 = vmatprep.subr.mxu0 0.0
        %883 = vmatpush1.msra.mxu0 0.0
        %884 = vmatprep.subr.mxu0 0.0
        %885 = vmatpush1.msra.mxu0 0.0
        %886 = vmatprep.subr.mxu0 0.0
        %887 = vmatpush1.msra.mxu0 0.0
        %888 = vmatprep.subr.mxu0 0.0
        %889 = vmatpush1.msra.mxu0 0.0
        %890 = vmatprep.subr.mxu0 0.0
        %891 = vmatpush1.msra.mxu0 0.0
        %892 = vmatprep.mubr.f32.mxu0 0.0
        %v893 = vand.u32 %v504, 4294901760
        %v894 = vsub.f32 %v504, %v893
        %v895 = vand.u32 %v894, 4294901760
        %896 = vmatmul.mubr.f32.gmra.mrb[0].mxu0 %v895
        %v897 = vpop.f32.mrb[0].mxu0
        %v898 = vadd.f32 %v808, %v897
        %v899 = vpop.f32.mrb[0].mxu0
        %v900 = vadd.f32 %v810, %v899
        %901 = vmatprep.mubr.f32.mxu0 0.0
        %v902 = vand.u32 %v507, 4294901760
        %v903 = vsub.f32 %v507, %v902
        %v904 = vand.u32 %v903, 4294901760
        %905 = vmatmul.mubr.f32.gmra.mrb[0].mxu0 %v904
        %v906 = vpop.f32.mrb[0].mxu0
        %v907 = vadd.f32 %v816, %v906
        %v908 = vpop.f32.mrb[0].mxu0
        %v909 = vadd.f32 %v818, %v908
        %910 = vdwg.mxu0
        %v911 = vand.u32 %v485, 4294901760
        %v912 = vsub.f32 %v485, %v911
        %v913 = vand.u32 %v912, 4294901760
        %914 = vmatprep.subr.mxu0 %v913
        %v915 = vand.u32 %v484, 4294901760
        %v916 = vsub.f32 %v484, %v915
        %v917 = vand.u32 %v916, 4294901760
        %918 = vmatpush1.msra.mxu0 %v917
        %v919 = vand.u32 %v487, 4294901760
        %v920 = vsub.f32 %v487, %v919
        %v921 = vand.u32 %v920, 4294901760
        %922 = vmatprep.subr.mxu0 %v921
        %v923 = vand.u32 %v486, 4294901760
        %v924 = vsub.f32 %v486, %v923
        %v925 = vand.u32 %v924, 4294901760
        %926 = vmatpush1.msra.mxu0 %v925
        %v927 = vand.u32 %v489, 4294901760
        %v928 = vsub.f32 %v489, %v927
        %v929 = vand.u32 %v928, 4294901760
        %930 = vmatprep.subr.mxu0 %v929
        %v931 = vand.u32 %v488, 4294901760
        %v932 = vsub.f32 %v488, %v931
        %v933 = vand.u32 %v932, 4294901760
        %934 = vmatpush1.msra.mxu0 %v933
        %v935 = vand.u32 %v491, 4294901760
        %v936 = vsub.f32 %v491, %v935
        %v937 = vand.u32 %v936, 4294901760
        %938 = vmatprep.subr.mxu0 %v937
        %v939 = vand.u32 %v490, 4294901760
        %v940 = vsub.f32 %v490, %v939
        %v941 = vand.u32 %v940, 4294901760
        %942 = vmatpush1.msra.mxu0 %v941
        %943 = vmatprep.subr.mxu0 0.0
        %944 = vmatpush1.msra.mxu0 0.0
        %945 = vmatprep.subr.mxu0 0.0
        %946 = vmatpush1.msra.mxu0 0.0
        %947 = vmatprep.subr.mxu0 0.0
        %948 = vmatpush1.msra.mxu0 0.0
        %949 = vmatprep.subr.mxu0 0.0
        %950 = vmatpush1.msra.mxu0 0.0
        %951 = vmatprep.subr.mxu0 0.0
        %952 = vmatpush1.msra.mxu0 0.0
        %953 = vmatprep.subr.mxu0 0.0
        %954 = vmatpush1.msra.mxu0 0.0
        %955 = vmatprep.subr.mxu0 0.0
        %956 = vmatpush1.msra.mxu0 0.0
        %957 = vmatprep.subr.mxu0 0.0
        %958 = vmatpush1.msra.mxu0 0.0
        %959 = vmatprep.subr.mxu0 0.0
        %960 = vmatpush1.msra.mxu0 0.0
        %961 = vmatprep.subr.mxu0 0.0
        %962 = vmatpush1.msra.mxu0 0.0
        %963 = vmatprep.subr.mxu0 0.0
        %964 = vmatpush1.msra.mxu0 0.0
        %965 = vmatprep.subr.mxu0 0.0
        %966 = vmatpush1.msra.mxu0 0.0
        %967 = vmatprep.subr.mxu0 0.0
        %968 = vmatpush1.msra.mxu0 0.0
        %969 = vmatprep.subr.mxu0 0.0
        %970 = vmatpush1.msra.mxu0 0.0
        %971 = vmatprep.subr.mxu0 0.0
        %972 = vmatpush1.msra.mxu0 0.0
        %973 = vmatprep.subr.mxu0 0.0
        %974 = vmatpush1.msra.mxu0 0.0
        %975 = vmatprep.subr.mxu0 0.0
        %976 = vmatpush1.msra.mxu0 0.0
        %977 = vmatprep.subr.mxu0 0.0
        %978 = vmatpush1.msra.mxu0 0.0
        %979 = vmatprep.subr.mxu0 0.0
        %980 = vmatpush1.msra.mxu0 0.0
        %981 = vmatprep.subr.mxu0 0.0
        %982 = vmatpush1.msra.mxu0 0.0
        %983 = vmatprep.subr.mxu0 0.0
        %984 = vmatpush1.msra.mxu0 0.0
        %985 = vmatprep.subr.mxu0 0.0
        %986 = vmatpush1.msra.mxu0 0.0
        %987 = vmatprep.subr.mxu0 0.0
        %988 = vmatpush1.msra.mxu0 0.0
        %989 = vmatprep.subr.mxu0 0.0
        %990 = vmatpush1.msra.mxu0 0.0
        %991 = vmatprep.subr.mxu0 0.0
        %992 = vmatpush1.msra.mxu0 0.0
        %993 = vmatprep.subr.mxu0 0.0
        %994 = vmatpush1.msra.mxu0 0.0
        %995 = vmatprep.subr.mxu0 0.0
        %996 = vmatpush1.msra.mxu0 0.0
        %997 = vmatprep.subr.mxu0 0.0
        %998 = vmatpush1.msra.mxu0 0.0
        %999 = vmatprep.mubr.f32.mxu0 0.0
        %v1000 = vand.u32 %v504, 4294901760
        %1001 = vmatmul.mubr.f32.gmra.mrb[0].mxu0 %v1000
        %v1002 = vpop.f32.mrb[0].mxu0
        %v1003 = vadd.f32 %v898, %v1002
        %v1004 = vpop.f32.mrb[0].mxu0
        %v1005 = vadd.f32 %v900, %v1004
        %1006 = vmatprep.mubr.f32.mxu0 0.0
        %v1007 = vand.u32 %v507, 4294901760
        %1008 = vmatmul.mubr.f32.gmra.mrb[0].mxu0 %v1007
        %v1009 = vpop.f32.mrb[0].mxu0
        %v1010 = vadd.f32 %v907, %v1009
        %v1011 = vpop.f32.mrb[0].mxu0
        %v1012 = vadd.f32 %v909, %v1011
        %1013 = vdwg.mxu0
        %v1014 = vand.u32 %v485, 4294901760
        %1015 = vmatprep.subr.mxu0 %v1014
        %v1016 = vand.u32 %v484, 4294901760
        %1017 = vmatpush1.msra.mxu0 %v1016
        %v1018 = vand.u32 %v487, 4294901760
        %1019 = vmatprep.subr.mxu0 %v1018
        %v1020 = vand.u32 %v486, 4294901760
        %1021 = vmatpush1.msra.mxu0 %v1020
        %v1022 = vand.u32 %v489, 4294901760
        %1023 = vmatprep.subr.mxu0 %v1022
        %v1024 = vand.u32 %v488, 4294901760
        %1025 = vmatpush1.msra.mxu0 %v1024
        %v1026 = vand.u32 %v491, 4294901760
        %1027 = vmatprep.subr.mxu0 %v1026
        %v1028 = vand.u32 %v490, 4294901760
        %1029 = vmatpush1.msra.mxu0 %v1028
        %1030 = vmatprep.subr.mxu0 0.0
        %1031 = vmatpush1.msra.mxu0 0.0
        %1032 = vmatprep.subr.mxu0 0.0
        %1033 = vmatpush1.msra.mxu0 0.0
        %1034 = vmatprep.subr.mxu0 0.0
        %1035 = vmatpush1.msra.mxu0 0.0
        %1036 = vmatprep.subr.mxu0 0.0
        %1037 = vmatpush1.msra.mxu0 0.0
        %1038 = vmatprep.subr.mxu0 0.0
        %1039 = vmatpush1.msra.mxu0 0.0
        %1040 = vmatprep.subr.mxu0 0.0
        %1041 = vmatpush1.msra.mxu0 0.0
        %1042 = vmatprep.subr.mxu0 0.0
        %1043 = vmatpush1.msra.mxu0 0.0
        %1044 = vmatprep.subr.mxu0 0.0
        %1045 = vmatpush1.msra.mxu0 0.0
        %1046 = vmatprep.subr.mxu0 0.0
        %1047 = vmatpush1.msra.mxu0 0.0
        %1048 = vmatprep.subr.mxu0 0.0
        %1049 = vmatpush1.msra.mxu0 0.0
        %1050 = vmatprep.subr.mxu0 0.0
        %1051 = vmatpush1.msra.mxu0 0.0
        %1052 = vmatprep.subr.mxu0 0.0
        %1053 = vmatpush1.msra.mxu0 0.0
        %1054 = vmatprep.subr.mxu0 0.0
        %1055 = vmatpush1.msra.mxu0 0.0
        %1056 = vmatprep.subr.mxu0 0.0
        %1057 = vmatpush1.msra.mxu0 0.0
        %1058 = vmatprep.subr.mxu0 0.0
        %1059 = vmatpush1.msra.mxu0 0.0
        %1060 = vmatprep.subr.mxu0 0.0
        %1061 = vmatpush1.msra.mxu0 0.0
        %1062 = vmatprep.subr.mxu0 0.0
        %1063 = vmatpush1.msra.mxu0 0.0
        %1064 = vmatprep.subr.mxu0 0.0
        %1065 = vmatpush1.msra.mxu0 0.0
        %1066 = vmatprep.subr.mxu0 0.0
        %1067 = vmatpush1.msra.mxu0 0.0
        %1068 = vmatprep.subr.mxu0 0.0
        %1069 = vmatpush1.msra.mxu0 0.0
        %1070 = vmatprep.subr.mxu0 0.0
        %1071 = vmatpush1.msra.mxu0 0.0
        %1072 = vmatprep.subr.mxu0 0.0
        %1073 = vmatpush1.msra.mxu0 0.0
        %1074 = vmatprep.subr.mxu0 0.0
        %1075 = vmatpush1.msra.mxu0 0.0
        %1076 = vmatprep.subr.mxu0 0.0
        %1077 = vmatpush1.msra.mxu0 0.0
        %1078 = vmatprep.subr.mxu0 0.0
        %1079 = vmatpush1.msra.mxu0 0.0
        %1080 = vmatprep.subr.mxu0 0.0
        %1081 = vmatpush1.msra.mxu0 0.0
        %1082 = vmatprep.subr.mxu0 0.0
        %1083 = vmatpush1.msra.mxu0 0.0
        %1084 = vmatprep.subr.mxu0 0.0
        %1085 = vmatpush1.msra.mxu0 0.0
        %1086 = vmatprep.mubr.f32.mxu0 0.0
        %v1087 = vand.u32 %v504, 4294901760
        %1088 = vmatmul.mubr.f32.gmra.mrb[0].mxu0 %v1087
        %v1089 = vpop.f32.mrb[0].mxu0
        %v1090 = vadd.f32 %v1003, %v1089
        %v1091 = vpop.f32.mrb[0].mxu0
        %v1092 = vadd.f32 %v1005, %v1091
        %1093 = vmatprep.mubr.f32.mxu0 0.0
        %v1094 = vand.u32 %v507, 4294901760
        %1095 = vmatmul.mubr.f32.gmra.mrb[0].mxu0 %v1094
        %v1096 = vpop.f32.mrb[0].mxu0
        %v1097 = vadd.f32 %v1010, %v1096
        %v1098 = vpop.f32.mrb[0].mxu0
        %v1099 = vadd.f32 %v1012, %v1098
        %1100 = vdwg.mxu0
        %v1101 = vtanh.pop %v1090
        %v1102 = vtanh.pop %v1092
        %v1103 = vtanh.pop %v1097
        %v1104 = vtanh.pop %v1099
        %1106 = vset.pattern.permute.xlu0 0
        %1107 = vperm.xlu0 %1106, %v352
        %v1108 = vpop.permute.xlu0 %1107
        %1111 = vset.pattern.permute.xlu0 0
        %1112 = vperm.xlu0 %1111, %v353
        %v1113 = vpop.permute.xlu0 %1112
        %1116 = vset.pattern.permute.xlu0 0
        %1117 = vperm.xlu0 %1116, %v354
        %v1118 = vpop.permute.xlu0 %1117
        %1121 = vset.pattern.permute.xlu0 0
        %1122 = vperm.xlu0 %1121, %v355
        %v1123 = vpop.permute.xlu0 %1122
        %vm1125 = vcmask 130048
        %v1127 = vsel %vm1125, %v348, 0
        %v1130 = vsel %vm1125, %v349, 0
        %v1133 = vsel %vm1125, %v350, 0
        %v1136 = vsel %vm1125, %v351, 0
        %v1138 = vand.u32 %v1102, 4294901760
        %1139 = vmatprep.subr.mxu0 %v1138
        %v1140 = vand.u32 %v1101, 4294901760
        %1141 = vmatpush1.msra.mxu0 %v1140
        %v1142 = vand.u32 %v1104, 4294901760
        %1143 = vmatprep.subr.mxu0 %v1142
        %v1144 = vand.u32 %v1103, 4294901760
        %1145 = vmatpush1.msra.mxu0 %v1144
        %1146 = vmatprep.subr.mxu0 0.0
        %1147 = vmatpush1.msra.mxu0 0.0
        %1148 = vmatprep.subr.mxu0 0.0
        %1149 = vmatpush1.msra.mxu0 0.0
        %1150 = vmatprep.subr.mxu0 0.0
        %1151 = vmatpush1.msra.mxu0 0.0
        %1152 = vmatprep.subr.mxu0 0.0
        %1153 = vmatpush1.msra.mxu0 0.0
        %1154 = vmatprep.subr.mxu0 0.0
        %1155 = vmatpush1.msra.mxu0 0.0
        %1156 = vmatprep.subr.mxu0 0.0
        %1157 = vmatpush1.msra.mxu0 0.0
        %1158 = vmatprep.subr.mxu0 0.0
        %1159 = vmatpush1.msra.mxu0 0.0
        %1160 = vmatprep.subr.mxu0 0.0
        %1161 = vmatpush1.msra.mxu0 0.0
        %1162 = vmatprep.subr.mxu0 0.0
        %1163 = vmatpush1.msra.mxu0 0.0
        %1164 = vmatprep.subr.mxu0 0.0
        %1165 = vmatpush1.msra.mxu0 0.0
        %1166 = vmatprep.subr.mxu0 0.0
        %1167 = vmatpush1.msra.mxu0 0.0
        %1168 = vmatprep.subr.mxu0 0.0
        %1169 = vmatpush1.msra.mxu0 0.0
        %1170 = vmatprep.subr.mxu0 0.0
        %1171 = vmatpush1.msra.mxu0 0.0
        %1172 = vmatprep.subr.mxu0 0.0
        %1173 = vmatpush1.msra.mxu0 0.0
        %1174 = vmatprep.subr.mxu0 0.0
        %1175 = vmatpush1.msra.mxu0 0.0
        %1176 = vmatprep.subr.mxu0 0.0
        %1177 = vmatpush1.msra.mxu0 0.0
        %1178 = vmatprep.subr.mxu0 0.0
        %1179 = vmatpush1.msra.mxu0 0.0
        %1180 = vmatprep.subr.mxu0 0.0
        %1181 = vmatpush1.msra.mxu0 0.0
        %1182 = vmatprep.subr.mxu0 0.0
        %1183 = vmatpush1.msra.mxu0 0.0
        %1184 = vmatprep.subr.mxu0 0.0
        %1185 = vmatpush1.msra.mxu0 0.0
        %1186 = vmatprep.subr.mxu0 0.0
        %1187 = vmatpush1.msra.mxu0 0.0
        %1188 = vmatprep.subr.mxu0 0.0
        %1189 = vmatpush1.msra.mxu0 0.0
        %1190 = vmatprep.subr.mxu0 0.0
        %1191 = vmatpush1.msra.mxu0 0.0
        %1192 = vmatprep.subr.mxu0 0.0
        %1193 = vmatpush1.msra.mxu0 0.0
        %1194 = vmatprep.subr.mxu0 0.0
        %1195 = vmatpush1.msra.mxu0 0.0
        %1196 = vmatprep.subr.mxu0 0.0
        %1197 = vmatpush1.msra.mxu0 0.0
        %1198 = vmatprep.subr.mxu0 0.0
        %1199 = vmatpush1.msra.mxu0 0.0
        %1200 = vmatprep.subr.mxu0 0.0
        %1201 = vmatpush1.msra.mxu0 0.0
        %1202 = vmatprep.subr.mxu0 0.0
        %1203 = vmatpush1.msra.mxu0 0.0
        %1204 = vmatprep.subr.mxu0 0.0
        %1205 = vmatpush1.msra.mxu0 0.0
        %1206 = vmatprep.mubr.f32.mxu0 0.0
        %v1207 = vand.u32 %v1127, 4294901760
        %v1208 = vsub.f32 %v1127, %v1207
        %v1209 = vand.u32 %v1208, 4294901760
        %v1210 = vsub.f32 %v1208, %v1209
        %v1211 = vand.u32 %v1210, 4294901760
        %1212 = vmatmul.mubr.f32.gmra.mrb[0].mxu0 %v1211
        %v1213 = vpop.f32.mrb[0].mxu0
        %v1214 = vadd.f32 %v1108, %v1213
        %v1215 = vpop.f32.mrb[0].mxu0
        %v1216 = vadd.f32 %v1108, %v1215
        %1217 = vmatprep.mubr.f32.mxu0 0.0
        %v1218 = vand.u32 %v1130, 4294901760
        %v1219 = vsub.f32 %v1130, %v1218
        %v1220 = vand.u32 %v1219, 4294901760
        %v1221 = vsub.f32 %v1219, %v1220
        %v1222 = vand.u32 %v1221, 4294901760
        %1223 = vmatmul.mubr.f32.gmra.mrb[0].mxu0 %v1222
        %v1224 = vpop.f32.mrb[0].mxu0
        %v1225 = vadd.f32 %v1113, %v1224
        %v1226 = vpop.f32.mrb[0].mxu0
        %v1227 = vadd.f32 %v1113, %v1226
        %1228 = vmatprep.mubr.f32.mxu0 0.0
        %v1229 = vand.u32 %v1133, 4294901760
        %v1230 = vsub.f32 %v1133, %v1229
        %v1231 = vand.u32 %v1230, 4294901760
        %v1232 = vsub.f32 %v1230, %v1231
        %v1233 = vand.u32 %v1232, 4294901760
        %1234 = vmatmul.mubr.f32.gmra.mrb[0].mxu0 %v1233
        %v1235 = vpop.f32.mrb[0].mxu0
        %v1236 = vadd.f32 %v1118, %v1235
        %v1237 = vpop.f32.mrb[0].mxu0
        %v1238 = vadd.f32 %v1118, %v1237
        %1239 = vmatprep.mubr.f32.mxu0 0.0
        %v1240 = vand.u32 %v1136, 4294901760
        %v1241 = vsub.f32 %v1136, %v1240
        %v1242 = vand.u32 %v1241, 4294901760
        %v1243 = vsub.f32 %v1241, %v1242
        %v1244 = vand.u32 %v1243, 4294901760
        %1245 = vmatmul.mubr.f32.gmra.mrb[0].mxu0 %v1244
        %v1246 = vpop.f32.mrb[0].mxu0
        %v1247 = vadd.f32 %v1123, %v1246
        %v1248 = vpop.f32.mrb[0].mxu0
        %v1249 = vadd.f32 %v1123, %v1248
        %1250 = vdwg.mxu0
        %v1251 = vand.u32 %v1102, 4294901760
        %v1252 = vsub.f32 %v1102, %v1251
        %v1253 = vand.u32 %v1252, 4294901760
        %v1254 = vsub.f32 %v1252, %v1253
        %v1255 = vand.u32 %v1254, 4294901760
        %1256 = vmatprep.subr.mxu0 %v1255
        %v1257 = vand.u32 %v1101, 4294901760
        %v1258 = vsub.f32 %v1101, %v1257
        %v1259 = vand.u32 %v1258, 4294901760
        %v1260 = vsub.f32 %v1258, %v1259
        %v1261 = vand.u32 %v1260, 4294901760
        %1262 = vmatpush1.msra.mxu0 %v1261
        %v1263 = vand.u32 %v1104, 4294901760
        %v1264 = vsub.f32 %v1104, %v1263
        %v1265 = vand.u32 %v1264, 4294901760
        %v1266 = vsub.f32 %v1264, %v1265
        %v1267 = vand.u32 %v1266, 4294901760
        %1268 = vmatprep.subr.mxu0 %v1267
        %v1269 = vand.u32 %v1103, 4294901760
        %v1270 = vsub.f32 %v1103, %v1269
        %v1271 = vand.u32 %v1270, 4294901760
        %v1272 = vsub.f32 %v1270, %v1271
        %v1273 = vand.u32 %v1272, 4294901760
        %1274 = vmatpush1.msra.mxu0 %v1273
        %1275 = vmatprep.subr.mxu0 0.0
        %1276 = vmatpush1.msra.mxu0 0.0
        %1277 = vmatprep.subr.mxu0 0.0
        %1278 = vmatpush1.msra.mxu0 0.0
        %1279 = vmatprep.subr.mxu0 0.0
        %1280 = vmatpush1.msra.mxu0 0.0
        %1281 = vmatprep.subr.mxu0 0.0
        %1282 = vmatpush1.msra.mxu0 0.0
        %1283 = vmatprep.subr.mxu0 0.0
        %1284 = vmatpush1.msra.mxu0 0.0
        %1285 = vmatprep.subr.mxu0 0.0
        %1286 = vmatpush1.msra.mxu0 0.0
        %1287 = vmatprep.subr.mxu0 0.0
        %1288 = vmatpush1.msra.mxu0 0.0
        %1289 = vmatprep.subr.mxu0 0.0
        %1290 = vmatpush1.msra.mxu0 0.0
        %1291 = vmatprep.subr.mxu0 0.0
        %1292 = vmatpush1.msra.mxu0 0.0
        %1293 = vmatprep.subr.mxu0 0.0
        %1294 = vmatpush1.msra.mxu0 0.0
        %1295 = vmatprep.subr.mxu0 0.0
        %1296 = vmatpush1.msra.mxu0 0.0
        %1297 = vmatprep.subr.mxu0 0.0
        %1298 = vmatpush1.msra.mxu0 0.0
        %1299 = vmatprep.subr.mxu0 0.0
        %1300 = vmatpush1.msra.mxu0 0.0
        %1301 = vmatprep.subr.mxu0 0.0
        %1302 = vmatpush1.msra.mxu0 0.0
        %1303 = vmatprep.subr.mxu0 0.0
        %1304 = vmatpush1.msra.mxu0 0.0
        %1305 = vmatprep.subr.mxu0 0.0
        %1306 = vmatpush1.msra.mxu0 0.0
        %1307 = vmatprep.subr.mxu0 0.0
        %1308 = vmatpush1.msra.mxu0 0.0
        %1309 = vmatprep.subr.mxu0 0.0
        %1310 = vmatpush1.msra.mxu0 0.0
        %1311 = vmatprep.subr.mxu0 0.0
        %1312 = vmatpush1.msra.mxu0 0.0
        %1313 = vmatprep.subr.mxu0 0.0
        %1314 = vmatpush1.msra.mxu0 0.0
        %1315 = vmatprep.subr.mxu0 0.0
        %1316 = vmatpush1.msra.mxu0 0.0
        %1317 = vmatprep.subr.mxu0 0.0
        %1318 = vmatpush1.msra.mxu0 0.0
        %1319 = vmatprep.subr.mxu0 0.0
        %1320 = vmatpush1.msra.mxu0 0.0
        %1321 = vmatprep.subr.mxu0 0.0
        %1322 = vmatpush1.msra.mxu0 0.0
        %1323 = vmatprep.subr.mxu0 0.0
        %1324 = vmatpush1.msra.mxu0 0.0
        %1325 = vmatprep.subr.mxu0 0.0
        %1326 = vmatpush1.msra.mxu0 0.0
        %1327 = vmatprep.subr.mxu0 0.0
        %1328 = vmatpush1.msra.mxu0 0.0
        %1329 = vmatprep.subr.mxu0 0.0
        %1330 = vmatpush1.msra.mxu0 0.0
        %1331 = vmatprep.subr.mxu0 0.0
        %1332 = vmatpush1.msra.mxu0 0.0
        %1333 = vmatprep.subr.mxu0 0.0
        %1334 = vmatpush1.msra.mxu0 0.0
        %1335 = vmatprep.mubr.f32.mxu0 0.0
        %v1336 = vand.u32 %v1127, 4294901760
        %1337 = vmatmul.mubr.f32.gmra.mrb[0].mxu0 %v1336
        %v1338 = vpop.f32.mrb[0].mxu0
        %v1339 = vadd.f32 %v1214, %v1338
        %v1340 = vpop.f32.mrb[0].mxu0
        %v1341 = vadd.f32 %v1216, %v1340
        %1342 = vmatprep.mubr.f32.mxu0 0.0
        %v1343 = vand.u32 %v1130, 4294901760
        %1344 = vmatmul.mubr.f32.gmra.mrb[0].mxu0 %v1343
        %v1345 = vpop.f32.mrb[0].mxu0
        %v1346 = vadd.f32 %v1225, %v1345
        %v1347 = vpop.f32.mrb[0].mxu0
        %v1348 = vadd.f32 %v1227, %v1347
        %1349 = vmatprep.mubr.f32.mxu0 0.0
        %v1350 = vand.u32 %v1133, 4294901760
        %1351 = vmatmul.mubr.f32.gmra.mrb[0].mxu0 %v1350
        %v1352 = vpop.f32.mrb[0].mxu0
        %v1353 = vadd.f32 %v1236, %v1352
        %v1354 = vpop.f32.mrb[0].mxu0
        %v1355 = vadd.f32 %v1238, %v1354
        %1356 = vmatprep.mubr.f32.mxu0 0.0
        %v1357 = vand.u32 %v1136, 4294901760
        %1358 = vmatmul.mubr.f32.gmra.mrb[0].mxu0 %v1357
        %v1359 = vpop.f32.mrb[0].mxu0
        %v1360 = vadd.f32 %v1247, %v1359
        %v1361 = vpop.f32.mrb[0].mxu0
        %v1362 = vadd.f32 %v1249, %v1361
        %1363 = vdwg.mxu0
        %v1364 = vand.u32 %v1102, 4294901760
        %v1365 = vsub.f32 %v1102, %v1364
        %1366 = vmatprep.subr.mxu0 %v1365
        %v1367 = vand.u32 %v1101, 4294901760
        %v1368 = vsub.f32 %v1101, %v1367
        %1369 = vmatpush1.msra.mxu0 %v1368
        %v1370 = vand.u32 %v1104, 4294901760
        %v1371 = vsub.f32 %v1104, %v1370
        %1372 = vmatprep.subr.mxu0 %v1371
        %v1373 = vand.u32 %v1103, 4294901760
        %v1374 = vsub.f32 %v1103, %v1373
        %1375 = vmatpush1.msra.mxu0 %v1374
        %1376 = vmatprep.subr.mxu0 0.0
        %1377 = vmatpush1.msra.mxu0 0.0
        %1378 = vmatprep.subr.mxu0 0.0
        %1379 = vmatpush1.msra.mxu0 0.0
        %1380 = vmatprep.subr.mxu0 0.0
        %1381 = vmatpush1.msra.mxu0 0.0
        %1382 = vmatprep.subr.mxu0 0.0
        %1383 = vmatpush1.msra.mxu0 0.0
        %1384 = vmatprep.subr.mxu0 0.0
        %1385 = vmatpush1.msra.mxu0 0.0
        %1386 = vmatprep.subr.mxu0 0.0
        %1387 = vmatpush1.msra.mxu0 0.0
        %1388 = vmatprep.subr.mxu0 0.0
        %1389 = vmatpush1.msra.mxu0 0.0
        %1390 = vmatprep.subr.mxu0 0.0
        %1391 = vmatpush1.msra.mxu0 0.0
        %1392 = vmatprep.subr.mxu0 0.0
        %1393 = vmatpush1.msra.mxu0 0.0
        %1394 = vmatprep.subr.mxu0 0.0
        %1395 = vmatpush1.msra.mxu0 0.0
        %1396 = vmatprep.subr.mxu0 0.0
        %1397 = vmatpush1.msra.mxu0 0.0
        %1398 = vmatprep.subr.mxu0 0.0
        %1399 = vmatpush1.msra.mxu0 0.0
        %1400 = vmatprep.subr.mxu0 0.0
        %1401 = vmatpush1.msra.mxu0 0.0
        %1402 = vmatprep.subr.mxu0 0.0
        %1403 = vmatpush1.msra.mxu0 0.0
        %1404 = vmatprep.subr.mxu0 0.0
        %1405 = vmatpush1.msra.mxu0 0.0
        %1406 = vmatprep.subr.mxu0 0.0
        %1407 = vmatpush1.msra.mxu0 0.0
        %1408 = vmatprep.subr.mxu0 0.0
        %1409 = vmatpush1.msra.mxu0 0.0
        %1410 = vmatprep.subr.mxu0 0.0
        %1411 = vmatpush1.msra.mxu0 0.0
        %1412 = vmatprep.subr.mxu0 0.0
        %1413 = vmatpush1.msra.mxu0 0.0
        %1414 = vmatprep.subr.mxu0 0.0
        %1415 = vmatpush1.msra.mxu0 0.0
        %1416 = vmatprep.subr.mxu0 0.0
        %1417 = vmatpush1.msra.mxu0 0.0
        %1418 = vmatprep.subr.mxu0 0.0
        %1419 = vmatpush1.msra.mxu0 0.0
        %1420 = vmatprep.subr.mxu0 0.0
        %1421 = vmatpush1.msra.mxu0 0.0
        %1422 = vmatprep.subr.mxu0 0.0
        %1423 = vmatpush1.msra.mxu0 0.0
        %1424 = vmatprep.subr.mxu0 0.0
        %1425 = vmatpush1.msra.mxu0 0.0
        %1426 = vmatprep.subr.mxu0 0.0
        %1427 = vmatpush1.msra.mxu0 0.0
        %1428 = vmatprep.subr.mxu0 0.0
        %1429 = vmatpush1.msra.mxu0 0.0
        %1430 = vmatprep.subr.mxu0 0.0
        %1431 = vmatpush1.msra.mxu0 0.0
        %1432 = vmatprep.subr.mxu0 0.0
        %1433 = vmatpush1.msra.mxu0 0.0
        %1434 = vmatprep.subr.mxu0 0.0
        %1435 = vmatpush1.msra.mxu0 0.0
        %1436 = vmatprep.mubr.f32.mxu0 0.0
        %v1437 = vand.u32 %v1127, 4294901760
        %v1438 = vsub.f32 %v1127, %v1437
        %1439 = vmatmul.mubr.f32.gmra.mrb[0].mxu0 %v1438
        %v1440 = vpop.f32.mrb[0].mxu0
        %v1441 = vadd.f32 %v1339, %v1440
        %v1442 = vpop.f32.mrb[0].mxu0
        %v1443 = vadd.f32 %v1341, %v1442
        %1444 = vmatprep.mubr.f32.mxu0 0.0
        %v1445 = vand.u32 %v1130, 4294901760
        %v1446 = vsub.f32 %v1130, %v1445
        %1447 = vmatmul.mubr.f32.gmra.mrb[0].mxu0 %v1446
        %v1448 = vpop.f32.mrb[0].mxu0
        %v1449 = vadd.f32 %v1346, %v1448
        %v1450 = vpop.f32.mrb[0].mxu0
        %v1451 = vadd.f32 %v1348, %v1450
        %1452 = vmatprep.mubr.f32.mxu0 0.0
        %v1453 = vand.u32 %v1133, 4294901760
        %v1454 = vsub.f32 %v1133, %v1453
        %1455 = vmatmul.mubr.f32.gmra.mrb[0].mxu0 %v1454
        %v1456 = vpop.f32.mrb[0].mxu0
        %v1457 = vadd.f32 %v1353, %v1456
        %v1458 = vpop.f32.mrb[0].mxu0
        %v1459 = vadd.f32 %v1355, %v1458
        %1460 = vmatprep.mubr.f32.mxu0 0.0
        %v1461 = vand.u32 %v1136, 4294901760
        %v1462 = vsub.f32 %v1136, %v1461
        %1463 = vmatmul.mubr.f32.gmra.mrb[0].mxu0 %v1462
        %v1464 = vpop.f32.mrb[0].mxu0
        %v1465 = vadd.f32 %v1360, %v1464
        %v1466 = vpop.f32.mrb[0].mxu0
        %v1467 = vadd.f32 %v1362, %v1466
        %1468 = vdwg.mxu0
        %v1469 = vand.u32 %v1102, 4294901760
        %1470 = vmatprep.subr.mxu0 %v1469
        %v1471 = vand.u32 %v1101, 4294901760
        %1472 = vmatpush1.msra.mxu0 %v1471
        %v1473 = vand.u32 %v1104, 4294901760
        %1474 = vmatprep.subr.mxu0 %v1473
        %v1475 = vand.u32 %v1103, 4294901760
        %1476 = vmatpush1.msra.mxu0 %v1475
        %1477 = vmatprep.subr.mxu0 0.0
        %1478 = vmatpush1.msra.mxu0 0.0
        %1479 = vmatprep.subr.mxu0 0.0
        %1480 = vmatpush1.msra.mxu0 0.0
        %1481 = vmatprep.subr.mxu0 0.0
        %1482 = vmatpush1.msra.mxu0 0.0
        %1483 = vmatprep.subr.mxu0 0.0
        %1484 = vmatpush1.msra.mxu0 0.0
        %1485 = vmatprep.subr.mxu0 0.0
        %1486 = vmatpush1.msra.mxu0 0.0
        %1487 = vmatprep.subr.mxu0 0.0
        %1488 = vmatpush1.msra.mxu0 0.0
        %1489 = vmatprep.subr.mxu0 0.0
        %1490 = vmatpush1.msra.mxu0 0.0
        %1491 = vmatprep.subr.mxu0 0.0
        %1492 = vmatpush1.msra.mxu0 0.0
        %1493 = vmatprep.subr.mxu0 0.0
        %1494 = vmatpush1.msra.mxu0 0.0
        %1495 = vmatprep.subr.mxu0 0.0
        %1496 = vmatpush1.msra.mxu0 0.0
        %1497 = vmatprep.subr.mxu0 0.0
        %1498 = vmatpush1.msra.mxu0 0.0
        %1499 = vmatprep.subr.mxu0 0.0
        %1500 = vmatpush1.msra.mxu0 0.0
        %1501 = vmatprep.subr.mxu0 0.0
        %1502 = vmatpush1.msra.mxu0 0.0
        %1503 = vmatprep.subr.mxu0 0.0
        %1504 = vmatpush1.msra.mxu0 0.0
        %1505 = vmatprep.subr.mxu0 0.0
        %1506 = vmatpush1.msra.mxu0 0.0
        %1507 = vmatprep.subr.mxu0 0.0
        %1508 = vmatpush1.msra.mxu0 0.0
        %1509 = vmatprep.subr.mxu0 0.0
        %1510 = vmatpush1.msra.mxu0 0.0
        %1511 = vmatprep.subr.mxu0 0.0
        %1512 = vmatpush1.msra.mxu0 0.0
        %1513 = vmatprep.subr.mxu0 0.0
        %1514 = vmatpush1.msra.mxu0 0.0
        %1515 = vmatprep.subr.mxu0 0.0
        %1516 = vmatpush1.msra.mxu0 0.0
        %1517 = vmatprep.subr.mxu0 0.0
        %1518 = vmatpush1.msra.mxu0 0.0
        %1519 = vmatprep.subr.mxu0 0.0
        %1520 = vmatpush1.msra.mxu0 0.0
        %1521 = vmatprep.subr.mxu0 0.0
        %1522 = vmatpush1.msra.mxu0 0.0
        %1523 = vmatprep.subr.mxu0 0.0
        %1524 = vmatpush1.msra.mxu0 0.0
        %1525 = vmatprep.subr.mxu0 0.0
        %1526 = vmatpush1.msra.mxu0 0.0
        %1527 = vmatprep.subr.mxu0 0.0
        %1528 = vmatpush1.msra.mxu0 0.0
        %1529 = vmatprep.subr.mxu0 0.0
        %1530 = vmatpush1.msra.mxu0 0.0
        %1531 = vmatprep.subr.mxu0 0.0
        %1532 = vmatpush1.msra.mxu0 0.0
        %1533 = vmatprep.subr.mxu0 0.0
        %1534 = vmatpush1.msra.mxu0 0.0
        %1535 = vmatprep.subr.mxu0 0.0
        %1536 = vmatpush1.msra.mxu0 0.0
        %1537 = vmatprep.mubr.f32.mxu0 0.0
        %v1538 = vand.u32 %v1127, 4294901760
        %v1539 = vsub.f32 %v1127, %v1538
        %v1540 = vand.u32 %v1539, 4294901760
        %1541 = vmatmul.mubr.f32.gmra.mrb[0].mxu0 %v1540
        %v1542 = vpop.f32.mrb[0].mxu0
        %v1543 = vadd.f32 %v1441, %v1542
        %v1544 = vpop.f32.mrb[0].mxu0
        %v1545 = vadd.f32 %v1443, %v1544
        %1546 = vmatprep.mubr.f32.mxu0 0.0
        %v1547 = vand.u32 %v1130, 4294901760
        %v1548 = vsub.f32 %v1130, %v1547
        %v1549 = vand.u32 %v1548, 4294901760
        %1550 = vmatmul.mubr.f32.gmra.mrb[0].mxu0 %v1549
        %v1551 = vpop.f32.mrb[0].mxu0
        %v1552 = vadd.f32 %v1449, %v1551
        %v1553 = vpop.f32.mrb[0].mxu0
        %v1554 = vadd.f32 %v1451, %v1553
        %1555 = vmatprep.mubr.f32.mxu0 0.0
        %v1556 = vand.u32 %v1133, 4294901760
        %v1557 = vsub.f32 %v1133, %v1556
        %v1558 = vand.u32 %v1557, 4294901760
        %1559 = vmatmul.mubr.f32.gmra.mrb[0].mxu0 %v1558
        %v1560 = vpop.f32.mrb[0].mxu0
        %v1561 = vadd.f32 %v1457, %v1560
        %v1562 = vpop.f32.mrb[0].mxu0
        %v1563 = vadd.f32 %v1459, %v1562
        %1564 = vmatprep.mubr.f32.mxu0 0.0
        %v1565 = vand.u32 %v1136, 4294901760
        %v1566 = vsub.f32 %v1136, %v1565
        %v1567 = vand.u32 %v1566, 4294901760
        %1568 = vmatmul.mubr.f32.gmra.mrb[0].mxu0 %v1567
        %v1569 = vpop.f32.mrb[0].mxu0
        %v1570 = vadd.f32 %v1465, %v1569
        %v1571 = vpop.f32.mrb[0].mxu0
        %v1572 = vadd.f32 %v1467, %v1571
        %1573 = vdwg.mxu0
        %v1574 = vand.u32 %v1102, 4294901760
        %v1575 = vsub.f32 %v1102, %v1574
        %v1576 = vand.u32 %v1575, 4294901760
        %1577 = vmatprep.subr.mxu0 %v1576
        %v1578 = vand.u32 %v1101, 4294901760
        %v1579 = vsub.f32 %v1101, %v1578
        %v1580 = vand.u32 %v1579, 4294901760
        %1581 = vmatpush1.msra.mxu0 %v1580
        %v1582 = vand.u32 %v1104, 4294901760
        %v1583 = vsub.f32 %v1104, %v1582
        %v1584 = vand.u32 %v1583, 4294901760
        %1585 = vmatprep.subr.mxu0 %v1584
        %v1586 = vand.u32 %v1103, 4294901760
        %v1587 = vsub.f32 %v1103, %v1586
        %v1588 = vand.u32 %v1587, 4294901760
        %1589 = vmatpush1.msra.mxu0 %v1588
        %1590 = vmatprep.subr.mxu0 0.0
        %1591 = vmatpush1.msra.mxu0 0.0
        %1592 = vmatprep.subr.mxu0 0.0
        %1593 = vmatpush1.msra.mxu0 0.0
        %1594 = vmatprep.subr.mxu0 0.0
        %1595 = vmatpush1.msra.mxu0 0.0
        %1596 = vmatprep.subr.mxu0 0.0
        %1597 = vmatpush1.msra.mxu0 0.0
        %1598 = vmatprep.subr.mxu0 0.0
        %1599 = vmatpush1.msra.mxu0 0.0
        %1600 = vmatprep.subr.mxu0 0.0
        %1601 = vmatpush1.msra.mxu0 0.0
        %1602 = vmatprep.subr.mxu0 0.0
        %1603 = vmatpush1.msra.mxu0 0.0
        %1604 = vmatprep.subr.mxu0 0.0
        %1605 = vmatpush1.msra.mxu0 0.0
        %1606 = vmatprep.subr.mxu0 0.0
        %1607 = vmatpush1.msra.mxu0 0.0
        %1608 = vmatprep.subr.mxu0 0.0
        %1609 = vmatpush1.msra.mxu0 0.0
        %1610 = vmatprep.subr.mxu0 0.0
        %1611 = vmatpush1.msra.mxu0 0.0
        %1612 = vmatprep.subr.mxu0 0.0
        %1613 = vmatpush1.msra.mxu0 0.0
        %1614 = vmatprep.subr.mxu0 0.0
        %1615 = vmatpush1.msra.mxu0 0.0
        %1616 = vmatprep.subr.mxu0 0.0
        %1617 = vmatpush1.msra.mxu0 0.0
        %1618 = vmatprep.subr.mxu0 0.0
        %1619 = vmatpush1.msra.mxu0 0.0
        %1620 = vmatprep.subr.mxu0 0.0
        %1621 = vmatpush1.msra.mxu0 0.0
        %1622 = vmatprep.subr.mxu0 0.0
        %1623 = vmatpush1.msra.mxu0 0.0
        %1624 = vmatprep.subr.mxu0 0.0
        %1625 = vmatpush1.msra.mxu0 0.0
        %1626 = vmatprep.subr.mxu0 0.0
        %1627 = vmatpush1.msra.mxu0 0.0
        %1628 = vmatprep.subr.mxu0 0.0
        %1629 = vmatpush1.msra.mxu0 0.0
        %1630 = vmatprep.subr.mxu0 0.0
        %1631 = vmatpush1.msra.mxu0 0.0
        %1632 = vmatprep.subr.mxu0 0.0
        %1633 = vmatpush1.msra.mxu0 0.0
        %1634 = vmatprep.subr.mxu0 0.0
        %1635 = vmatpush1.msra.mxu0 0.0
        %1636 = vmatprep.subr.mxu0 0.0
        %1637 = vmatpush1.msra.mxu0 0.0
        %1638 = vmatprep.subr.mxu0 0.0
        %1639 = vmatpush1.msra.mxu0 0.0
        %1640 = vmatprep.subr.mxu0 0.0
        %1641 = vmatpush1.msra.mxu0 0.0
        %1642 = vmatprep.subr.mxu0 0.0
        %1643 = vmatpush1.msra.mxu0 0.0
        %1644 = vmatprep.subr.mxu0 0.0
        %1645 = vmatpush1.msra.mxu0 0.0
        %1646 = vmatprep.subr.mxu0 0.0
        %1647 = vmatpush1.msra.mxu0 0.0
        %1648 = vmatprep.subr.mxu0 0.0
        %1649 = vmatpush1.msra.mxu0 0.0
        %1650 = vmatprep.mubr.f32.mxu0 0.0
        %v1651 = vand.u32 %v1127, 4294901760
        %1652 = vmatmul.mubr.f32.gmra.mrb[0].mxu0 %v1651
        %v1653 = vpop.f32.mrb[0].mxu0
        %v1654 = vadd.f32 %v1543, %v1653
        %v1655 = vpop.f32.mrb[0].mxu0
        %v1656 = vadd.f32 %v1545, %v1655
        %1657 = vmatprep.mubr.f32.mxu0 0.0
        %v1658 = vand.u32 %v1130, 4294901760
        %1659 = vmatmul.mubr.f32.gmra.mrb[0].mxu0 %v1658
        %v1660 = vpop.f32.mrb[0].mxu0
        %v1661 = vadd.f32 %v1552, %v1660
        %v1662 = vpop.f32.mrb[0].mxu0
        %v1663 = vadd.f32 %v1554, %v1662
        %1664 = vmatprep.mubr.f32.mxu0 0.0
        %v1665 = vand.u32 %v1133, 4294901760
        %1666 = vmatmul.mubr.f32.gmra.mrb[0].mxu0 %v1665
        %v1667 = vpop.f32.mrb[0].mxu0
        %v1668 = vadd.f32 %v1561, %v1667
        %v1669 = vpop.f32.mrb[0].mxu0
        %v1670 = vadd.f32 %v1563, %v1669
        %1671 = vmatprep.mubr.f32.mxu0 0.0
        %v1672 = vand.u32 %v1136, 4294901760
        %1673 = vmatmul.mubr.f32.gmra.mrb[0].mxu0 %v1672
        %v1674 = vpop.f32.mrb[0].mxu0
        %v1675 = vadd.f32 %v1570, %v1674
        %v1676 = vpop.f32.mrb[0].mxu0
        %v1677 = vadd.f32 %v1572, %v1676
        %1678 = vdwg.mxu0
        %v1679 = vand.u32 %v1102, 4294901760
        %1680 = vmatprep.subr.mxu0 %v1679
        %v1681 = vand.u32 %v1101, 4294901760
        %1682 = vmatpush1.msra.mxu0 %v1681
        %v1683 = vand.u32 %v1104, 4294901760
        %1684 = vmatprep.subr.mxu0 %v1683
        %v1685 = vand.u32 %v1103, 4294901760
        %1686 = vmatpush1.msra.mxu0 %v1685
        %1687 = vmatprep.subr.mxu0 0.0
        %1688 = vmatpush1.msra.mxu0 0.0
        %1689 = vmatprep.subr.mxu0 0.0
        %1690 = vmatpush1.msra.mxu0 0.0
        %1691 = vmatprep.subr.mxu0 0.0
        %1692 = vmatpush1.msra.mxu0 0.0
        %1693 = vmatprep.subr.mxu0 0.0
        %1694 = vmatpush1.msra.mxu0 0.0
        %1695 = vmatprep.subr.mxu0 0.0
        %1696 = vmatpush1.msra.mxu0 0.0
        %1697 = vmatprep.subr.mxu0 0.0
        %1698 = vmatpush1.msra.mxu0 0.0
        %1699 = vmatprep.subr.mxu0 0.0
        %1700 = vmatpush1.msra.mxu0 0.0
        %1701 = vmatprep.subr.mxu0 0.0
        %1702 = vmatpush1.msra.mxu0 0.0
        %1703 = vmatprep.subr.mxu0 0.0
        %1704 = vmatpush1.msra.mxu0 0.0
        %1705 = vmatprep.subr.mxu0 0.0
        %1706 = vmatpush1.msra.mxu0 0.0
        %1707 = vmatprep.subr.mxu0 0.0
        %1708 = vmatpush1.msra.mxu0 0.0
        %1709 = vmatprep.subr.mxu0 0.0
        %1710 = vmatpush1.msra.mxu0 0.0
        %1711 = vmatprep.subr.mxu0 0.0
        %1712 = vmatpush1.msra.mxu0 0.0
        %1713 = vmatprep.subr.mxu0 0.0
        %1714 = vmatpush1.msra.mxu0 0.0
        %1715 = vmatprep.subr.mxu0 0.0
        %1716 = vmatpush1.msra.mxu0 0.0
        %1717 = vmatprep.subr.mxu0 0.0
        %1718 = vmatpush1.msra.mxu0 0.0
        %1719 = vmatprep.subr.mxu0 0.0
        %1720 = vmatpush1.msra.mxu0 0.0
        %1721 = vmatprep.subr.mxu0 0.0
        %1722 = vmatpush1.msra.mxu0 0.0
        %1723 = vmatprep.subr.mxu0 0.0
        %1724 = vmatpush1.msra.mxu0 0.0
        %1725 = vmatprep.subr.mxu0 0.0
        %1726 = vmatpush1.msra.mxu0 0.0
        %1727 = vmatprep.subr.mxu0 0.0
        %1728 = vmatpush1.msra.mxu0 0.0
        %1729 = vmatprep.subr.mxu0 0.0
        %1730 = vmatpush1.msra.mxu0 0.0
        %1731 = vmatprep.subr.mxu0 0.0
        %1732 = vmatpush1.msra.mxu0 0.0
        %1733 = vmatprep.subr.mxu0 0.0
        %1734 = vmatpush1.msra.mxu0 0.0
        %1735 = vmatprep.subr.mxu0 0.0
        %1736 = vmatpush1.msra.mxu0 0.0
        %1737 = vmatprep.subr.mxu0 0.0
        %1738 = vmatpush1.msra.mxu0 0.0
        %1739 = vmatprep.subr.mxu0 0.0
        %1740 = vmatpush1.msra.mxu0 0.0
        %1741 = vmatprep.subr.mxu0 0.0
        %1742 = vmatpush1.msra.mxu0 0.0
        %1743 = vmatprep.subr.mxu0 0.0
        %1744 = vmatpush1.msra.mxu0 0.0
        %1745 = vmatprep.subr.mxu0 0.0
        %1746 = vmatpush1.msra.mxu0 0.0
        %1747 = vmatprep.mubr.f32.mxu0 0.0
        %v1748 = vand.u32 %v1127, 4294901760
        %1749 = vmatmul.mubr.f32.gmra.mrb[0].mxu0 %v1748
        %v1750 = vpop.f32.mrb[0].mxu0
        %v1751 = vadd.f32 %v1654, %v1750
        %v1752 = vpop.f32.mrb[0].mxu0
        %v1753 = vadd.f32 %v1656, %v1752
        %1754 = vmatprep.mubr.f32.mxu0 0.0
        %v1755 = vand.u32 %v1130, 4294901760
        %1756 = vmatmul.mubr.f32.gmra.mrb[0].mxu0 %v1755
        %v1757 = vpop.f32.mrb[0].mxu0
        %v1758 = vadd.f32 %v1661, %v1757
        %v1759 = vpop.f32.mrb[0].mxu0
        %v1760 = vadd.f32 %v1663, %v1759
        %1761 = vmatprep.mubr.f32.mxu0 0.0
        %v1762 = vand.u32 %v1133, 4294901760
        %1763 = vmatmul.mubr.f32.gmra.mrb[0].mxu0 %v1762
        %v1764 = vpop.f32.mrb[0].mxu0
        %v1765 = vadd.f32 %v1668, %v1764
        %v1766 = vpop.f32.mrb[0].mxu0
        %v1767 = vadd.f32 %v1670, %v1766
        %1768 = vmatprep.mubr.f32.mxu0 0.0
        %v1769 = vand.u32 %v1136, 4294901760
        %1770 = vmatmul.mubr.f32.gmra.mrb[0].mxu0 %v1769
        %v1771 = vpop.f32.mrb[0].mxu0
        %v1772 = vadd.f32 %v1675, %v1771
        %v1773 = vpop.f32.mrb[0].mxu0
        %v1774 = vadd.f32 %v1677, %v1773
        %1775 = vdwg.mxu0
        %v1776 = vtanh.pop %v1751
        %v1777 = vtanh.pop %v1753
        %v1778 = vtanh.pop %v1758
        %v1779 = vtanh.pop %v1760
        %v1780 = vtanh.pop %v1765
        %v1781 = vtanh.pop %v1767
        %v1782 = vtanh.pop %v1772
        %v1783 = vtanh.pop %v1774
        %1785 = vset.pattern.permute.xlu0 0
        %1786 = vperm.xlu0 %1785, %v357
        %v1787 = vpop.permute.xlu0 %1786
        %v1789 = vlaneseq
        %v1790 = vshrl.u32 %v1789, 7
        %v1791 = vsub.s32 0, %v1790
        %v1792 = vrot.slane %v1787, %v1791
        %v1794 = vsel %vm502, %v356, 0
        %v1796 = vand.u32 %v1777, 4294901760
        %1797 = vmatprep.subr.mxu0 %v1796
        %v1798 = vand.u32 %v1776, 4294901760
        %1799 = vmatpush1.msra.mxu0 %v1798
        %v1800 = vand.u32 %v1779, 4294901760
        %1801 = vmatprep.subr.mxu0 %v1800
        %v1802 = vand.u32 %v1778, 4294901760
        %1803 = vmatpush1.msra.mxu0 %v1802
        %v1804 = vand.u32 %v1781, 4294901760
        %1805 = vmatprep.subr.mxu0 %v1804
        %v1806 = vand.u32 %v1780, 4294901760
        %1807 = vmatpush1.msra.mxu0 %v1806
        %v1808 = vand.u32 %v1783, 4294901760
        %1809 = vmatprep.subr.mxu0 %v1808
        %v1810 = vand.u32 %v1782, 4294901760
        %1811 = vmatpush1.msra.mxu0 %v1810
        %1812 = vmatprep.subr.mxu0 0.0
        %1813 = vmatpush1.msra.mxu0 0.0
        %1814 = vmatprep.subr.mxu0 0.0
        %1815 = vmatpush1.msra.mxu0 0.0
        %1816 = vmatprep.subr.mxu0 0.0
        %1817 = vmatpush1.msra.mxu0 0.0
        %1818 = vmatprep.subr.mxu0 0.0
        %1819 = vmatpush1.msra.mxu0 0.0
        %1820 = vmatprep.subr.mxu0 0.0
        %1821 = vmatpush1.msra.mxu0 0.0
        %1822 = vmatprep.subr.mxu0 0.0
        %1823 = vmatpush1.msra.mxu0 0.0
        %1824 = vmatprep.subr.mxu0 0.0
        %1825 = vmatpush1.msra.mxu0 0.0
        %1826 = vmatprep.subr.mxu0 0.0
        %1827 = vmatpush1.msra.mxu0 0.0
        %1828 = vmatprep.subr.mxu0 0.0
        %1829 = vmatpush1.msra.mxu0 0.0
        %1830 = vmatprep.subr.mxu0 0.0
        %1831 = vmatpush1.msra.mxu0 0.0
        %1832 = vmatprep.subr.mxu0 0.0
        %1833 = vmatpush1.msra.mxu0 0.0
        %1834 = vmatprep.subr.mxu0 0.0
        %1835 = vmatpush1.msra.mxu0 0.0
        %1836 = vmatprep.subr.mxu0 0.0
        %1837 = vmatpush1.msra.mxu0 0.0
        %1838 = vmatprep.subr.mxu0 0.0
        %1839 = vmatpush1.msra.mxu0 0.0
        %1840 = vmatprep.subr.mxu0 0.0
        %1841 = vmatpush1.msra.mxu0 0.0
        %1842 = vmatprep.subr.mxu0 0.0
        %1843 = vmatpush1.msra.mxu0 0.0
        %1844 = vmatprep.subr.mxu0 0.0
        %1845 = vmatpush1.msra.mxu0 0.0
        %1846 = vmatprep.subr.mxu0 0.0
        %1847 = vmatpush1.msra.mxu0 0.0
        %1848 = vmatprep.subr.mxu0 0.0
        %1849 = vmatpush1.msra.mxu0 0.0
        %1850 = vmatprep.subr.mxu0 0.0
        %1851 = vmatpush1.msra.mxu0 0.0
        %1852 = vmatprep.subr.mxu0 0.0
        %1853 = vmatpush1.msra.mxu0 0.0
        %1854 = vmatprep.subr.mxu0 0.0
        %1855 = vmatpush1.msra.mxu0 0.0
        %1856 = vmatprep.subr.mxu0 0.0
        %1857 = vmatpush1.msra.mxu0 0.0
        %1858 = vmatprep.subr.mxu0 0.0
        %1859 = vmatpush1.msra.mxu0 0.0
        %1860 = vmatprep.subr.mxu0 0.0
        %1861 = vmatpush1.msra.mxu0 0.0
        %1862 = vmatprep.subr.mxu0 0.0
        %1863 = vmatpush1.msra.mxu0 0.0
        %1864 = vmatprep.subr.mxu0 0.0
        %1865 = vmatpush1.msra.mxu0 0.0
        %1866 = vmatprep.subr.mxu0 0.0
        %1867 = vmatpush1.msra.mxu0 0.0
        %1868 = vmatprep.mubr.f32.mxu0 0.0
        %v1869 = vand.u32 %v1794, 4294901760
        %v1870 = vsub.f32 %v1794, %v1869
        %v1871 = vand.u32 %v1870, 4294901760
        %v1872 = vsub.f32 %v1870, %v1871
        %v1873 = vand.u32 %v1872, 4294901760
        %1874 = vmatmul.mubr.f32.gmra.mrb[0].mxu0 %v1873
        %v1875 = vpop.f32.mrb[0].mxu0
        %v1876 = vadd.f32 %v1792, %v1875
        %v1877 = vpop.f32.mrb[0].mxu0
        %v1878 = vadd.f32 %v1792, %v1877
        %1879 = vdwg.mxu0
        %v1880 = vand.u32 %v1777, 4294901760
        %v1881 = vsub.f32 %v1777, %v1880
        %v1882 = vand.u32 %v1881, 4294901760
        %v1883 = vsub.f32 %v1881, %v1882
        %v1884 = vand.u32 %v1883, 4294901760
        %1885 = vmatprep.subr.mxu0 %v1884
        %v1886 = vand.u32 %v1776, 4294901760
        %v1887 = vsub.f32 %v1776, %v1886
        %v1888 = vand.u32 %v1887, 4294901760
        %v1889 = vsub.f32 %v1887, %v1888
        %v1890 = vand.u32 %v1889, 4294901760
        %1891 = vmatpush1.msra.mxu0 %v1890
        %v1892 = vand.u32 %v1779, 4294901760
        %v1893 = vsub.f32 %v1779, %v1892
        %v1894 = vand.u32 %v1893, 4294901760
        %v1895 = vsub.f32 %v1893, %v1894
        %v1896 = vand.u32 %v1895, 4294901760
        %1897 = vmatprep.subr.mxu0 %v1896
        %v1898 = vand.u32 %v1778, 4294901760
        %v1899 = vsub.f32 %v1778, %v1898
        %v1900 = vand.u32 %v1899, 4294901760
        %v1901 = vsub.f32 %v1899, %v1900
        %v1902 = vand.u32 %v1901, 4294901760
        %1903 = vmatpush1.msra.mxu0 %v1902
        %v1904 = vand.u32 %v1781, 4294901760
        %v1905 = vsub.f32 %v1781, %v1904
        %v1906 = vand.u32 %v1905, 4294901760
        %v1907 = vsub.f32 %v1905, %v1906
        %v1908 = vand.u32 %v1907, 4294901760
        %1909 = vmatprep.subr.mxu0 %v1908
        %v1910 = vand.u32 %v1780, 4294901760
        %v1911 = vsub.f32 %v1780, %v1910
        %v1912 = vand.u32 %v1911, 4294901760
        %v1913 = vsub.f32 %v1911, %v1912
        %v1914 = vand.u32 %v1913, 4294901760
        %1915 = vmatpush1.msra.mxu0 %v1914
        %v1916 = vand.u32 %v1783, 4294901760
        %v1917 = vsub.f32 %v1783, %v1916
        %v1918 = vand.u32 %v1917, 4294901760
        %v1919 = vsub.f32 %v1917, %v1918
        %v1920 = vand.u32 %v1919, 4294901760
        %1921 = vmatprep.subr.mxu0 %v1920
        %v1922 = vand.u32 %v1782, 4294901760
        %v1923 = vsub.f32 %v1782, %v1922
        %v1924 = vand.u32 %v1923, 4294901760
        %v1925 = vsub.f32 %v1923, %v1924
        %v1926 = vand.u32 %v1925, 4294901760
        %1927 = vmatpush1.msra.mxu0 %v1926
        %1928 = vmatprep.subr.mxu0 0.0
        %1929 = vmatpush1.msra.mxu0 0.0
        %1930 = vmatprep.subr.mxu0 0.0
        %1931 = vmatpush1.msra.mxu0 0.0
        %1932 = vmatprep.subr.mxu0 0.0
        %1933 = vmatpush1.msra.mxu0 0.0
        %1934 = vmatprep.subr.mxu0 0.0
        %1935 = vmatpush1.msra.mxu0 0.0
        %1936 = vmatprep.subr.mxu0 0.0
        %1937 = vmatpush1.msra.mxu0 0.0
        %1938 = vmatprep.subr.mxu0 0.0
        %1939 = vmatpush1.msra.mxu0 0.0
        %1940 = vmatprep.subr.mxu0 0.0
        %1941 = vmatpush1.msra.mxu0 0.0
        %1942 = vmatprep.subr.mxu0 0.0
        %1943 = vmatpush1.msra.mxu0 0.0
        %1944 = vmatprep.subr.mxu0 0.0
        %1945 = vmatpush1.msra.mxu0 0.0
        %1946 = vmatprep.subr.mxu0 0.0
        %1947 = vmatpush1.msra.mxu0 0.0
        %1948 = vmatprep.subr.mxu0 0.0
        %1949 = vmatpush1.msra.mxu0 0.0
        %1950 = vmatprep.subr.mxu0 0.0
        %1951 = vmatpush1.msra.mxu0 0.0
        %1952 = vmatprep.subr.mxu0 0.0
        %1953 = vmatpush1.msra.mxu0 0.0
        %1954 = vmatprep.subr.mxu0 0.0
        %1955 = vmatpush1.msra.mxu0 0.0
        %1956 = vmatprep.subr.mxu0 0.0
        %1957 = vmatpush1.msra.mxu0 0.0
        %1958 = vmatprep.subr.mxu0 0.0
        %1959 = vmatpush1.msra.mxu0 0.0
        %1960 = vmatprep.subr.mxu0 0.0
        %1961 = vmatpush1.msra.mxu0 0.0
        %1962 = vmatprep.subr.mxu0 0.0
        %1963 = vmatpush1.msra.mxu0 0.0
        %1964 = vmatprep.subr.mxu0 0.0
        %1965 = vmatpush1.msra.mxu0 0.0
        %1966 = vmatprep.subr.mxu0 0.0
        %1967 = vmatpush1.msra.mxu0 0.0
        %1968 = vmatprep.subr.mxu0 0.0
        %1969 = vmatpush1.msra.mxu0 0.0
        %1970 = vmatprep.subr.mxu0 0.0
        %1971 = vmatpush1.msra.mxu0 0.0
        %1972 = vmatprep.subr.mxu0 0.0
        %1973 = vmatpush1.msra.mxu0 0.0
        %1974 = vmatprep.subr.mxu0 0.0
        %1975 = vmatpush1.msra.mxu0 0.0
        %1976 = vmatprep.subr.mxu0 0.0
        %1977 = vmatpush1.msra.mxu0 0.0
        %1978 = vmatprep.subr.mxu0 0.0
        %1979 = vmatpush1.msra.mxu0 0.0
        %1980 = vmatprep.subr.mxu0 0.0
        %1981 = vmatpush1.msra.mxu0 0.0
        %1982 = vmatprep.subr.mxu0 0.0
        %1983 = vmatpush1.msra.mxu0 0.0
        %1984 = vmatprep.mubr.f32.mxu0 0.0
        %v1985 = vand.u32 %v1794, 4294901760
        %1986 = vmatmul.mubr.f32.gmra.mrb[0].mxu0 %v1985
        %v1987 = vpop.f32.mrb[0].mxu0
        %v1988 = vadd.f32 %v1876, %v1987
        %v1989 = vpop.f32.mrb[0].mxu0
        %v1990 = vadd.f32 %v1878, %v1989
        %1991 = vdwg.mxu0
        %v1992 = vand.u32 %v1777, 4294901760
        %v1993 = vsub.f32 %v1777, %v1992
        %1994 = vmatprep.subr.mxu0 %v1993
        %v1995 = vand.u32 %v1776, 4294901760
        %v1996 = vsub.f32 %v1776, %v1995
        %1997 = vmatpush1.msra.mxu0 %v1996
        %v1998 = vand.u32 %v1779, 4294901760
        %v1999 = vsub.f32 %v1779, %v1998
        %2000 = vmatprep.subr.mxu0 %v1999
        %v2001 = vand.u32 %v1778, 4294901760
        %v2002 = vsub.f32 %v1778, %v2001
        %2003 = vmatpush1.msra.mxu0 %v2002
        %v2004 = vand.u32 %v1781, 4294901760
        %v2005 = vsub.f32 %v1781, %v2004
        %2006 = vmatprep.subr.mxu0 %v2005
        %v2007 = vand.u32 %v1780, 4294901760
        %v2008 = vsub.f32 %v1780, %v2007
        %2009 = vmatpush1.msra.mxu0 %v2008
        %v2010 = vand.u32 %v1783, 4294901760
        %v2011 = vsub.f32 %v1783, %v2010
        %2012 = vmatprep.subr.mxu0 %v2011
        %v2013 = vand.u32 %v1782, 4294901760
        %v2014 = vsub.f32 %v1782, %v2013
        %2015 = vmatpush1.msra.mxu0 %v2014
        %2016 = vmatprep.subr.mxu0 0.0
        %2017 = vmatpush1.msra.mxu0 0.0
        %2018 = vmatprep.subr.mxu0 0.0
        %2019 = vmatpush1.msra.mxu0 0.0
        %2020 = vmatprep.subr.mxu0 0.0
        %2021 = vmatpush1.msra.mxu0 0.0
        %2022 = vmatprep.subr.mxu0 0.0
        %2023 = vmatpush1.msra.mxu0 0.0
        %2024 = vmatprep.subr.mxu0 0.0
        %2025 = vmatpush1.msra.mxu0 0.0
        %2026 = vmatprep.subr.mxu0 0.0
        %2027 = vmatpush1.msra.mxu0 0.0
        %2028 = vmatprep.subr.mxu0 0.0
        %2029 = vmatpush1.msra.mxu0 0.0
        %2030 = vmatprep.subr.mxu0 0.0
        %2031 = vmatpush1.msra.mxu0 0.0
        %2032 = vmatprep.subr.mxu0 0.0
        %2033 = vmatpush1.msra.mxu0 0.0
        %2034 = vmatprep.subr.mxu0 0.0
        %2035 = vmatpush1.msra.mxu0 0.0
        %2036 = vmatprep.subr.mxu0 0.0
        %2037 = vmatpush1.msra.mxu0 0.0
        %2038 = vmatprep.subr.mxu0 0.0
        %2039 = vmatpush1.msra.mxu0 0.0
        %2040 = vmatprep.subr.mxu0 0.0
        %2041 = vmatpush1.msra.mxu0 0.0
        %2042 = vmatprep.subr.mxu0 0.0
        %2043 = vmatpush1.msra.mxu0 0.0
        %2044 = vmatprep.subr.mxu0 0.0
        %2045 = vmatpush1.msra.mxu0 0.0
        %2046 = vmatprep.subr.mxu0 0.0
        %2047 = vmatpush1.msra.mxu0 0.0
        %2048 = vmatprep.subr.mxu0 0.0
        %2049 = vmatpush1.msra.mxu0 0.0
        %2050 = vmatprep.subr.mxu0 0.0
        %2051 = vmatpush1.msra.mxu0 0.0
        %2052 = vmatprep.subr.mxu0 0.0
        %2053 = vmatpush1.msra.mxu0 0.0
        %2054 = vmatprep.subr.mxu0 0.0
        %2055 = vmatpush1.msra.mxu0 0.0
        %2056 = vmatprep.subr.mxu0 0.0
        %2057 = vmatpush1.msra.mxu0 0.0
        %2058 = vmatprep.subr.mxu0 0.0
        %2059 = vmatpush1.msra.mxu0 0.0
        %2060 = vmatprep.subr.mxu0 0.0
        %2061 = vmatpush1.msra.mxu0 0.0
        %2062 = vmatprep.subr.mxu0 0.0
        %2063 = vmatpush1.msra.mxu0 0.0
        %2064 = vmatprep.subr.mxu0 0.0
        %2065 = vmatpush1.msra.mxu0 0.0
        %2066 = vmatprep.subr.mxu0 0.0
        %2067 = vmatpush1.msra.mxu0 0.0
        %2068 = vmatprep.subr.mxu0 0.0
        %2069 = vmatpush1.msra.mxu0 0.0
        %2070 = vmatprep.subr.mxu0 0.0
        %2071 = vmatpush1.msra.mxu0 0.0
        %2072 = vmatprep.mubr.f32.mxu0 0.0
        %v2073 = vand.u32 %v1794, 4294901760
        %v2074 = vsub.f32 %v1794, %v2073
        %2075 = vmatmul.mubr.f32.gmra.mrb[0].mxu0 %v2074
        %v2076 = vpop.f32.mrb[0].mxu0
        %v2077 = vadd.f32 %v1988, %v2076
        %v2078 = vpop.f32.mrb[0].mxu0
        %v2079 = vadd.f32 %v1990, %v2078
        %2080 = vdwg.mxu0
        %v2081 = vand.u32 %v1777, 4294901760
        %2082 = vmatprep.subr.mxu0 %v2081
        %v2083 = vand.u32 %v1776, 4294901760
        %2084 = vmatpush1.msra.mxu0 %v2083
        %v2085 = vand.u32 %v1779, 4294901760
        %2086 = vmatprep.subr.mxu0 %v2085
        %v2087 = vand.u32 %v1778, 4294901760
        %2088 = vmatpush1.msra.mxu0 %v2087
        %v2089 = vand.u32 %v1781, 4294901760
        %2090 = vmatprep.subr.mxu0 %v2089
        %v2091 = vand.u32 %v1780, 4294901760
        %2092 = vmatpush1.msra.mxu0 %v2091
        %v2093 = vand.u32 %v1783, 4294901760
        %2094 = vmatprep.subr.mxu0 %v2093
        %v2095 = vand.u32 %v1782, 4294901760
        %2096 = vmatpush1.msra.mxu0 %v2095
        %2097 = vmatprep.subr.mxu0 0.0
        %2098 = vmatpush1.msra.mxu0 0.0
        %2099 = vmatprep.subr.mxu0 0.0
        %2100 = vmatpush1.msra.mxu0 0.0
        %2101 = vmatprep.subr.mxu0 0.0
        %2102 = vmatpush1.msra.mxu0 0.0
        %2103 = vmatprep.subr.mxu0 0.0
        %2104 = vmatpush1.msra.mxu0 0.0
        %2105 = vmatprep.subr.mxu0 0.0
        %2106 = vmatpush1.msra.mxu0 0.0
        %2107 = vmatprep.subr.mxu0 0.0
        %2108 = vmatpush1.msra.mxu0 0.0
        %2109 = vmatprep.subr.mxu0 0.0
        %2110 = vmatpush1.msra.mxu0 0.0
        %2111 = vmatprep.subr.mxu0 0.0
        %2112 = vmatpush1.msra.mxu0 0.0
        %2113 = vmatprep.subr.mxu0 0.0
        %2114 = vmatpush1.msra.mxu0 0.0
        %2115 = vmatprep.subr.mxu0 0.0
        %2116 = vmatpush1.msra.mxu0 0.0
        %2117 = vmatprep.subr.mxu0 0.0
        %2118 = vmatpush1.msra.mxu0 0.0
        %2119 = vmatprep.subr.mxu0 0.0
        %2120 = vmatpush1.msra.mxu0 0.0
        %2121 = vmatprep.subr.mxu0 0.0
        %2122 = vmatpush1.msra.mxu0 0.0
        %2123 = vmatprep.subr.mxu0 0.0
        %2124 = vmatpush1.msra.mxu0 0.0
        %2125 = vmatprep.subr.mxu0 0.0
        %2126 = vmatpush1.msra.mxu0 0.0
        %2127 = vmatprep.subr.mxu0 0.0
        %2128 = vmatpush1.msra.mxu0 0.0
        %2129 = vmatprep.subr.mxu0 0.0
        %2130 = vmatpush1.msra.mxu0 0.0
        %2131 = vmatprep.subr.mxu0 0.0
        %2132 = vmatpush1.msra.mxu0 0.0
        %2133 = vmatprep.subr.mxu0 0.0
        %2134 = vmatpush1.msra.mxu0 0.0
        %2135 = vmatprep.subr.mxu0 0.0
        %2136 = vmatpush1.msra.mxu0 0.0
        %2137 = vmatprep.subr.mxu0 0.0
        %2138 = vmatpush1.msra.mxu0 0.0
        %2139 = vmatprep.subr.mxu0 0.0
        %2140 = vmatpush1.msra.mxu0 0.0
        %2141 = vmatprep.subr.mxu0 0.0
        %2142 = vmatpush1.msra.mxu0 0.0
        %2143 = vmatprep.subr.mxu0 0.0
        %2144 = vmatpush1.msra.mxu0 0.0
        %2145 = vmatprep.subr.mxu0 0.0
        %2146 = vmatpush1.msra.mxu0 0.0
        %2147 = vmatprep.subr.mxu0 0.0
        %2148 = vmatpush1.msra.mxu0 0.0
        %2149 = vmatprep.subr.mxu0 0.0
        %2150 = vmatpush1.msra.mxu0 0.0
        %2151 = vmatprep.subr.mxu0 0.0
        %2152 = vmatpush1.msra.mxu0 0.0
        %2153 = vmatprep.mubr.f32.mxu0 0.0
        %v2154 = vand.u32 %v1794, 4294901760
        %v2155 = vsub.f32 %v1794, %v2154
        %v2156 = vand.u32 %v2155, 4294901760
        %2157 = vmatmul.mubr.f32.gmra.mrb[0].mxu0 %v2156
        %v2158 = vpop.f32.mrb[0].mxu0
        %v2159 = vadd.f32 %v2077, %v2158
        %v2160 = vpop.f32.mrb[0].mxu0
        %v2161 = vadd.f32 %v2079, %v2160
        %2162 = vdwg.mxu0
        %v2163 = vand.u32 %v1777, 4294901760
        %v2164 = vsub.f32 %v1777, %v2163
        %v2165 = vand.u32 %v2164, 4294901760
        %2166 = vmatprep.subr.mxu0 %v2165
        %v2167 = vand.u32 %v1776, 4294901760
        %v2168 = vsub.f32 %v1776, %v2167
        %v2169 = vand.u32 %v2168, 4294901760
        %2170 = vmatpush1.msra.mxu0 %v2169
        %v2171 = vand.u32 %v1779, 4294901760
        %v2172 = vsub.f32 %v1779, %v2171
        %v2173 = vand.u32 %v2172, 4294901760
        %2174 = vmatprep.subr.mxu0 %v2173
        %v2175 = vand.u32 %v1778, 4294901760
        %v2176 = vsub.f32 %v1778, %v2175
        %v2177 = vand.u32 %v2176, 4294901760
        %2178 = vmatpush1.msra.mxu0 %v2177
        %v2179 = vand.u32 %v1781, 4294901760
        %v2180 = vsub.f32 %v1781, %v2179
        %v2181 = vand.u32 %v2180, 4294901760
        %2182 = vmatprep.subr.mxu0 %v2181
        %v2183 = vand.u32 %v1780, 4294901760
        %v2184 = vsub.f32 %v1780, %v2183
        %v2185 = vand.u32 %v2184, 4294901760
        %2186 = vmatpush1.msra.mxu0 %v2185
        %v2187 = vand.u32 %v1783, 4294901760
        %v2188 = vsub.f32 %v1783, %v2187
        %v2189 = vand.u32 %v2188, 4294901760
        %2190 = vmatprep.subr.mxu0 %v2189
        %v2191 = vand.u32 %v1782, 4294901760
        %v2192 = vsub.f32 %v1782, %v2191
        %v2193 = vand.u32 %v2192, 4294901760
        %2194 = vmatpush1.msra.mxu0 %v2193
        %2195 = vmatprep.subr.mxu0 0.0
        %2196 = vmatpush1.msra.mxu0 0.0
        %2197 = vmatprep.subr.mxu0 0.0
        %2198 = vmatpush1.msra.mxu0 0.0
        %2199 = vmatprep.subr.mxu0 0.0
        %2200 = vmatpush1.msra.mxu0 0.0
        %2201 = vmatprep.subr.mxu0 0.0
        %2202 = vmatpush1.msra.mxu0 0.0
        %2203 = vmatprep.subr.mxu0 0.0
        %2204 = vmatpush1.msra.mxu0 0.0
        %2205 = vmatprep.subr.mxu0 0.0
        %2206 = vmatpush1.msra.mxu0 0.0
        %2207 = vmatprep.subr.mxu0 0.0
        %2208 = vmatpush1.msra.mxu0 0.0
        %2209 = vmatprep.subr.mxu0 0.0
        %2210 = vmatpush1.msra.mxu0 0.0
        %2211 = vmatprep.subr.mxu0 0.0
        %2212 = vmatpush1.msra.mxu0 0.0
        %2213 = vmatprep.subr.mxu0 0.0
        %2214 = vmatpush1.msra.mxu0 0.0
        %2215 = vmatprep.subr.mxu0 0.0
        %2216 = vmatpush1.msra.mxu0 0.0
        %2217 = vmatprep.subr.mxu0 0.0
        %2218 = vmatpush1.msra.mxu0 0.0
        %2219 = vmatprep.subr.mxu0 0.0
        %2220 = vmatpush1.msra.mxu0 0.0
        %2221 = vmatprep.subr.mxu0 0.0
        %2222 = vmatpush1.msra.mxu0 0.0
        %2223 = vmatprep.subr.mxu0 0.0
        %2224 = vmatpush1.msra.mxu0 0.0
        %2225 = vmatprep.subr.mxu0 0.0
        %2226 = vmatpush1.msra.mxu0 0.0
        %2227 = vmatprep.subr.mxu0 0.0
        %2228 = vmatpush1.msra.mxu0 0.0
        %2229 = vmatprep.subr.mxu0 0.0
        %2230 = vmatpush1.msra.mxu0 0.0
        %2231 = vmatprep.subr.mxu0 0.0
        %2232 = vmatpush1.msra.mxu0 0.0
        %2233 = vmatprep.subr.mxu0 0.0
        %2234 = vmatpush1.msra.mxu0 0.0
        %2235 = vmatprep.subr.mxu0 0.0
        %2236 = vmatpush1.msra.mxu0 0.0
        %2237 = vmatprep.subr.mxu0 0.0
        %2238 = vmatpush1.msra.mxu0 0.0
        %2239 = vmatprep.subr.mxu0 0.0
        %2240 = vmatpush1.msra.mxu0 0.0
        %2241 = vmatprep.subr.mxu0 0.0
        %2242 = vmatpush1.msra.mxu0 0.0
        %2243 = vmatprep.subr.mxu0 0.0
        %2244 = vmatpush1.msra.mxu0 0.0
        %2245 = vmatprep.subr.mxu0 0.0
        %2246 = vmatpush1.msra.mxu0 0.0
        %2247 = vmatprep.subr.mxu0 0.0
        %2248 = vmatpush1.msra.mxu0 0.0
        %2249 = vmatprep.subr.mxu0 0.0
        %2250 = vmatpush1.msra.mxu0 0.0
        %2251 = vmatprep.mubr.f32.mxu0 0.0
        %v2252 = vand.u32 %v1794, 4294901760
        %2253 = vmatmul.mubr.f32.gmra.mrb[0].mxu0 %v2252
        %v2254 = vpop.f32.mrb[0].mxu0
        %v2255 = vadd.f32 %v2159, %v2254
        %v2256 = vpop.f32.mrb[0].mxu0
        %v2257 = vadd.f32 %v2161, %v2256
        %2258 = vdwg.mxu0
        %v2259 = vand.u32 %v1777, 4294901760
        %2260 = vmatprep.subr.mxu0 %v2259
        %v2261 = vand.u32 %v1776, 4294901760
        %2262 = vmatpush1.msra.mxu0 %v2261
        %v2263 = vand.u32 %v1779, 4294901760
        %2264 = vmatprep.subr.mxu0 %v2263
        %v2265 = vand.u32 %v1778, 4294901760
        %2266 = vmatpush1.msra.mxu0 %v2265
        %v2267 = vand.u32 %v1781, 4294901760
        %2268 = vmatprep.subr.mxu0 %v2267
        %v2269 = vand.u32 %v1780, 4294901760
        %2270 = vmatpush1.msra.mxu0 %v2269
        %v2271 = vand.u32 %v1783, 4294901760
        %2272 = vmatprep.subr.mxu0 %v2271
        %v2273 = vand.u32 %v1782, 4294901760
        %2274 = vmatpush1.msra.mxu0 %v2273
        %2275 = vmatprep.subr.mxu0 0.0
        %2276 = vmatpush1.msra.mxu0 0.0
        %2277 = vmatprep.subr.mxu0 0.0
        %2278 = vmatpush1.msra.mxu0 0.0
        %2279 = vmatprep.subr.mxu0 0.0
        %2280 = vmatpush1.msra.mxu0 0.0
        %2281 = vmatprep.subr.mxu0 0.0
        %2282 = vmatpush1.msra.mxu0 0.0
        %2283 = vmatprep.subr.mxu0 0.0
        %2284 = vmatpush1.msra.mxu0 0.0
        %2285 = vmatprep.subr.mxu0 0.0
        %2286 = vmatpush1.msra.mxu0 0.0
        %2287 = vmatprep.subr.mxu0 0.0
        %2288 = vmatpush1.msra.mxu0 0.0
        %2289 = vmatprep.subr.mxu0 0.0
        %2290 = vmatpush1.msra.mxu0 0.0
        %2291 = vmatprep.subr.mxu0 0.0
        %2292 = vmatpush1.msra.mxu0 0.0
        %2293 = vmatprep.subr.mxu0 0.0
        %2294 = vmatpush1.msra.mxu0 0.0
        %2295 = vmatprep.subr.mxu0 0.0
        %2296 = vmatpush1.msra.mxu0 0.0
        %2297 = vmatprep.subr.mxu0 0.0
        %2298 = vmatpush1.msra.mxu0 0.0
        %2299 = vmatprep.subr.mxu0 0.0
        %2300 = vmatpush1.msra.mxu0 0.0
        %2301 = vmatprep.subr.mxu0 0.0
        %2302 = vmatpush1.msra.mxu0 0.0
        %2303 = vmatprep.subr.mxu0 0.0
        %2304 = vmatpush1.msra.mxu0 0.0
        %2305 = vmatprep.subr.mxu0 0.0
        %2306 = vmatpush1.msra.mxu0 0.0
        %2307 = vmatprep.subr.mxu0 0.0
        %2308 = vmatpush1.msra.mxu0 0.0
        %2309 = vmatprep.subr.mxu0 0.0
        %2310 = vmatpush1.msra.mxu0 0.0
        %2311 = vmatprep.subr.mxu0 0.0
        %2312 = vmatpush1.msra.mxu0 0.0
        %2313 = vmatprep.subr.mxu0 0.0
        %2314 = vmatpush1.msra.mxu0 0.0
        %2315 = vmatprep.subr.mxu0 0.0
        %2316 = vmatpush1.msra.mxu0 0.0
        %2317 = vmatprep.subr.mxu0 0.0
        %2318 = vmatpush1.msra.mxu0 0.0
        %2319 = vmatprep.subr.mxu0 0.0
        %2320 = vmatpush1.msra.mxu0 0.0
        %2321 = vmatprep.subr.mxu0 0.0
        %2322 = vmatpush1.msra.mxu0 0.0
        %2323 = vmatprep.subr.mxu0 0.0
        %2324 = vmatpush1.msra.mxu0 0.0
        %2325 = vmatprep.subr.mxu0 0.0
        %2326 = vmatpush1.msra.mxu0 0.0
        %2327 = vmatprep.subr.mxu0 0.0
        %2328 = vmatpush1.msra.mxu0 0.0
        %2329 = vmatprep.subr.mxu0 0.0
        %2330 = vmatpush1.msra.mxu0 0.0
        %2331 = vmatprep.mubr.f32.mxu0 0.0
        %v2332 = vand.u32 %v1794, 4294901760
        %2333 = vmatmul.mubr.f32.gmra.mrb[0].mxu0 %v2332
        %v2334 = vpop.f32.mrb[0].mxu0
        %v2335 = vadd.f32 %v2255, %v2334
        %v2336 = vpop.f32.mrb[0].mxu0
        %v2337 = vadd.f32 %v2257, %v2336
        %2338 = vdwg.mxu0
        %v2341 = vcombine.low %v2335, %v2337
        %v2343 = vunpack.c.l.s4 1966171168
        %v2344 = vunpack.c.0.s8 %v2343
        %v2345 = vlaneseq
        %v2346 = vshrl.u32 %v2345, 7
        %v2347 = vsub.s32 %v2344, %v2346
        %v2348 = vrot.slane %v2341, %v2347
        %v2350 = vunpack.c.l.s4 1966171168
        %v2351 = vunpack.c.0.s8 %v2350
        %v2352 = vlaneseq
        %v2353 = vshrl.u32 %v2352, 7
        %v2354 = vsub.s32 %v2351, %v2353
        %v2355 = vrot.slane %v2348, %v2354
        %v2357 = vlaneseq
        %vm2358 = vcmp.ge.s32.totalorder %v2357, 0
        %vm2359 = vcmp.lt.s32.totalorder %v2357, 256
        %vm2360 = vmand %vm2358, %vm2359
        %2361 = vst.msk [vmem:[%s328] sm:$0x3] %vm2360, %v2355
        %s2362 = scalar_lea.vmem %s333, 4
        %v2363 = vld [vmem:[%s2362] sm:$0xf]
        %v2365 = vlaneseq
        %v2366 = vshrl.u32 %v2365, 7
        %v2367 = vsub.s32 0, %v2366
        %v2368 = vrot.slane %v2363, %v2367
        %v2369 = vlaneseq
        %v2370 = vshrl.u32 %v2369, 7
        %v2371 = vsub.s32 2, %v2370
        %v2372 = vrot.slane %v2363, %v2371
        %v2375 = vlaneseq
        %v2376 = vshrl.u32 %v2375, 7
        %v2377 = vsub.s32 0, %v2376
        %v2378 = vrot.slane %v2368, %v2377
        %v2379 = vlaneseq
        %v2380 = vshrl.u32 %v2379, 7
        %v2381 = vsub.s32 0, %v2380
        %v2382 = vrot.slane %v2372, %v2381
        %v2383 = vmul.f32 %v362, %v2378
        %v2384 = vmul.f32 %v362, %v2382
        %v2385 = vmul.f32 %v367, %v2378
        %v2386 = vmul.f32 %v367, %v2382
        %v2387 = vmul.f32 %v372, %v2378
        %v2388 = vmul.f32 %v372, %v2382
        %v2389 = vmul.f32 %v377, %v2378
        %v2390 = vmul.f32 %v377, %v2382
        %v2391 = vadd.f32 %v409, %v2383
        %v2392 = vadd.f32 %v409, %v2384
        %v2393 = vadd.f32 %v414, %v2385
        %v2394 = vadd.f32 %v414, %v2386
        %v2395 = vadd.f32 %v419, %v2387
        %v2396 = vadd.f32 %v419, %v2388
        %v2397 = vadd.f32 %v424, %v2389
        %v2398 = vadd.f32 %v424, %v2390
        %v2399 = vlaneseq
        %v2400 = vshrl.u32 %v2399, 7
        %v2401 = vsub.s32 1, %v2400
        %v2402 = vrot.slane %v2363, %v2401
        %v2403 = vlaneseq
        %v2404 = vshrl.u32 %v2403, 7
        %v2405 = vsub.s32 3, %v2404
        %v2406 = vrot.slane %v2363, %v2405
        %v2409 = vlaneseq
        %v2410 = vshrl.u32 %v2409, 7
        %v2411 = vsub.s32 1, %v2410
        %v2412 = vrot.slane %v2402, %v2411
        %v2413 = vlaneseq
        %v2414 = vshrl.u32 %v2413, 7
        %v2415 = vsub.s32 1, %v2414
        %v2416 = vrot.slane %v2406, %v2415
        %v2417 = vmul.f32 %v436, %v2412
        %v2418 = vmul.f32 %v436, %v2416
        %v2419 = vmul.f32 %v440, %v2412
        %v2420 = vmul.f32 %v440, %v2416
        %v2421 = vmul.f32 %v444, %v2412
        %v2422 = vmul.f32 %v444, %v2416
        %v2423 = vmul.f32 %v448, %v2412
        %v2424 = vmul.f32 %v448, %v2416
        %v2425 = vadd.f32 %v2391, %v2417
        %v2426 = vadd.f32 %v2392, %v2418
        %v2427 = vadd.f32 %v2393, %v2419
        %v2428 = vadd.f32 %v2394, %v2420
        %v2429 = vadd.f32 %v2395, %v2421
        %v2430 = vadd.f32 %v2396, %v2422
        %v2431 = vadd.f32 %v2397, %v2423
        %v2432 = vadd.f32 %v2398, %v2424
        %v2433 = vtanh.pop %v2425
        %v2434 = vtanh.pop %v2426
        %v2435 = vtanh.pop %v2427
        %v2436 = vtanh.pop %v2428
        %v2437 = vtanh.pop %v2429
        %v2438 = vtanh.pop %v2430
        %v2439 = vtanh.pop %v2431
        %v2440 = vtanh.pop %v2432
        %v2441 = vand.u32 %v2434, 4294901760
        %2442 = vmatprep.subr.mxu0 %v2441
        %v2443 = vand.u32 %v2433, 4294901760
        %2444 = vmatpush1.msra.mxu0 %v2443
        %v2445 = vand.u32 %v2436, 4294901760
        %2446 = vmatprep.subr.mxu0 %v2445
        %v2447 = vand.u32 %v2435, 4294901760
        %2448 = vmatpush1.msra.mxu0 %v2447
        %v2449 = vand.u32 %v2438, 4294901760
        %2450 = vmatprep.subr.mxu0 %v2449
        %v2451 = vand.u32 %v2437, 4294901760
        %2452 = vmatpush1.msra.mxu0 %v2451
        %v2453 = vand.u32 %v2440, 4294901760
        %2454 = vmatprep.subr.mxu0 %v2453
        %v2455 = vand.u32 %v2439, 4294901760
        %2456 = vmatpush1.msra.mxu0 %v2455
        %2457 = vmatprep.subr.mxu0 0.0
        %2458 = vmatpush1.msra.mxu0 0.0
        %2459 = vmatprep.subr.mxu0 0.0
        %2460 = vmatpush1.msra.mxu0 0.0
        %2461 = vmatprep.subr.mxu0 0.0
        %2462 = vmatpush1.msra.mxu0 0.0
        %2463 = vmatprep.subr.mxu0 0.0
        %2464 = vmatpush1.msra.mxu0 0.0
        %2465 = vmatprep.subr.mxu0 0.0
        %2466 = vmatpush1.msra.mxu0 0.0
        %2467 = vmatprep.subr.mxu0 0.0
        %2468 = vmatpush1.msra.mxu0 0.0
        %2469 = vmatprep.subr.mxu0 0.0
        %2470 = vmatpush1.msra.mxu0 0.0
        %2471 = vmatprep.subr.mxu0 0.0
        %2472 = vmatpush1.msra.mxu0 0.0
        %2473 = vmatprep.subr.mxu0 0.0
        %2474 = vmatpush1.msra.mxu0 0.0
        %2475 = vmatprep.subr.mxu0 0.0
        %2476 = vmatpush1.msra.mxu0 0.0
        %2477 = vmatprep.subr.mxu0 0.0
        %2478 = vmatpush1.msra.mxu0 0.0
        %2479 = vmatprep.subr.mxu0 0.0
        %2480 = vmatpush1.msra.mxu0 0.0
        %2481 = vmatprep.subr.mxu0 0.0
        %2482 = vmatpush1.msra.mxu0 0.0
        %2483 = vmatprep.subr.mxu0 0.0
        %2484 = vmatpush1.msra.mxu0 0.0
        %2485 = vmatprep.subr.mxu0 0.0
        %2486 = vmatpush1.msra.mxu0 0.0
        %2487 = vmatprep.subr.mxu0 0.0
        %2488 = vmatpush1.msra.mxu0 0.0
        %2489 = vmatprep.subr.mxu0 0.0
        %2490 = vmatpush1.msra.mxu0 0.0
        %2491 = vmatprep.subr.mxu0 0.0
        %2492 = vmatpush1.msra.mxu0 0.0
        %2493 = vmatprep.subr.mxu0 0.0
        %2494 = vmatpush1.msra.mxu0 0.0
        %2495 = vmatprep.subr.mxu0 0.0
        %2496 = vmatpush1.msra.mxu0 0.0
        %2497 = vmatprep.subr.mxu0 0.0
        %2498 = vmatpush1.msra.mxu0 0.0
        %2499 = vmatprep.subr.mxu0 0.0
        %2500 = vmatpush1.msra.mxu0 0.0
        %2501 = vmatprep.subr.mxu0 0.0
        %2502 = vmatpush1.msra.mxu0 0.0
        %2503 = vmatprep.subr.mxu0 0.0
        %2504 = vmatpush1.msra.mxu0 0.0
        %2505 = vmatprep.subr.mxu0 0.0
        %2506 = vmatpush1.msra.mxu0 0.0
        %2507 = vmatprep.subr.mxu0 0.0
        %2508 = vmatpush1.msra.mxu0 0.0
        %2509 = vmatprep.subr.mxu0 0.0
        %2510 = vmatpush1.msra.mxu0 0.0
        %2511 = vmatprep.subr.mxu0 0.0
        %2512 = vmatpush1.msra.mxu0 0.0
        %2513 = vmatprep.mubr.f32.mxu0 0.0
        %v2514 = vand.u32 %v504, 4294901760
        %v2515 = vsub.f32 %v504, %v2514
        %v2516 = vand.u32 %v2515, 4294901760
        %v2517 = vsub.f32 %v2515, %v2516
        %v2518 = vand.u32 %v2517, 4294901760
        %2519 = vmatmul.mubr.f32.gmra.mrb[0].mxu0 %v2518
        %v2520 = vpop.f32.mrb[0].mxu0
        %v2521 = vadd.f32 %v495, %v2520
        %v2522 = vpop.f32.mrb[0].mxu0
        %v2523 = vadd.f32 %v495, %v2522
        %2524 = vmatprep.mubr.f32.mxu0 0.0
        %v2525 = vand.u32 %v507, 4294901760
        %v2526 = vsub.f32 %v507, %v2525
        %v2527 = vand.u32 %v2526, 4294901760
        %v2528 = vsub.f32 %v2526, %v2527
        %v2529 = vand.u32 %v2528, 4294901760
        %2530 = vmatmul.mubr.f32.gmra.mrb[0].mxu0 %v2529
        %v2531 = vpop.f32.mrb[0].mxu0
        %v2532 = vadd.f32 %v500, %v2531
        %v2533 = vpop.f32.mrb[0].mxu0
        %v2534 = vadd.f32 %v500, %v2533
        %2535 = vdwg.mxu0
        %v2536 = vand.u32 %v2434, 4294901760
        %v2537 = vsub.f32 %v2434, %v2536
        %v2538 = vand.u32 %v2537, 4294901760
        %v2539 = vsub.f32 %v2537, %v2538
        %v2540 = vand.u32 %v2539, 4294901760
        %2541 = vmatprep.subr.mxu0 %v2540
        %v2542 = vand.u32 %v2433, 4294901760
        %v2543 = vsub.f32 %v2433, %v2542
        %v2544 = vand.u32 %v2543, 4294901760
        %v2545 = vsub.f32 %v2543, %v2544
        %v2546 = vand.u32 %v2545, 4294901760
        %2547 = vmatpush1.msra.mxu0 %v2546
        %v2548 = vand.u32 %v2436, 4294901760
        %v2549 = vsub.f32 %v2436, %v2548
        %v2550 = vand.u32 %v2549, 4294901760
        %v2551 = vsub.f32 %v2549, %v2550
        %v2552 = vand.u32 %v2551, 4294901760
        %2553 = vmatprep.subr.mxu0 %v2552
        %v2554 = vand.u32 %v2435, 4294901760
        %v2555 = vsub.f32 %v2435, %v2554
        %v2556 = vand.u32 %v2555, 4294901760
        %v2557 = vsub.f32 %v2555, %v2556
        %v2558 = vand.u32 %v2557, 4294901760
        %2559 = vmatpush1.msra.mxu0 %v2558
        %v2560 = vand.u32 %v2438, 4294901760
        %v2561 = vsub.f32 %v2438, %v2560
        %v2562 = vand.u32 %v2561, 4294901760
        %v2563 = vsub.f32 %v2561, %v2562
        %v2564 = vand.u32 %v2563, 4294901760
        %2565 = vmatprep.subr.mxu0 %v2564
        %v2566 = vand.u32 %v2437, 4294901760
        %v2567 = vsub.f32 %v2437, %v2566
        %v2568 = vand.u32 %v2567, 4294901760
        %v2569 = vsub.f32 %v2567, %v2568
        %v2570 = vand.u32 %v2569, 4294901760
        %2571 = vmatpush1.msra.mxu0 %v2570
        %v2572 = vand.u32 %v2440, 4294901760
        %v2573 = vsub.f32 %v2440, %v2572
        %v2574 = vand.u32 %v2573, 4294901760
        %v2575 = vsub.f32 %v2573, %v2574
        %v2576 = vand.u32 %v2575, 4294901760
        %2577 = vmatprep.subr.mxu0 %v2576
        %v2578 = vand.u32 %v2439, 4294901760
        %v2579 = vsub.f32 %v2439, %v2578
        %v2580 = vand.u32 %v2579, 4294901760
        %v2581 = vsub.f32 %v2579, %v2580
        %v2582 = vand.u32 %v2581, 4294901760
        %2583 = vmatpush1.msra.mxu0 %v2582
        %2584 = vmatprep.subr.mxu0 0.0
        %2585 = vmatpush1.msra.mxu0 0.0
        %2586 = vmatprep.subr.mxu0 0.0
        %2587 = vmatpush1.msra.mxu0 0.0
        %2588 = vmatprep.subr.mxu0 0.0
        %2589 = vmatpush1.msra.mxu0 0.0
        %2590 = vmatprep.subr.mxu0 0.0
        %2591 = vmatpush1.msra.mxu0 0.0
        %2592 = vmatprep.subr.mxu0 0.0
        %2593 = vmatpush1.msra.mxu0 0.0
        %2594 = vmatprep.subr.mxu0 0.0
        %2595 = vmatpush1.msra.mxu0 0.0
        %2596 = vmatprep.subr.mxu0 0.0
        %2597 = vmatpush1.msra.mxu0 0.0
        %2598 = vmatprep.subr.mxu0 0.0
        %2599 = vmatpush1.msra.mxu0 0.0
        %2600 = vmatprep.subr.mxu0 0.0
        %2601 = vmatpush1.msra.mxu0 0.0
        %2602 = vmatprep.subr.mxu0 0.0
        %2603 = vmatpush1.msra.mxu0 0.0
        %2604 = vmatprep.subr.mxu0 0.0
        %2605 = vmatpush1.msra.mxu0 0.0
        %2606 = vmatprep.subr.mxu0 0.0
        %2607 = vmatpush1.msra.mxu0 0.0
        %2608 = vmatprep.subr.mxu0 0.0
        %2609 = vmatpush1.msra.mxu0 0.0
        %2610 = vmatprep.subr.mxu0 0.0
        %2611 = vmatpush1.msra.mxu0 0.0
        %2612 = vmatprep.subr.mxu0 0.0
        %2613 = vmatpush1.msra.mxu0 0.0
        %2614 = vmatprep.subr.mxu0 0.0
        %2615 = vmatpush1.msra.mxu0 0.0
        %2616 = vmatprep.subr.mxu0 0.0
        %2617 = vmatpush1.msra.mxu0 0.0
        %2618 = vmatprep.subr.mxu0 0.0
        %2619 = vmatpush1.msra.mxu0 0.0
        %2620 = vmatprep.subr.mxu0 0.0
        %2621 = vmatpush1.msra.mxu0 0.0
        %2622 = vmatprep.subr.mxu0 0.0
        %2623 = vmatpush1.msra.mxu0 0.0
        %2624 = vmatprep.subr.mxu0 0.0
        %2625 = vmatpush1.msra.mxu0 0.0
        %2626 = vmatprep.subr.mxu0 0.0
        %2627 = vmatpush1.msra.mxu0 0.0
        %2628 = vmatprep.subr.mxu0 0.0
        %2629 = vmatpush1.msra.mxu0 0.0
        %2630 = vmatprep.subr.mxu0 0.0
        %2631 = vmatpush1.msra.mxu0 0.0
        %2632 = vmatprep.subr.mxu0 0.0
        %2633 = vmatpush1.msra.mxu0 0.0
        %2634 = vmatprep.subr.mxu0 0.0
        %2635 = vmatpush1.msra.mxu0 0.0
        %2636 = vmatprep.subr.mxu0 0.0
        %2637 = vmatpush1.msra.mxu0 0.0
        %2638 = vmatprep.subr.mxu0 0.0
        %2639 = vmatpush1.msra.mxu0 0.0
        %2640 = vmatprep.mubr.f32.mxu0 0.0
        %v2641 = vand.u32 %v504, 4294901760
        %2642 = vmatmul.mubr.f32.gmra.mrb[0].mxu0 %v2641
        %v2643 = vpop.f32.mrb[0].mxu0
        %v2644 = vadd.f32 %v2521, %v2643
        %v2645 = vpop.f32.mrb[0].mxu0
        %v2646 = vadd.f32 %v2523, %v2645
        %2647 = vmatprep.mubr.f32.mxu0 0.0
        %v2648 = vand.u32 %v507, 4294901760
        %2649 = vmatmul.mubr.f32.gmra.mrb[0].mxu0 %v2648
        %v2650 = vpop.f32.mrb[0].mxu0
        %v2651 = vadd.f32 %v2532, %v2650
        %v2652 = vpop.f32.mrb[0].mxu0
        %v2653 = vadd.f32 %v2534, %v2652
        %2654 = vdwg.mxu0
        %v2655 = vand.u32 %v2434, 4294901760
        %v2656 = vsub.f32 %v2434, %v2655
        %2657 = vmatprep.subr.mxu0 %v2656
        %v2658 = vand.u32 %v2433, 4294901760
        %v2659 = vsub.f32 %v2433, %v2658
        %2660 = vmatpush1.msra.mxu0 %v2659
        %v2661 = vand.u32 %v2436, 4294901760
        %v2662 = vsub.f32 %v2436, %v2661
        %2663 = vmatprep.subr.mxu0 %v2662
        %v2664 = vand.u32 %v2435, 4294901760
        %v2665 = vsub.f32 %v2435, %v2664
        %2666 = vmatpush1.msra.mxu0 %v2665
        %v2667 = vand.u32 %v2438, 4294901760
        %v2668 = vsub.f32 %v2438, %v2667
        %2669 = vmatprep.subr.mxu0 %v2668
        %v2670 = vand.u32 %v2437, 4294901760
        %v2671 = vsub.f32 %v2437, %v2670
        %2672 = vmatpush1.msra.mxu0 %v2671
        %v2673 = vand.u32 %v2440, 4294901760
        %v2674 = vsub.f32 %v2440, %v2673
        %2675 = vmatprep.subr.mxu0 %v2674
        %v2676 = vand.u32 %v2439, 4294901760
        %v2677 = vsub.f32 %v2439, %v2676
        %2678 = vmatpush1.msra.mxu0 %v2677
        %2679 = vmatprep.subr.mxu0 0.0
        %2680 = vmatpush1.msra.mxu0 0.0
        %2681 = vmatprep.subr.mxu0 0.0
        %2682 = vmatpush1.msra.mxu0 0.0
        %2683 = vmatprep.subr.mxu0 0.0
        %2684 = vmatpush1.msra.mxu0 0.0
        %2685 = vmatprep.subr.mxu0 0.0
        %2686 = vmatpush1.msra.mxu0 0.0
        %2687 = vmatprep.subr.mxu0 0.0
        %2688 = vmatpush1.msra.mxu0 0.0
        %2689 = vmatprep.subr.mxu0 0.0
        %2690 = vmatpush1.msra.mxu0 0.0
        %2691 = vmatprep.subr.mxu0 0.0
        %2692 = vmatpush1.msra.mxu0 0.0
        %2693 = vmatprep.subr.mxu0 0.0
        %2694 = vmatpush1.msra.mxu0 0.0
        %2695 = vmatprep.subr.mxu0 0.0
        %2696 = vmatpush1.msra.mxu0 0.0
        %2697 = vmatprep.subr.mxu0 0.0
        %2698 = vmatpush1.msra.mxu0 0.0
        %2699 = vmatprep.subr.mxu0 0.0
        %2700 = vmatpush1.msra.mxu0 0.0
        %2701 = vmatprep.subr.mxu0 0.0
        %2702 = vmatpush1.msra.mxu0 0.0
        %2703 = vmatprep.subr.mxu0 0.0
        %2704 = vmatpush1.msra.mxu0 0.0
        %2705 = vmatprep.subr.mxu0 0.0
        %2706 = vmatpush1.msra.mxu0 0.0
        %2707 = vmatprep.subr.mxu0 0.0
        %2708 = vmatpush1.msra.mxu0 0.0
        %2709 = vmatprep.subr.mxu0 0.0
        %2710 = vmatpush1.msra.mxu0 0.0
        %2711 = vmatprep.subr.mxu0 0.0
        %2712 = vmatpush1.msra.mxu0 0.0
        %2713 = vmatprep.subr.mxu0 0.0
        %2714 = vmatpush1.msra.mxu0 0.0
        %2715 = vmatprep.subr.mxu0 0.0
        %2716 = vmatpush1.msra.mxu0 0.0
        %2717 = vmatprep.subr.mxu0 0.0
        %2718 = vmatpush1.msra.mxu0 0.0
        %2719 = vmatprep.subr.mxu0 0.0
        %2720 = vmatpush1.msra.mxu0 0.0
        %2721 = vmatprep.subr.mxu0 0.0
        %2722 = vmatpush1.msra.mxu0 0.0
        %2723 = vmatprep.subr.mxu0 0.0
        %2724 = vmatpush1.msra.mxu0 0.0
        %2725 = vmatprep.subr.mxu0 0.0
        %2726 = vmatpush1.msra.mxu0 0.0
        %2727 = vmatprep.subr.mxu0 0.0
        %2728 = vmatpush1.msra.mxu0 0.0
        %2729 = vmatprep.subr.mxu0 0.0
        %2730 = vmatpush1.msra.mxu0 0.0
        %2731 = vmatprep.subr.mxu0 0.0
        %2732 = vmatpush1.msra.mxu0 0.0
        %2733 = vmatprep.subr.mxu0 0.0
        %2734 = vmatpush1.msra.mxu0 0.0
        %2735 = vmatprep.mubr.f32.mxu0 0.0
        %v2736 = vand.u32 %v504, 4294901760
        %v2737 = vsub.f32 %v504, %v2736
        %2738 = vmatmul.mubr.f32.gmra.mrb[0].mxu0 %v2737
        %v2739 = vpop.f32.mrb[0].mxu0
        %v2740 = vadd.f32 %v2644, %v2739
        %v2741 = vpop.f32.mrb[0].mxu0
        %v2742 = vadd.f32 %v2646, %v2741
        %2743 = vmatprep.mubr.f32.mxu0 0.0
        %v2744 = vand.u32 %v507, 4294901760
        %v2745 = vsub.f32 %v507, %v2744
        %2746 = vmatmul.mubr.f32.gmra.mrb[0].mxu0 %v2745
        %v2747 = vpop.f32.mrb[0].mxu0
        %v2748 = vadd.f32 %v2651, %v2747
        %v2749 = vpop.f32.mrb[0].mxu0
        %v2750 = vadd.f32 %v2653, %v2749
        %2751 = vdwg.mxu0
        %v2752 = vand.u32 %v2434, 4294901760
        %2753 = vmatprep.subr.mxu0 %v2752
        %v2754 = vand.u32 %v2433, 4294901760
        %2755 = vmatpush1.msra.mxu0 %v2754
        %v2756 = vand.u32 %v2436, 4294901760
        %2757 = vmatprep.subr.mxu0 %v2756
        %v2758 = vand.u32 %v2435, 4294901760
        %2759 = vmatpush1.msra.mxu0 %v2758
        %v2760 = vand.u32 %v2438, 4294901760
        %2761 = vmatprep.subr.mxu0 %v2760
        %v2762 = vand.u32 %v2437, 4294901760
        %2763 = vmatpush1.msra.mxu0 %v2762
        %v2764 = vand.u32 %v2440, 4294901760
        %2765 = vmatprep.subr.mxu0 %v2764
        %v2766 = vand.u32 %v2439, 4294901760
        %2767 = vmatpush1.msra.mxu0 %v2766
        %2768 = vmatprep.subr.mxu0 0.0
        %2769 = vmatpush1.msra.mxu0 0.0
        %2770 = vmatprep.subr.mxu0 0.0
        %2771 = vmatpush1.msra.mxu0 0.0
        %2772 = vmatprep.subr.mxu0 0.0
        %2773 = vmatpush1.msra.mxu0 0.0
        %2774 = vmatprep.subr.mxu0 0.0
        %2775 = vmatpush1.msra.mxu0 0.0
        %2776 = vmatprep.subr.mxu0 0.0
        %2777 = vmatpush1.msra.mxu0 0.0
        %2778 = vmatprep.subr.mxu0 0.0
        %2779 = vmatpush1.msra.mxu0 0.0
        %2780 = vmatprep.subr.mxu0 0.0
        %2781 = vmatpush1.msra.mxu0 0.0
        %2782 = vmatprep.subr.mxu0 0.0
        %2783 = vmatpush1.msra.mxu0 0.0
        %2784 = vmatprep.subr.mxu0 0.0
        %2785 = vmatpush1.msra.mxu0 0.0
        %2786 = vmatprep.subr.mxu0 0.0
        %2787 = vmatpush1.msra.mxu0 0.0
        %2788 = vmatprep.subr.mxu0 0.0
        %2789 = vmatpush1.msra.mxu0 0.0
        %2790 = vmatprep.subr.mxu0 0.0
        %2791 = vmatpush1.msra.mxu0 0.0
        %2792 = vmatprep.subr.mxu0 0.0
        %2793 = vmatpush1.msra.mxu0 0.0
        %2794 = vmatprep.subr.mxu0 0.0
        %2795 = vmatpush1.msra.mxu0 0.0
        %2796 = vmatprep.subr.mxu0 0.0
        %2797 = vmatpush1.msra.mxu0 0.0
        %2798 = vmatprep.subr.mxu0 0.0
        %2799 = vmatpush1.msra.mxu0 0.0
        %2800 = vmatprep.subr.mxu0 0.0
        %2801 = vmatpush1.msra.mxu0 0.0
        %2802 = vmatprep.subr.mxu0 0.0
        %2803 = vmatpush1.msra.mxu0 0.0
        %2804 = vmatprep.subr.mxu0 0.0
        %2805 = vmatpush1.msra.mxu0 0.0
        %2806 = vmatprep.subr.mxu0 0.0
        %2807 = vmatpush1.msra.mxu0 0.0
        %2808 = vmatprep.subr.mxu0 0.0
        %2809 = vmatpush1.msra.mxu0 0.0
        %2810 = vmatprep.subr.mxu0 0.0
        %2811 = vmatpush1.msra.mxu0 0.0
        %2812 = vmatprep.subr.mxu0 0.0
        %2813 = vmatpush1.msra.mxu0 0.0
        %2814 = vmatprep.subr.mxu0 0.0
        %2815 = vmatpush1.msra.mxu0 0.0
        %2816 = vmatprep.subr.mxu0 0.0
        %2817 = vmatpush1.msra.mxu0 0.0
        %2818 = vmatprep.subr.mxu0 0.0
        %2819 = vmatpush1.msra.mxu0 0.0
        %2820 = vmatprep.subr.mxu0 0.0
        %2821 = vmatpush1.msra.mxu0 0.0
        %2822 = vmatprep.subr.mxu0 0.0
        %2823 = vmatpush1.msra.mxu0 0.0
        %2824 = vmatprep.mubr.f32.mxu0 0.0
        %v2825 = vand.u32 %v504, 4294901760
        %v2826 = vsub.f32 %v504, %v2825
        %v2827 = vand.u32 %v2826, 4294901760
        %2828 = vmatmul.mubr.f32.gmra.mrb[0].mxu0 %v2827
        %v2829 = vpop.f32.mrb[0].mxu0
        %v2830 = vadd.f32 %v2740, %v2829
        %v2831 = vpop.f32.mrb[0].mxu0
        %v2832 = vadd.f32 %v2742, %v2831
        %2833 = vmatprep.mubr.f32.mxu0 0.0
        %v2834 = vand.u32 %v507, 4294901760
        %v2835 = vsub.f32 %v507, %v2834
        %v2836 = vand.u32 %v2835, 4294901760
        %2837 = vmatmul.mubr.f32.gmra.mrb[0].mxu0 %v2836
        %v2838 = vpop.f32.mrb[0].mxu0
        %v2839 = vadd.f32 %v2748, %v2838
        %v2840 = vpop.f32.mrb[0].mxu0
        %v2841 = vadd.f32 %v2750, %v2840
        %2842 = vdwg.mxu0
        %v2843 = vand.u32 %v2434, 4294901760
        %v2844 = vsub.f32 %v2434, %v2843
        %v2845 = vand.u32 %v2844, 4294901760
        %2846 = vmatprep.subr.mxu0 %v2845
        %v2847 = vand.u32 %v2433, 4294901760
        %v2848 = vsub.f32 %v2433, %v2847
        %v2849 = vand.u32 %v2848, 4294901760
        %2850 = vmatpush1.msra.mxu0 %v2849
        %v2851 = vand.u32 %v2436, 4294901760
        %v2852 = vsub.f32 %v2436, %v2851
        %v2853 = vand.u32 %v2852, 4294901760
        %2854 = vmatprep.subr.mxu0 %v2853
        %v2855 = vand.u32 %v2435, 4294901760
        %v2856 = vsub.f32 %v2435, %v2855
        %v2857 = vand.u32 %v2856, 4294901760
        %2858 = vmatpush1.msra.mxu0 %v2857
        %v2859 = vand.u32 %v2438, 4294901760
        %v2860 = vsub.f32 %v2438, %v2859
        %v2861 = vand.u32 %v2860, 4294901760
        %2862 = vmatprep.subr.mxu0 %v2861
        %v2863 = vand.u32 %v2437, 4294901760
        %v2864 = vsub.f32 %v2437, %v2863
        %v2865 = vand.u32 %v2864, 4294901760
        %2866 = vmatpush1.msra.mxu0 %v2865
        %v2867 = vand.u32 %v2440, 4294901760
        %v2868 = vsub.f32 %v2440, %v2867
        %v2869 = vand.u32 %v2868, 4294901760
        %2870 = vmatprep.subr.mxu0 %v2869
        %v2871 = vand.u32 %v2439, 4294901760
        %v2872 = vsub.f32 %v2439, %v2871
        %v2873 = vand.u32 %v2872, 4294901760
        %2874 = vmatpush1.msra.mxu0 %v2873
        %2875 = vmatprep.subr.mxu0 0.0
        %2876 = vmatpush1.msra.mxu0 0.0
        %2877 = vmatprep.subr.mxu0 0.0
        %2878 = vmatpush1.msra.mxu0 0.0
        %2879 = vmatprep.subr.mxu0 0.0
        %2880 = vmatpush1.msra.mxu0 0.0
        %2881 = vmatprep.subr.mxu0 0.0
        %2882 = vmatpush1.msra.mxu0 0.0
        %2883 = vmatprep.subr.mxu0 0.0
        %2884 = vmatpush1.msra.mxu0 0.0
        %2885 = vmatprep.subr.mxu0 0.0
        %2886 = vmatpush1.msra.mxu0 0.0
        %2887 = vmatprep.subr.mxu0 0.0
        %2888 = vmatpush1.msra.mxu0 0.0
        %2889 = vmatprep.subr.mxu0 0.0
        %2890 = vmatpush1.msra.mxu0 0.0
        %2891 = vmatprep.subr.mxu0 0.0
        %2892 = vmatpush1.msra.mxu0 0.0
        %2893 = vmatprep.subr.mxu0 0.0
        %2894 = vmatpush1.msra.mxu0 0.0
        %2895 = vmatprep.subr.mxu0 0.0
        %2896 = vmatpush1.msra.mxu0 0.0
        %2897 = vmatprep.subr.mxu0 0.0
        %2898 = vmatpush1.msra.mxu0 0.0
        %2899 = vmatprep.subr.mxu0 0.0
        %2900 = vmatpush1.msra.mxu0 0.0
        %2901 = vmatprep.subr.mxu0 0.0
        %2902 = vmatpush1.msra.mxu0 0.0
        %2903 = vmatprep.subr.mxu0 0.0
        %2904 = vmatpush1.msra.mxu0 0.0
        %2905 = vmatprep.subr.mxu0 0.0
        %2906 = vmatpush1.msra.mxu0 0.0
        %2907 = vmatprep.subr.mxu0 0.0
        %2908 = vmatpush1.msra.mxu0 0.0
        %2909 = vmatprep.subr.mxu0 0.0
        %2910 = vmatpush1.msra.mxu0 0.0
        %2911 = vmatprep.subr.mxu0 0.0
        %2912 = vmatpush1.msra.mxu0 0.0
        %2913 = vmatprep.subr.mxu0 0.0
        %2914 = vmatpush1.msra.mxu0 0.0
        %2915 = vmatprep.subr.mxu0 0.0
        %2916 = vmatpush1.msra.mxu0 0.0
        %2917 = vmatprep.subr.mxu0 0.0
        %2918 = vmatpush1.msra.mxu0 0.0
        %2919 = vmatprep.subr.mxu0 0.0
        %2920 = vmatpush1.msra.mxu0 0.0
        %2921 = vmatprep.subr.mxu0 0.0
        %2922 = vmatpush1.msra.mxu0 0.0
        %2923 = vmatprep.subr.mxu0 0.0
        %2924 = vmatpush1.msra.mxu0 0.0
        %2925 = vmatprep.subr.mxu0 0.0
        %2926 = vmatpush1.msra.mxu0 0.0
        %2927 = vmatprep.subr.mxu0 0.0
        %2928 = vmatpush1.msra.mxu0 0.0
        %2929 = vmatprep.subr.mxu0 0.0
        %2930 = vmatpush1.msra.mxu0 0.0
        %2931 = vmatprep.mubr.f32.mxu0 0.0
        %v2932 = vand.u32 %v504, 4294901760
        %2933 = vmatmul.mubr.f32.gmra.mrb[0].mxu0 %v2932
        %v2934 = vpop.f32.mrb[0].mxu0
        %v2935 = vadd.f32 %v2830, %v2934
        %v2936 = vpop.f32.mrb[0].mxu0
        %v2937 = vadd.f32 %v2832, %v2936
        %2938 = vmatprep.mubr.f32.mxu0 0.0
        %v2939 = vand.u32 %v507, 4294901760
        %2940 = vmatmul.mubr.f32.gmra.mrb[0].mxu0 %v2939
        %v2941 = vpop.f32.mrb[0].mxu0
        %v2942 = vadd.f32 %v2839, %v2941
        %v2943 = vpop.f32.mrb[0].mxu0
        %v2944 = vadd.f32 %v2841, %v2943
        %2945 = vdwg.mxu0
        %v2946 = vand.u32 %v2434, 4294901760
        %2947 = vmatprep.subr.mxu0 %v2946
        %v2948 = vand.u32 %v2433, 4294901760
        %2949 = vmatpush1.msra.mxu0 %v2948
        %v2950 = vand.u32 %v2436, 4294901760
        %2951 = vmatprep.subr.mxu0 %v2950
        %v2952 = vand.u32 %v2435, 4294901760
        %2953 = vmatpush1.msra.mxu0 %v2952
        %v2954 = vand.u32 %v2438, 4294901760
        %2955 = vmatprep.subr.mxu0 %v2954
        %v2956 = vand.u32 %v2437, 4294901760
        %2957 = vmatpush1.msra.mxu0 %v2956
        %v2958 = vand.u32 %v2440, 4294901760
        %2959 = vmatprep.subr.mxu0 %v2958
        %v2960 = vand.u32 %v2439, 4294901760
        %2961 = vmatpush1.msra.mxu0 %v2960
        %2962 = vmatprep.subr.mxu0 0.0
        %2963 = vmatpush1.msra.mxu0 0.0
        %2964 = vmatprep.subr.mxu0 0.0
        %2965 = vmatpush1.msra.mxu0 0.0
        %2966 = vmatprep.subr.mxu0 0.0
        %2967 = vmatpush1.msra.mxu0 0.0
        %2968 = vmatprep.subr.mxu0 0.0
        %2969 = vmatpush1.msra.mxu0 0.0
        %2970 = vmatprep.subr.mxu0 0.0
        %2971 = vmatpush1.msra.mxu0 0.0
        %2972 = vmatprep.subr.mxu0 0.0
        %2973 = vmatpush1.msra.mxu0 0.0
        %2974 = vmatprep.subr.mxu0 0.0
        %2975 = vmatpush1.msra.mxu0 0.0
        %2976 = vmatprep.subr.mxu0 0.0
        %2977 = vmatpush1.msra.mxu0 0.0
        %2978 = vmatprep.subr.mxu0 0.0
        %2979 = vmatpush1.msra.mxu0 0.0
        %2980 = vmatprep.subr.mxu0 0.0
        %2981 = vmatpush1.msra.mxu0 0.0
        %2982 = vmatprep.subr.mxu0 0.0
        %2983 = vmatpush1.msra.mxu0 0.0
        %2984 = vmatprep.subr.mxu0 0.0
        %2985 = vmatpush1.msra.mxu0 0.0
        %2986 = vmatprep.subr.mxu0 0.0
        %2987 = vmatpush1.msra.mxu0 0.0
        %2988 = vmatprep.subr.mxu0 0.0
        %2989 = vmatpush1.msra.mxu0 0.0
        %2990 = vmatprep.subr.mxu0 0.0
        %2991 = vmatpush1.msra.mxu0 0.0
        %2992 = vmatprep.subr.mxu0 0.0
        %2993 = vmatpush1.msra.mxu0 0.0
        %2994 = vmatprep.subr.mxu0 0.0
        %2995 = vmatpush1.msra.mxu0 0.0
        %2996 = vmatprep.subr.mxu0 0.0
        %2997 = vmatpush1.msra.mxu0 0.0
        %2998 = vmatprep.subr.mxu0 0.0
        %2999 = vmatpush1.msra.mxu0 0.0
        %3000 = vmatprep.subr.mxu0 0.0
        %3001 = vmatpush1.msra.mxu0 0.0
        %3002 = vmatprep.subr.mxu0 0.0
        %3003 = vmatpush1.msra.mxu0 0.0
        %3004 = vmatprep.subr.mxu0 0.0
        %3005 = vmatpush1.msra.mxu0 0.0
        %3006 = vmatprep.subr.mxu0 0.0
        %3007 = vmatpush1.msra.mxu0 0.0
        %3008 = vmatprep.subr.mxu0 0.0
        %3009 = vmatpush1.msra.mxu0 0.0
        %3010 = vmatprep.subr.mxu0 0.0
        %3011 = vmatpush1.msra.mxu0 0.0
        %3012 = vmatprep.subr.mxu0 0.0
        %3013 = vmatpush1.msra.mxu0 0.0
        %3014 = vmatprep.subr.mxu0 0.0
        %3015 = vmatpush1.msra.mxu0 0.0
        %3016 = vmatprep.subr.mxu0 0.0
        %3017 = vmatpush1.msra.mxu0 0.0
        %3018 = vmatprep.mubr.f32.mxu0 0.0
        %v3019 = vand.u32 %v504, 4294901760
        %3020 = vmatmul.mubr.f32.gmra.mrb[0].mxu0 %v3019
        %v3021 = vpop.f32.mrb[0].mxu0
        %v3022 = vadd.f32 %v2935, %v3021
        %v3023 = vpop.f32.mrb[0].mxu0
        %v3024 = vadd.f32 %v2937, %v3023
        %3025 = vmatprep.mubr.f32.mxu0 0.0
        %v3026 = vand.u32 %v507, 4294901760
        %3027 = vmatmul.mubr.f32.gmra.mrb[0].mxu0 %v3026
        %v3028 = vpop.f32.mrb[0].mxu0
        %v3029 = vadd.f32 %v2942, %v3028
        %v3030 = vpop.f32.mrb[0].mxu0
        %v3031 = vadd.f32 %v2944, %v3030
        %3032 = vdwg.mxu0
        %v3033 = vtanh.pop %v3022
        %v3034 = vtanh.pop %v3024
        %v3035 = vtanh.pop %v3029
        %v3036 = vtanh.pop %v3031
        %v3037 = vand.u32 %v3034, 4294901760
        %3038 = vmatprep.subr.mxu0 %v3037
        %v3039 = vand.u32 %v3033, 4294901760
        %3040 = vmatpush1.msra.mxu0 %v3039
        %v3041 = vand.u32 %v3036, 4294901760
        %3042 = vmatprep.subr.mxu0 %v3041
        %v3043 = vand.u32 %v3035, 4294901760
        %3044 = vmatpush1.msra.mxu0 %v3043
        %3045 = vmatprep.subr.mxu0 0.0
        %3046 = vmatpush1.msra.mxu0 0.0
        %3047 = vmatprep.subr.mxu0 0.0
        %3048 = vmatpush1.msra.mxu0 0.0
        %3049 = vmatprep.subr.mxu0 0.0
        %3050 = vmatpush1.msra.mxu0 0.0
        %3051 = vmatprep.subr.mxu0 0.0
        %3052 = vmatpush1.msra.mxu0 0.0
        %3053 = vmatprep.subr.mxu0 0.0
        %3054 = vmatpush1.msra.mxu0 0.0
        %3055 = vmatprep.subr.mxu0 0.0
        %3056 = vmatpush1.msra.mxu0 0.0
        %3057 = vmatprep.subr.mxu0 0.0
        %3058 = vmatpush1.msra.mxu0 0.0
        %3059 = vmatprep.subr.mxu0 0.0
        %3060 = vmatpush1.msra.mxu0 0.0
        %3061 = vmatprep.subr.mxu0 0.0
        %3062 = vmatpush1.msra.mxu0 0.0
        %3063 = vmatprep.subr.mxu0 0.0
        %3064 = vmatpush1.msra.mxu0 0.0
        %3065 = vmatprep.subr.mxu0 0.0
        %3066 = vmatpush1.msra.mxu0 0.0
        %3067 = vmatprep.subr.mxu0 0.0
        %3068 = vmatpush1.msra.mxu0 0.0
        %3069 = vmatprep.subr.mxu0 0.0
        %3070 = vmatpush1.msra.mxu0 0.0
        %3071 = vmatprep.subr.mxu0 0.0
        %3072 = vmatpush1.msra.mxu0 0.0
        %3073 = vmatprep.subr.mxu0 0.0
        %3074 = vmatpush1.msra.mxu0 0.0
        %3075 = vmatprep.subr.mxu0 0.0
        %3076 = vmatpush1.msra.mxu0 0.0
        %3077 = vmatprep.subr.mxu0 0.0
        %3078 = vmatpush1.msra.mxu0 0.0
        %3079 = vmatprep.subr.mxu0 0.0
        %3080 = vmatpush1.msra.mxu0 0.0
        %3081 = vmatprep.subr.mxu0 0.0
        %3082 = vmatpush1.msra.mxu0 0.0
        %3083 = vmatprep.subr.mxu0 0.0
        %3084 = vmatpush1.msra.mxu0 0.0
        %3085 = vmatprep.subr.mxu0 0.0
        %3086 = vmatpush1.msra.mxu0 0.0
        %3087 = vmatprep.subr.mxu0 0.0
        %3088 = vmatpush1.msra.mxu0 0.0
        %3089 = vmatprep.subr.mxu0 0.0
        %3090 = vmatpush1.msra.mxu0 0.0
        %3091 = vmatprep.subr.mxu0 0.0
        %3092 = vmatpush1.msra.mxu0 0.0
        %3093 = vmatprep.subr.mxu0 0.0
        %3094 = vmatpush1.msra.mxu0 0.0
        %3095 = vmatprep.subr.mxu0 0.0
        %3096 = vmatpush1.msra.mxu0 0.0
        %3097 = vmatprep.subr.mxu0 0.0
        %3098 = vmatpush1.msra.mxu0 0.0
        %3099 = vmatprep.subr.mxu0 0.0
        %3100 = vmatpush1.msra.mxu0 0.0
        %3101 = vmatprep.subr.mxu0 0.0
        %3102 = vmatpush1.msra.mxu0 0.0
        %3103 = vmatprep.subr.mxu0 0.0
        %3104 = vmatpush1.msra.mxu0 0.0
        %3105 = vmatprep.mubr.f32.mxu0 0.0
        %v3106 = vand.u32 %v1127, 4294901760
        %v3107 = vsub.f32 %v1127, %v3106
        %v3108 = vand.u32 %v3107, 4294901760
        %v3109 = vsub.f32 %v3107, %v3108
        %v3110 = vand.u32 %v3109, 4294901760
        %3111 = vmatmul.mubr.f32.gmra.mrb[0].mxu0 %v3110
        %v3112 = vpop.f32.mrb[0].mxu0
        %v3113 = vadd.f32 %v1108, %v3112
        %v3114 = vpop.f32.mrb[0].mxu0
        %v3115 = vadd.f32 %v1108, %v3114
        %3116 = vmatprep.mubr.f32.mxu0 0.0
        %v3117 = vand.u32 %v1130, 4294901760
        %v3118 = vsub.f32 %v1130, %v3117
        %v3119 = vand.u32 %v3118, 4294901760
        %v3120 = vsub.f32 %v3118, %v3119
        %v3121 = vand.u32 %v3120, 4294901760
        %3122 = vmatmul.mubr.f32.gmra.mrb[0].mxu0 %v3121
        %v3123 = vpop.f32.mrb[0].mxu0
        %v3124 = vadd.f32 %v1113, %v3123
        %v3125 = vpop.f32.mrb[0].mxu0
        %v3126 = vadd.f32 %v1113, %v3125
        %3127 = vmatprep.mubr.f32.mxu0 0.0
        %v3128 = vand.u32 %v1133, 4294901760
        %v3129 = vsub.f32 %v1133, %v3128
        %v3130 = vand.u32 %v3129, 4294901760
        %v3131 = vsub.f32 %v3129, %v3130
        %v3132 = vand.u32 %v3131, 4294901760
        %3133 = vmatmul.mubr.f32.gmra.mrb[0].mxu0 %v3132
        %v3134 = vpop.f32.mrb[0].mxu0
        %v3135 = vadd.f32 %v1118, %v3134
        %v3136 = vpop.f32.mrb[0].mxu0
        %v3137 = vadd.f32 %v1118, %v3136
        %3138 = vmatprep.mubr.f32.mxu0 0.0
        %v3139 = vand.u32 %v1136, 4294901760
        %v3140 = vsub.f32 %v1136, %v3139
        %v3141 = vand.u32 %v3140, 4294901760
        %v3142 = vsub.f32 %v3140, %v3141
        %v3143 = vand.u32 %v3142, 4294901760
        %3144 = vmatmul.mubr.f32.gmra.mrb[0].mxu0 %v3143
        %v3145 = vpop.f32.mrb[0].mxu0
        %v3146 = vadd.f32 %v1123, %v3145
        %v3147 = vpop.f32.mrb[0].mxu0
        %v3148 = vadd.f32 %v1123, %v3147
        %3149 = vdwg.mxu0
        %v3150 = vand.u32 %v3034, 4294901760
        %v3151 = vsub.f32 %v3034, %v3150
        %v3152 = vand.u32 %v3151, 4294901760
        %v3153 = vsub.f32 %v3151, %v3152
        %v3154 = vand.u32 %v3153, 4294901760
        %3155 = vmatprep.subr.mxu0 %v3154
        %v3156 = vand.u32 %v3033, 4294901760
        %v3157 = vsub.f32 %v3033, %v3156
        %v3158 = vand.u32 %v3157, 4294901760
        %v3159 = vsub.f32 %v3157, %v3158
        %v3160 = vand.u32 %v3159, 4294901760
        %3161 = vmatpush1.msra.mxu0 %v3160
        %v3162 = vand.u32 %v3036, 4294901760
        %v3163 = vsub.f32 %v3036, %v3162
        %v3164 = vand.u32 %v3163, 4294901760
        %v3165 = vsub.f32 %v3163, %v3164
        %v3166 = vand.u32 %v3165, 4294901760
        %3167 = vmatprep.subr.mxu0 %v3166
        %v3168 = vand.u32 %v3035, 4294901760
        %v3169 = vsub.f32 %v3035, %v3168
        %v3170 = vand.u32 %v3169, 4294901760
        %v3171 = vsub.f32 %v3169, %v3170
        %v3172 = vand.u32 %v3171, 4294901760
        %3173 = vmatpush1.msra.mxu0 %v3172
        %3174 = vmatprep.subr.mxu0 0.0
        %3175 = vmatpush1.msra.mxu0 0.0
        %3176 = vmatprep.subr.mxu0 0.0
        %3177 = vmatpush1.msra.mxu0 0.0
        %3178 = vmatprep.subr.mxu0 0.0
        %3179 = vmatpush1.msra.mxu0 0.0
        %3180 = vmatprep.subr.mxu0 0.0
        %3181 = vmatpush1.msra.mxu0 0.0
        %3182 = vmatprep.subr.mxu0 0.0
        %3183 = vmatpush1.msra.mxu0 0.0
        %3184 = vmatprep.subr.mxu0 0.0
        %3185 = vmatpush1.msra.mxu0 0.0
        %3186 = vmatprep.subr.mxu0 0.0
        %3187 = vmatpush1.msra.mxu0 0.0
        %3188 = vmatprep.subr.mxu0 0.0
        %3189 = vmatpush1.msra.mxu0 0.0
        %3190 = vmatprep.subr.mxu0 0.0
        %3191 = vmatpush1.msra.mxu0 0.0
        %3192 = vmatprep.subr.mxu0 0.0
        %3193 = vmatpush1.msra.mxu0 0.0
        %3194 = vmatprep.subr.mxu0 0.0
        %3195 = vmatpush1.msra.mxu0 0.0
        %3196 = vmatprep.subr.mxu0 0.0
        %3197 = vmatpush1.msra.mxu0 0.0
        %3198 = vmatprep.subr.mxu0 0.0
        %3199 = vmatpush1.msra.mxu0 0.0
        %3200 = vmatprep.subr.mxu0 0.0
        %3201 = vmatpush1.msra.mxu0 0.0
        %3202 = vmatprep.subr.mxu0 0.0
        %3203 = vmatpush1.msra.mxu0 0.0
        %3204 = vmatprep.subr.mxu0 0.0
        %3205 = vmatpush1.msra.mxu0 0.0
        %3206 = vmatprep.subr.mxu0 0.0
        %3207 = vmatpush1.msra.mxu0 0.0
        %3208 = vmatprep.subr.mxu0 0.0
        %3209 = vmatpush1.msra.mxu0 0.0
        %3210 = vmatprep.subr.mxu0 0.0
        %3211 = vmatpush1.msra.mxu0 0.0
        %3212 = vmatprep.subr.mxu0 0.0
        %3213 = vmatpush1.msra.mxu0 0.0
        %3214 = vmatprep.subr.mxu0 0.0
        %3215 = vmatpush1.msra.mxu0 0.0
        %3216 = vmatprep.subr.mxu0 0.0
        %3217 = vmatpush1.msra.mxu0 0.0
        %3218 = vmatprep.subr.mxu0 0.0
        %3219 = vmatpush1.msra.mxu0 0.0
        %3220 = vmatprep.subr.mxu0 0.0
        %3221 = vmatpush1.msra.mxu0 0.0
        %3222 = vmatprep.subr.mxu0 0.0
        %3223 = vmatpush1.msra.mxu0 0.0
        %3224 = vmatprep.subr.mxu0 0.0
        %3225 = vmatpush1.msra.mxu0 0.0
        %3226 = vmatprep.subr.mxu0 0.0
        %3227 = vmatpush1.msra.mxu0 0.0
        %3228 = vmatprep.subr.mxu0 0.0
        %3229 = vmatpush1.msra.mxu0 0.0
        %3230 = vmatprep.subr.mxu0 0.0
        %3231 = vmatpush1.msra.mxu0 0.0
        %3232 = vmatprep.subr.mxu0 0.0
        %3233 = vmatpush1.msra.mxu0 0.0
        %3234 = vmatprep.mubr.f32.mxu0 0.0
        %v3235 = vand.u32 %v1127, 4294901760
        %3236 = vmatmul.mubr.f32.gmra.mrb[0].mxu0 %v3235
        %v3237 = vpop.f32.mrb[0].mxu0
        %v3238 = vadd.f32 %v3113, %v3237
        %v3239 = vpop.f32.mrb[0].mxu0
        %v3240 = vadd.f32 %v3115, %v3239
        %3241 = vmatprep.mubr.f32.mxu0 0.0
        %v3242 = vand.u32 %v1130, 4294901760
        %3243 = vmatmul.mubr.f32.gmra.mrb[0].mxu0 %v3242
        %v3244 = vpop.f32.mrb[0].mxu0
        %v3245 = vadd.f32 %v3124, %v3244
        %v3246 = vpop.f32.mrb[0].mxu0
        %v3247 = vadd.f32 %v3126, %v3246
        %3248 = vmatprep.mubr.f32.mxu0 0.0
        %v3249 = vand.u32 %v1133, 4294901760
        %3250 = vmatmul.mubr.f32.gmra.mrb[0].mxu0 %v3249
        %v3251 = vpop.f32.mrb[0].mxu0
        %v3252 = vadd.f32 %v3135, %v3251
        %v3253 = vpop.f32.mrb[0].mxu0
        %v3254 = vadd.f32 %v3137, %v3253
        %3255 = vmatprep.mubr.f32.mxu0 0.0
        %v3256 = vand.u32 %v1136, 4294901760
        %3257 = vmatmul.mubr.f32.gmra.mrb[0].mxu0 %v3256
        %v3258 = vpop.f32.mrb[0].mxu0
        %v3259 = vadd.f32 %v3146, %v3258
        %v3260 = vpop.f32.mrb[0].mxu0
        %v3261 = vadd.f32 %v3148, %v3260
        %3262 = vdwg.mxu0
        %v3263 = vand.u32 %v3034, 4294901760
        %v3264 = vsub.f32 %v3034, %v3263
        %3265 = vmatprep.subr.mxu0 %v3264
        %v3266 = vand.u32 %v3033, 4294901760
        %v3267 = vsub.f32 %v3033, %v3266
        %3268 = vmatpush1.msra.mxu0 %v3267
        %v3269 = vand.u32 %v3036, 4294901760
        %v3270 = vsub.f32 %v3036, %v3269
        %3271 = vmatprep.subr.mxu0 %v3270
        %v3272 = vand.u32 %v3035, 4294901760
        %v3273 = vsub.f32 %v3035, %v3272
        %3274 = vmatpush1.msra.mxu0 %v3273
        %3275 = vmatprep.subr.mxu0 0.0
        %3276 = vmatpush1.msra.mxu0 0.0
        %3277 = vmatprep.subr.mxu0 0.0
        %3278 = vmatpush1.msra.mxu0 0.0
        %3279 = vmatprep.subr.mxu0 0.0
        %3280 = vmatpush1.msra.mxu0 0.0
        %3281 = vmatprep.subr.mxu0 0.0
        %3282 = vmatpush1.msra.mxu0 0.0
        %3283 = vmatprep.subr.mxu0 0.0
        %3284 = vmatpush1.msra.mxu0 0.0
        %3285 = vmatprep.subr.mxu0 0.0
        %3286 = vmatpush1.msra.mxu0 0.0
        %3287 = vmatprep.subr.mxu0 0.0
        %3288 = vmatpush1.msra.mxu0 0.0
        %3289 = vmatprep.subr.mxu0 0.0
        %3290 = vmatpush1.msra.mxu0 0.0
        %3291 = vmatprep.subr.mxu0 0.0
        %3292 = vmatpush1.msra.mxu0 0.0
        %3293 = vmatprep.subr.mxu0 0.0
        %3294 = vmatpush1.msra.mxu0 0.0
        %3295 = vmatprep.subr.mxu0 0.0
        %3296 = vmatpush1.msra.mxu0 0.0
        %3297 = vmatprep.subr.mxu0 0.0
        %3298 = vmatpush1.msra.mxu0 0.0
        %3299 = vmatprep.subr.mxu0 0.0
        %3300 = vmatpush1.msra.mxu0 0.0
        %3301 = vmatprep.subr.mxu0 0.0
        %3302 = vmatpush1.msra.mxu0 0.0
        %3303 = vmatprep.subr.mxu0 0.0
        %3304 = vmatpush1.msra.mxu0 0.0
        %3305 = vmatprep.subr.mxu0 0.0
        %3306 = vmatpush1.msra.mxu0 0.0
        %3307 = vmatprep.subr.mxu0 0.0
        %3308 = vmatpush1.msra.mxu0 0.0
        %3309 = vmatprep.subr.mxu0 0.0
        %3310 = vmatpush1.msra.mxu0 0.0
        %3311 = vmatprep.subr.mxu0 0.0
        %3312 = vmatpush1.msra.mxu0 0.0
        %3313 = vmatprep.subr.mxu0 0.0
        %3314 = vmatpush1.msra.mxu0 0.0
        %3315 = vmatprep.subr.mxu0 0.0
        %3316 = vmatpush1.msra.mxu0 0.0
        %3317 = vmatprep.subr.mxu0 0.0
        %3318 = vmatpush1.msra.mxu0 0.0
        %3319 = vmatprep.subr.mxu0 0.0
        %3320 = vmatpush1.msra.mxu0 0.0
        %3321 = vmatprep.subr.mxu0 0.0
        %3322 = vmatpush1.msra.mxu0 0.0
        %3323 = vmatprep.subr.mxu0 0.0
        %3324 = vmatpush1.msra.mxu0 0.0
        %3325 = vmatprep.subr.mxu0 0.0
        %3326 = vmatpush1.msra.mxu0 0.0
        %3327 = vmatprep.subr.mxu0 0.0
        %3328 = vmatpush1.msra.mxu0 0.0
        %3329 = vmatprep.subr.mxu0 0.0
        %3330 = vmatpush1.msra.mxu0 0.0
        %3331 = vmatprep.subr.mxu0 0.0
        %3332 = vmatpush1.msra.mxu0 0.0
        %3333 = vmatprep.subr.mxu0 0.0
        %3334 = vmatpush1.msra.mxu0 0.0
        %3335 = vmatprep.mubr.f32.mxu0 0.0
        %v3336 = vand.u32 %v1127, 4294901760
        %v3337 = vsub.f32 %v1127, %v3336
        %3338 = vmatmul.mubr.f32.gmra.mrb[0].mxu0 %v3337
        %v3339 = vpop.f32.mrb[0].mxu0
        %v3340 = vadd.f32 %v3238, %v3339
        %v3341 = vpop.f32.mrb[0].mxu0
        %v3342 = vadd.f32 %v3240, %v3341
        %3343 = vmatprep.mubr.f32.mxu0 0.0
        %v3344 = vand.u32 %v1130, 4294901760
        %v3345 = vsub.f32 %v1130, %v3344
        %3346 = vmatmul.mubr.f32.gmra.mrb[0].mxu0 %v3345
        %v3347 = vpop.f32.mrb[0].mxu0
        %v3348 = vadd.f32 %v3245, %v3347
        %v3349 = vpop.f32.mrb[0].mxu0
        %v3350 = vadd.f32 %v3247, %v3349
        %3351 = vmatprep.mubr.f32.mxu0 0.0
        %v3352 = vand.u32 %v1133, 4294901760
        %v3353 = vsub.f32 %v1133, %v3352
        %3354 = vmatmul.mubr.f32.gmra.mrb[0].mxu0 %v3353
        %v3355 = vpop.f32.mrb[0].mxu0
        %v3356 = vadd.f32 %v3252, %v3355
        %v3357 = vpop.f32.mrb[0].mxu0
        %v3358 = vadd.f32 %v3254, %v3357
        %3359 = vmatprep.mubr.f32.mxu0 0.0
        %v3360 = vand.u32 %v1136, 4294901760
        %v3361 = vsub.f32 %v1136, %v3360
        %3362 = vmatmul.mubr.f32.gmra.mrb[0].mxu0 %v3361
        %v3363 = vpop.f32.mrb[0].mxu0
        %v3364 = vadd.f32 %v3259, %v3363
        %v3365 = vpop.f32.mrb[0].mxu0
        %v3366 = vadd.f32 %v3261, %v3365
        %3367 = vdwg.mxu0
        %v3368 = vand.u32 %v3034, 4294901760
        %3369 = vmatprep.subr.mxu0 %v3368
        %v3370 = vand.u32 %v3033, 4294901760
        %3371 = vmatpush1.msra.mxu0 %v3370
        %v3372 = vand.u32 %v3036, 4294901760
        %3373 = vmatprep.subr.mxu0 %v3372
        %v3374 = vand.u32 %v3035, 4294901760
        %3375 = vmatpush1.msra.mxu0 %v3374
        %3376 = vmatprep.subr.mxu0 0.0
        %3377 = vmatpush1.msra.mxu0 0.0
        %3378 = vmatprep.subr.mxu0 0.0
        %3379 = vmatpush1.msra.mxu0 0.0
        %3380 = vmatprep.subr.mxu0 0.0
        %3381 = vmatpush1.msra.mxu0 0.0
        %3382 = vmatprep.subr.mxu0 0.0
        %3383 = vmatpush1.msra.mxu0 0.0
        %3384 = vmatprep.subr.mxu0 0.0
        %3385 = vmatpush1.msra.mxu0 0.0
        %3386 = vmatprep.subr.mxu0 0.0
        %3387 = vmatpush1.msra.mxu0 0.0
        %3388 = vmatprep.subr.mxu0 0.0
        %3389 = vmatpush1.msra.mxu0 0.0
        %3390 = vmatprep.subr.mxu0 0.0
        %3391 = vmatpush1.msra.mxu0 0.0
        %3392 = vmatprep.subr.mxu0 0.0
        %3393 = vmatpush1.msra.mxu0 0.0
        %3394 = vmatprep.subr.mxu0 0.0
        %3395 = vmatpush1.msra.mxu0 0.0
        %3396 = vmatprep.subr.mxu0 0.0
        %3397 = vmatpush1.msra.mxu0 0.0
        %3398 = vmatprep.subr.mxu0 0.0
        %3399 = vmatpush1.msra.mxu0 0.0
        %3400 = vmatprep.subr.mxu0 0.0
        %3401 = vmatpush1.msra.mxu0 0.0
        %3402 = vmatprep.subr.mxu0 0.0
        %3403 = vmatpush1.msra.mxu0 0.0
        %3404 = vmatprep.subr.mxu0 0.0
        %3405 = vmatpush1.msra.mxu0 0.0
        %3406 = vmatprep.subr.mxu0 0.0
        %3407 = vmatpush1.msra.mxu0 0.0
        %3408 = vmatprep.subr.mxu0 0.0
        %3409 = vmatpush1.msra.mxu0 0.0
        %3410 = vmatprep.subr.mxu0 0.0
        %3411 = vmatpush1.msra.mxu0 0.0
        %3412 = vmatprep.subr.mxu0 0.0
        %3413 = vmatpush1.msra.mxu0 0.0
        %3414 = vmatprep.subr.mxu0 0.0
        %3415 = vmatpush1.msra.mxu0 0.0
        %3416 = vmatprep.subr.mxu0 0.0
        %3417 = vmatpush1.msra.mxu0 0.0
        %3418 = vmatprep.subr.mxu0 0.0
        %3419 = vmatpush1.msra.mxu0 0.0
        %3420 = vmatprep.subr.mxu0 0.0
        %3421 = vmatpush1.msra.mxu0 0.0
        %3422 = vmatprep.subr.mxu0 0.0
        %3423 = vmatpush1.msra.mxu0 0.0
        %3424 = vmatprep.subr.mxu0 0.0
        %3425 = vmatpush1.msra.mxu0 0.0
        %3426 = vmatprep.subr.mxu0 0.0
        %3427 = vmatpush1.msra.mxu0 0.0
        %3428 = vmatprep.subr.mxu0 0.0
        %3429 = vmatpush1.msra.mxu0 0.0
        %3430 = vmatprep.subr.mxu0 0.0
        %3431 = vmatpush1.msra.mxu0 0.0
        %3432 = vmatprep.subr.mxu0 0.0
        %3433 = vmatpush1.msra.mxu0 0.0
        %3434 = vmatprep.subr.mxu0 0.0
        %3435 = vmatpush1.msra.mxu0 0.0
        %3436 = vmatprep.mubr.f32.mxu0 0.0
        %v3437 = vand.u32 %v1127, 4294901760
        %v3438 = vsub.f32 %v1127, %v3437
        %v3439 = vand.u32 %v3438, 4294901760
        %3440 = vmatmul.mubr.f32.gmra.mrb[0].mxu0 %v3439
        %v3441 = vpop.f32.mrb[0].mxu0
        %v3442 = vadd.f32 %v3340, %v3441
        %v3443 = vpop.f32.mrb[0].mxu0
        %v3444 = vadd.f32 %v3342, %v3443
        %3445 = vmatprep.mubr.f32.mxu0 0.0
        %v3446 = vand.u32 %v1130, 4294901760
        %v3447 = vsub.f32 %v1130, %v3446
        %v3448 = vand.u32 %v3447, 4294901760
        %3449 = vmatmul.mubr.f32.gmra.mrb[0].mxu0 %v3448
        %v3450 = vpop.f32.mrb[0].mxu0
        %v3451 = vadd.f32 %v3348, %v3450
        %v3452 = vpop.f32.mrb[0].mxu0
        %v3453 = vadd.f32 %v3350, %v3452
        %3454 = vmatprep.mubr.f32.mxu0 0.0
        %v3455 = vand.u32 %v1133, 4294901760
        %v3456 = vsub.f32 %v1133, %v3455
        %v3457 = vand.u32 %v3456, 4294901760
        %3458 = vmatmul.mubr.f32.gmra.mrb[0].mxu0 %v3457
        %v3459 = vpop.f32.mrb[0].mxu0
        %v3460 = vadd.f32 %v3356, %v3459
        %v3461 = vpop.f32.mrb[0].mxu0
        %v3462 = vadd.f32 %v3358, %v3461
        %3463 = vmatprep.mubr.f32.mxu0 0.0
        %v3464 = vand.u32 %v1136, 4294901760
        %v3465 = vsub.f32 %v1136, %v3464
        %v3466 = vand.u32 %v3465, 4294901760
        %3467 = vmatmul.mubr.f32.gmra.mrb[0].mxu0 %v3466
        %v3468 = vpop.f32.mrb[0].mxu0
        %v3469 = vadd.f32 %v3364, %v3468
        %v3470 = vpop.f32.mrb[0].mxu0
        %v3471 = vadd.f32 %v3366, %v3470
        %3472 = vdwg.mxu0
        %v3473 = vand.u32 %v3034, 4294901760
        %v3474 = vsub.f32 %v3034, %v3473
        %v3475 = vand.u32 %v3474, 4294901760
        %3476 = vmatprep.subr.mxu0 %v3475
        %v3477 = vand.u32 %v3033, 4294901760
        %v3478 = vsub.f32 %v3033, %v3477
        %v3479 = vand.u32 %v3478, 4294901760
        %3480 = vmatpush1.msra.mxu0 %v3479
        %v3481 = vand.u32 %v3036, 4294901760
        %v3482 = vsub.f32 %v3036, %v3481
        %v3483 = vand.u32 %v3482, 4294901760
        %3484 = vmatprep.subr.mxu0 %v3483
        %v3485 = vand.u32 %v3035, 4294901760
        %v3486 = vsub.f32 %v3035, %v3485
        %v3487 = vand.u32 %v3486, 4294901760
        %3488 = vmatpush1.msra.mxu0 %v3487
        %3489 = vmatprep.subr.mxu0 0.0
        %3490 = vmatpush1.msra.mxu0 0.0
        %3491 = vmatprep.subr.mxu0 0.0
        %3492 = vmatpush1.msra.mxu0 0.0
        %3493 = vmatprep.subr.mxu0 0.0
        %3494 = vmatpush1.msra.mxu0 0.0
        %3495 = vmatprep.subr.mxu0 0.0
        %3496 = vmatpush1.msra.mxu0 0.0
        %3497 = vmatprep.subr.mxu0 0.0
        %3498 = vmatpush1.msra.mxu0 0.0
        %3499 = vmatprep.subr.mxu0 0.0
        %3500 = vmatpush1.msra.mxu0 0.0
        %3501 = vmatprep.subr.mxu0 0.0
        %3502 = vmatpush1.msra.mxu0 0.0
        %3503 = vmatprep.subr.mxu0 0.0
        %3504 = vmatpush1.msra.mxu0 0.0
        %3505 = vmatprep.subr.mxu0 0.0
        %3506 = vmatpush1.msra.mxu0 0.0
        %3507 = vmatprep.subr.mxu0 0.0
        %3508 = vmatpush1.msra.mxu0 0.0
        %3509 = vmatprep.subr.mxu0 0.0
        %3510 = vmatpush1.msra.mxu0 0.0
        %3511 = vmatprep.subr.mxu0 0.0
        %3512 = vmatpush1.msra.mxu0 0.0
        %3513 = vmatprep.subr.mxu0 0.0
        %3514 = vmatpush1.msra.mxu0 0.0
        %3515 = vmatprep.subr.mxu0 0.0
        %3516 = vmatpush1.msra.mxu0 0.0
        %3517 = vmatprep.subr.mxu0 0.0
        %3518 = vmatpush1.msra.mxu0 0.0
        %3519 = vmatprep.subr.mxu0 0.0
        %3520 = vmatpush1.msra.mxu0 0.0
        %3521 = vmatprep.subr.mxu0 0.0
        %3522 = vmatpush1.msra.mxu0 0.0
        %3523 = vmatprep.subr.mxu0 0.0
        %3524 = vmatpush1.msra.mxu0 0.0
        %3525 = vmatprep.subr.mxu0 0.0
        %3526 = vmatpush1.msra.mxu0 0.0
        %3527 = vmatprep.subr.mxu0 0.0
        %3528 = vmatpush1.msra.mxu0 0.0
        %3529 = vmatprep.subr.mxu0 0.0
        %3530 = vmatpush1.msra.mxu0 0.0
        %3531 = vmatprep.subr.mxu0 0.0
        %3532 = vmatpush1.msra.mxu0 0.0
        %3533 = vmatprep.subr.mxu0 0.0
        %3534 = vmatpush1.msra.mxu0 0.0
        %3535 = vmatprep.subr.mxu0 0.0
        %3536 = vmatpush1.msra.mxu0 0.0
        %3537 = vmatprep.subr.mxu0 0.0
        %3538 = vmatpush1.msra.mxu0 0.0
        %3539 = vmatprep.subr.mxu0 0.0
        %3540 = vmatpush1.msra.mxu0 0.0
        %3541 = vmatprep.subr.mxu0 0.0
        %3542 = vmatpush1.msra.mxu0 0.0
        %3543 = vmatprep.subr.mxu0 0.0
        %3544 = vmatpush1.msra.mxu0 0.0
        %3545 = vmatprep.subr.mxu0 0.0
        %3546 = vmatpush1.msra.mxu0 0.0
        %3547 = vmatprep.subr.mxu0 0.0
        %3548 = vmatpush1.msra.mxu0 0.0
        %3549 = vmatprep.mubr.f32.mxu0 0.0
        %v3550 = vand.u32 %v1127, 4294901760
        %3551 = vmatmul.mubr.f32.gmra.mrb[0].mxu0 %v3550
        %v3552 = vpop.f32.mrb[0].mxu0
        %v3553 = vadd.f32 %v3442, %v3552
        %v3554 = vpop.f32.mrb[0].mxu0
        %v3555 = vadd.f32 %v3444, %v3554
        %3556 = vmatprep.mubr.f32.mxu0 0.0
        %v3557 = vand.u32 %v1130, 4294901760
        %3558 = vmatmul.mubr.f32.gmra.mrb[0].mxu0 %v3557
        %v3559 = vpop.f32.mrb[0].mxu0
        %v3560 = vadd.f32 %v3451, %v3559
        %v3561 = vpop.f32.mrb[0].mxu0
        %v3562 = vadd.f32 %v3453, %v3561
        %3563 = vmatprep.mubr.f32.mxu0 0.0
        %v3564 = vand.u32 %v1133, 4294901760
        %3565 = vmatmul.mubr.f32.gmra.mrb[0].mxu0 %v3564
        %v3566 = vpop.f32.mrb[0].mxu0
        %v3567 = vadd.f32 %v3460, %v3566
        %v3568 = vpop.f32.mrb[0].mxu0
        %v3569 = vadd.f32 %v3462, %v3568
        %3570 = vmatprep.mubr.f32.mxu0 0.0
        %v3571 = vand.u32 %v1136, 4294901760
        %3572 = vmatmul.mubr.f32.gmra.mrb[0].mxu0 %v3571
        %v3573 = vpop.f32.mrb[0].mxu0
        %v3574 = vadd.f32 %v3469, %v3573
        %v3575 = vpop.f32.mrb[0].mxu0
        %v3576 = vadd.f32 %v3471, %v3575
        %3577 = vdwg.mxu0
        %v3578 = vand.u32 %v3034, 4294901760
        %3579 = vmatprep.subr.mxu0 %v3578
        %v3580 = vand.u32 %v3033, 4294901760
        %3581 = vmatpush1.msra.mxu0 %v3580
        %v3582 = vand.u32 %v3036, 4294901760
        %3583 = vmatprep.subr.mxu0 %v3582
        %v3584 = vand.u32 %v3035, 4294901760
        %3585 = vmatpush1.msra.mxu0 %v3584
        %3586 = vmatprep.subr.mxu0 0.0
        %3587 = vmatpush1.msra.mxu0 0.0
        %3588 = vmatprep.subr.mxu0 0.0
        %3589 = vmatpush1.msra.mxu0 0.0
        %3590 = vmatprep.subr.mxu0 0.0
        %3591 = vmatpush1.msra.mxu0 0.0
        %3592 = vmatprep.subr.mxu0 0.0
        %3593 = vmatpush1.msra.mxu0 0.0
        %3594 = vmatprep.subr.mxu0 0.0
        %3595 = vmatpush1.msra.mxu0 0.0
        %3596 = vmatprep.subr.mxu0 0.0
        %3597 = vmatpush1.msra.mxu0 0.0
        %3598 = vmatprep.subr.mxu0 0.0
        %3599 = vmatpush1.msra.mxu0 0.0
        %3600 = vmatprep.subr.mxu0 0.0
        %3601 = vmatpush1.msra.mxu0 0.0
        %3602 = vmatprep.subr.mxu0 0.0
        %3603 = vmatpush1.msra.mxu0 0.0
        %3604 = vmatprep.subr.mxu0 0.0
        %3605 = vmatpush1.msra.mxu0 0.0
        %3606 = vmatprep.subr.mxu0 0.0
        %3607 = vmatpush1.msra.mxu0 0.0
        %3608 = vmatprep.subr.mxu0 0.0
        %3609 = vmatpush1.msra.mxu0 0.0
        %3610 = vmatprep.subr.mxu0 0.0
        %3611 = vmatpush1.msra.mxu0 0.0
        %3612 = vmatprep.subr.mxu0 0.0
        %3613 = vmatpush1.msra.mxu0 0.0
        %3614 = vmatprep.subr.mxu0 0.0
        %3615 = vmatpush1.msra.mxu0 0.0
        %3616 = vmatprep.subr.mxu0 0.0
        %3617 = vmatpush1.msra.mxu0 0.0
        %3618 = vmatprep.subr.mxu0 0.0
        %3619 = vmatpush1.msra.mxu0 0.0
        %3620 = vmatprep.subr.mxu0 0.0
        %3621 = vmatpush1.msra.mxu0 0.0
        %3622 = vmatprep.subr.mxu0 0.0
        %3623 = vmatpush1.msra.mxu0 0.0
        %3624 = vmatprep.subr.mxu0 0.0
        %3625 = vmatpush1.msra.mxu0 0.0
        %3626 = vmatprep.subr.mxu0 0.0
        %3627 = vmatpush1.msra.mxu0 0.0
        %3628 = vmatprep.subr.mxu0 0.0
        %3629 = vmatpush1.msra.mxu0 0.0
        %3630 = vmatprep.subr.mxu0 0.0
        %3631 = vmatpush1.msra.mxu0 0.0
        %3632 = vmatprep.subr.mxu0 0.0
        %3633 = vmatpush1.msra.mxu0 0.0
        %3634 = vmatprep.subr.mxu0 0.0
        %3635 = vmatpush1.msra.mxu0 0.0
        %3636 = vmatprep.subr.mxu0 0.0
        %3637 = vmatpush1.msra.mxu0 0.0
        %3638 = vmatprep.subr.mxu0 0.0
        %3639 = vmatpush1.msra.mxu0 0.0
        %3640 = vmatprep.subr.mxu0 0.0
        %3641 = vmatpush1.msra.mxu0 0.0
        %3642 = vmatprep.subr.mxu0 0.0
        %3643 = vmatpush1.msra.mxu0 0.0
        %3644 = vmatprep.subr.mxu0 0.0
        %3645 = vmatpush1.msra.mxu0 0.0
        %3646 = vmatprep.mubr.f32.mxu0 0.0
        %v3647 = vand.u32 %v1127, 4294901760
        %3648 = vmatmul.mubr.f32.gmra.mrb[0].mxu0 %v3647
        %v3649 = vpop.f32.mrb[0].mxu0
        %v3650 = vadd.f32 %v3553, %v3649
        %v3651 = vpop.f32.mrb[0].mxu0
        %v3652 = vadd.f32 %v3555, %v3651
        %3653 = vmatprep.mubr.f32.mxu0 0.0
        %v3654 = vand.u32 %v1130, 4294901760
        %3655 = vmatmul.mubr.f32.gmra.mrb[0].mxu0 %v3654
        %v3656 = vpop.f32.mrb[0].mxu0
        %v3657 = vadd.f32 %v3560, %v3656
        %v3658 = vpop.f32.mrb[0].mxu0
        %v3659 = vadd.f32 %v3562, %v3658
        %3660 = vmatprep.mubr.f32.mxu0 0.0
        %v3661 = vand.u32 %v1133, 4294901760
        %3662 = vmatmul.mubr.f32.gmra.mrb[0].mxu0 %v3661
        %v3663 = vpop.f32.mrb[0].mxu0
        %v3664 = vadd.f32 %v3567, %v3663
        %v3665 = vpop.f32.mrb[0].mxu0
        %v3666 = vadd.f32 %v3569, %v3665
        %3667 = vmatprep.mubr.f32.mxu0 0.0
        %v3668 = vand.u32 %v1136, 4294901760
        %3669 = vmatmul.mubr.f32.gmra.mrb[0].mxu0 %v3668
        %v3670 = vpop.f32.mrb[0].mxu0
        %v3671 = vadd.f32 %v3574, %v3670
        %v3672 = vpop.f32.mrb[0].mxu0
        %v3673 = vadd.f32 %v3576, %v3672
        %3674 = vdwg.mxu0
        %v3675 = vtanh.pop %v3650
        %v3676 = vtanh.pop %v3652
        %v3677 = vtanh.pop %v3657
        %v3678 = vtanh.pop %v3659
        %v3679 = vtanh.pop %v3664
        %v3680 = vtanh.pop %v3666
        %v3681 = vtanh.pop %v3671
        %v3682 = vtanh.pop %v3673
        %v3683 = vand.u32 %v3676, 4294901760
        %3684 = vmatprep.subr.mxu0 %v3683
        %v3685 = vand.u32 %v3675, 4294901760
        %3686 = vmatpush1.msra.mxu0 %v3685
        %v3687 = vand.u32 %v3678, 4294901760
        %3688 = vmatprep.subr.mxu0 %v3687
        %v3689 = vand.u32 %v3677, 4294901760
        %3690 = vmatpush1.msra.mxu0 %v3689
        %v3691 = vand.u32 %v3680, 4294901760
        %3692 = vmatprep.subr.mxu0 %v3691
        %v3693 = vand.u32 %v3679, 4294901760
        %3694 = vmatpush1.msra.mxu0 %v3693
        %v3695 = vand.u32 %v3682, 4294901760
        %3696 = vmatprep.subr.mxu0 %v3695
        %v3697 = vand.u32 %v3681, 4294901760
        %3698 = vmatpush1.msra.mxu0 %v3697
        %3699 = vmatprep.subr.mxu0 0.0
        %3700 = vmatpush1.msra.mxu0 0.0
        %3701 = vmatprep.subr.mxu0 0.0
        %3702 = vmatpush1.msra.mxu0 0.0
        %3703 = vmatprep.subr.mxu0 0.0
        %3704 = vmatpush1.msra.mxu0 0.0
        %3705 = vmatprep.subr.mxu0 0.0
        %3706 = vmatpush1.msra.mxu0 0.0
        %3707 = vmatprep.subr.mxu0 0.0
        %3708 = vmatpush1.msra.mxu0 0.0
        %3709 = vmatprep.subr.mxu0 0.0
        %3710 = vmatpush1.msra.mxu0 0.0
        %3711 = vmatprep.subr.mxu0 0.0
        %3712 = vmatpush1.msra.mxu0 0.0
        %3713 = vmatprep.subr.mxu0 0.0
        %3714 = vmatpush1.msra.mxu0 0.0
        %3715 = vmatprep.subr.mxu0 0.0
        %3716 = vmatpush1.msra.mxu0 0.0
        %3717 = vmatprep.subr.mxu0 0.0
        %3718 = vmatpush1.msra.mxu0 0.0
        %3719 = vmatprep.subr.mxu0 0.0
        %3720 = vmatpush1.msra.mxu0 0.0
        %3721 = vmatprep.subr.mxu0 0.0
        %3722 = vmatpush1.msra.mxu0 0.0
        %3723 = vmatprep.subr.mxu0 0.0
        %3724 = vmatpush1.msra.mxu0 0.0
        %3725 = vmatprep.subr.mxu0 0.0
        %3726 = vmatpush1.msra.mxu0 0.0
        %3727 = vmatprep.subr.mxu0 0.0
        %3728 = vmatpush1.msra.mxu0 0.0
        %3729 = vmatprep.subr.mxu0 0.0
        %3730 = vmatpush1.msra.mxu0 0.0
        %3731 = vmatprep.subr.mxu0 0.0
        %3732 = vmatpush1.msra.mxu0 0.0
        %3733 = vmatprep.subr.mxu0 0.0
        %3734 = vmatpush1.msra.mxu0 0.0
        %3735 = vmatprep.subr.mxu0 0.0
        %3736 = vmatpush1.msra.mxu0 0.0
        %3737 = vmatprep.subr.mxu0 0.0
        %3738 = vmatpush1.msra.mxu0 0.0
        %3739 = vmatprep.subr.mxu0 0.0
        %3740 = vmatpush1.msra.mxu0 0.0
        %3741 = vmatprep.subr.mxu0 0.0
        %3742 = vmatpush1.msra.mxu0 0.0
        %3743 = vmatprep.subr.mxu0 0.0
        %3744 = vmatpush1.msra.mxu0 0.0
        %3745 = vmatprep.subr.mxu0 0.0
        %3746 = vmatpush1.msra.mxu0 0.0
        %3747 = vmatprep.subr.mxu0 0.0
        %3748 = vmatpush1.msra.mxu0 0.0
        %3749 = vmatprep.subr.mxu0 0.0
        %3750 = vmatpush1.msra.mxu0 0.0
        %3751 = vmatprep.subr.mxu0 0.0
        %3752 = vmatpush1.msra.mxu0 0.0
        %3753 = vmatprep.subr.mxu0 0.0
        %3754 = vmatpush1.msra.mxu0 0.0
        %3755 = vmatprep.mubr.f32.mxu0 0.0
        %v3756 = vand.u32 %v1794, 4294901760
        %v3757 = vsub.f32 %v1794, %v3756
        %v3758 = vand.u32 %v3757, 4294901760
        %v3759 = vsub.f32 %v3757, %v3758
        %v3760 = vand.u32 %v3759, 4294901760
        %3761 = vmatmul.mubr.f32.gmra.mrb[0].mxu0 %v3760
        %v3762 = vpop.f32.mrb[0].mxu0
        %v3763 = vadd.f32 %v1792, %v3762
        %v3764 = vpop.f32.mrb[0].mxu0
        %v3765 = vadd.f32 %v1792, %v3764
        %3766 = vdwg.mxu0
        %v3767 = vand.u32 %v3676, 4294901760
        %v3768 = vsub.f32 %v3676, %v3767
        %v3769 = vand.u32 %v3768, 4294901760
        %v3770 = vsub.f32 %v3768, %v3769
        %v3771 = vand.u32 %v3770, 4294901760
        %3772 = vmatprep.subr.mxu0 %v3771
        %v3773 = vand.u32 %v3675, 4294901760
        %v3774 = vsub.f32 %v3675, %v3773
        %v3775 = vand.u32 %v3774, 4294901760
        %v3776 = vsub.f32 %v3774, %v3775
        %v3777 = vand.u32 %v3776, 4294901760
        %3778 = vmatpush1.msra.mxu0 %v3777
        %v3779 = vand.u32 %v3678, 4294901760
        %v3780 = vsub.f32 %v3678, %v3779
        %v3781 = vand.u32 %v3780, 4294901760
        %v3782 = vsub.f32 %v3780, %v3781
        %v3783 = vand.u32 %v3782, 4294901760
        %3784 = vmatprep.subr.mxu0 %v3783
        %v3785 = vand.u32 %v3677, 4294901760
        %v3786 = vsub.f32 %v3677, %v3785
        %v3787 = vand.u32 %v3786, 4294901760
        %v3788 = vsub.f32 %v3786, %v3787
        %v3789 = vand.u32 %v3788, 4294901760
        %3790 = vmatpush1.msra.mxu0 %v3789
        %v3791 = vand.u32 %v3680, 4294901760
        %v3792 = vsub.f32 %v3680, %v3791
        %v3793 = vand.u32 %v3792, 4294901760
        %v3794 = vsub.f32 %v3792, %v3793
        %v3795 = vand.u32 %v3794, 4294901760
        %3796 = vmatprep.subr.mxu0 %v3795
        %v3797 = vand.u32 %v3679, 4294901760
        %v3798 = vsub.f32 %v3679, %v3797
        %v3799 = vand.u32 %v3798, 4294901760
        %v3800 = vsub.f32 %v3798, %v3799
        %v3801 = vand.u32 %v3800, 4294901760
        %3802 = vmatpush1.msra.mxu0 %v3801
        %v3803 = vand.u32 %v3682, 4294901760
        %v3804 = vsub.f32 %v3682, %v3803
        %v3805 = vand.u32 %v3804, 4294901760
        %v3806 = vsub.f32 %v3804, %v3805
        %v3807 = vand.u32 %v3806, 4294901760
        %3808 = vmatprep.subr.mxu0 %v3807
        %v3809 = vand.u32 %v3681, 4294901760
        %v3810 = vsub.f32 %v3681, %v3809
        %v3811 = vand.u32 %v3810, 4294901760
        %v3812 = vsub.f32 %v3810, %v3811
        %v3813 = vand.u32 %v3812, 4294901760
        %3814 = vmatpush1.msra.mxu0 %v3813
        %3815 = vmatprep.subr.mxu0 0.0
        %3816 = vmatpush1.msra.mxu0 0.0
        %3817 = vmatprep.subr.mxu0 0.0
        %3818 = vmatpush1.msra.mxu0 0.0
        %3819 = vmatprep.subr.mxu0 0.0
        %3820 = vmatpush1.msra.mxu0 0.0
        %3821 = vmatprep.subr.mxu0 0.0
        %3822 = vmatpush1.msra.mxu0 0.0
        %3823 = vmatprep.subr.mxu0 0.0
        %3824 = vmatpush1.msra.mxu0 0.0
        %3825 = vmatprep.subr.mxu0 0.0
        %3826 = vmatpush1.msra.mxu0 0.0
        %3827 = vmatprep.subr.mxu0 0.0
        %3828 = vmatpush1.msra.mxu0 0.0
        %3829 = vmatprep.subr.mxu0 0.0
        %3830 = vmatpush1.msra.mxu0 0.0
        %3831 = vmatprep.subr.mxu0 0.0
        %3832 = vmatpush1.msra.mxu0 0.0
        %3833 = vmatprep.subr.mxu0 0.0
        %3834 = vmatpush1.msra.mxu0 0.0
        %3835 = vmatprep.subr.mxu0 0.0
        %3836 = vmatpush1.msra.mxu0 0.0
        %3837 = vmatprep.subr.mxu0 0.0
        %3838 = vmatpush1.msra.mxu0 0.0
        %3839 = vmatprep.subr.mxu0 0.0
        %3840 = vmatpush1.msra.mxu0 0.0
        %3841 = vmatprep.subr.mxu0 0.0
        %3842 = vmatpush1.msra.mxu0 0.0
        %3843 = vmatprep.subr.mxu0 0.0
        %3844 = vmatpush1.msra.mxu0 0.0
        %3845 = vmatprep.subr.mxu0 0.0
        %3846 = vmatpush1.msra.mxu0 0.0
        %3847 = vmatprep.subr.mxu0 0.0
        %3848 = vmatpush1.msra.mxu0 0.0
        %3849 = vmatprep.subr.mxu0 0.0
        %3850 = vmatpush1.msra.mxu0 0.0
        %3851 = vmatprep.subr.mxu0 0.0
        %3852 = vmatpush1.msra.mxu0 0.0
        %3853 = vmatprep.subr.mxu0 0.0
        %3854 = vmatpush1.msra.mxu0 0.0
        %3855 = vmatprep.subr.mxu0 0.0
        %3856 = vmatpush1.msra.mxu0 0.0
        %3857 = vmatprep.subr.mxu0 0.0
        %3858 = vmatpush1.msra.mxu0 0.0
        %3859 = vmatprep.subr.mxu0 0.0
        %3860 = vmatpush1.msra.mxu0 0.0
        %3861 = vmatprep.subr.mxu0 0.0
        %3862 = vmatpush1.msra.mxu0 0.0
        %3863 = vmatprep.subr.mxu0 0.0
        %3864 = vmatpush1.msra.mxu0 0.0
        %3865 = vmatprep.subr.mxu0 0.0
        %3866 = vmatpush1.msra.mxu0 0.0
        %3867 = vmatprep.subr.mxu0 0.0
        %3868 = vmatpush1.msra.mxu0 0.0
        %3869 = vmatprep.subr.mxu0 0.0
        %3870 = vmatpush1.msra.mxu0 0.0
        %3871 = vmatprep.mubr.f32.mxu0 0.0
        %v3872 = vand.u32 %v1794, 4294901760
        %3873 = vmatmul.mubr.f32.gmra.mrb[0].mxu0 %v3872
        %v3874 = vpop.f32.mrb[0].mxu0
        %v3875 = vadd.f32 %v3763, %v3874
        %v3876 = vpop.f32.mrb[0].mxu0
        %v3877 = vadd.f32 %v3765, %v3876
        %3878 = vdwg.mxu0
        %v3879 = vand.u32 %v3676, 4294901760
        %v3880 = vsub.f32 %v3676, %v3879
        %3881 = vmatprep.subr.mxu0 %v3880
        %v3882 = vand.u32 %v3675, 4294901760
        %v3883 = vsub.f32 %v3675, %v3882
        %3884 = vmatpush1.msra.mxu0 %v3883
        %v3885 = vand.u32 %v3678, 4294901760
        %v3886 = vsub.f32 %v3678, %v3885
        %3887 = vmatprep.subr.mxu0 %v3886
        %v3888 = vand.u32 %v3677, 4294901760
        %v3889 = vsub.f32 %v3677, %v3888
        %3890 = vmatpush1.msra.mxu0 %v3889
        %v3891 = vand.u32 %v3680, 4294901760
        %v3892 = vsub.f32 %v3680, %v3891
        %3893 = vmatprep.subr.mxu0 %v3892
        %v3894 = vand.u32 %v3679, 4294901760
        %v3895 = vsub.f32 %v3679, %v3894
        %3896 = vmatpush1.msra.mxu0 %v3895
        %v3897 = vand.u32 %v3682, 4294901760
        %v3898 = vsub.f32 %v3682, %v3897
        %3899 = vmatprep.subr.mxu0 %v3898
        %v3900 = vand.u32 %v3681, 4294901760
        %v3901 = vsub.f32 %v3681, %v3900
        %3902 = vmatpush1.msra.mxu0 %v3901
        %3903 = vmatprep.subr.mxu0 0.0
        %3904 = vmatpush1.msra.mxu0 0.0
        %3905 = vmatprep.subr.mxu0 0.0
        %3906 = vmatpush1.msra.mxu0 0.0
        %3907 = vmatprep.subr.mxu0 0.0
        %3908 = vmatpush1.msra.mxu0 0.0
        %3909 = vmatprep.subr.mxu0 0.0
        %3910 = vmatpush1.msra.mxu0 0.0
        %3911 = vmatprep.subr.mxu0 0.0
        %3912 = vmatpush1.msra.mxu0 0.0
        %3913 = vmatprep.subr.mxu0 0.0
        %3914 = vmatpush1.msra.mxu0 0.0
        %3915 = vmatprep.subr.mxu0 0.0
        %3916 = vmatpush1.msra.mxu0 0.0
        %3917 = vmatprep.subr.mxu0 0.0
        %3918 = vmatpush1.msra.mxu0 0.0
        %3919 = vmatprep.subr.mxu0 0.0
        %3920 = vmatpush1.msra.mxu0 0.0
        %3921 = vmatprep.subr.mxu0 0.0
        %3922 = vmatpush1.msra.mxu0 0.0
        %3923 = vmatprep.subr.mxu0 0.0
        %3924 = vmatpush1.msra.mxu0 0.0
        %3925 = vmatprep.subr.mxu0 0.0
        %3926 = vmatpush1.msra.mxu0 0.0
        %3927 = vmatprep.subr.mxu0 0.0
        %3928 = vmatpush1.msra.mxu0 0.0
        %3929 = vmatprep.subr.mxu0 0.0
        %3930 = vmatpush1.msra.mxu0 0.0
        %3931 = vmatprep.subr.mxu0 0.0
        %3932 = vmatpush1.msra.mxu0 0.0
        %3933 = vmatprep.subr.mxu0 0.0
        %3934 = vmatpush1.msra.mxu0 0.0
        %3935 = vmatprep.subr.mxu0 0.0
        %3936 = vmatpush1.msra.mxu0 0.0
        %3937 = vmatprep.subr.mxu0 0.0
        %3938 = vmatpush1.msra.mxu0 0.0
        %3939 = vmatprep.subr.mxu0 0.0
        %3940 = vmatpush1.msra.mxu0 0.0
        %3941 = vmatprep.subr.mxu0 0.0
        %3942 = vmatpush1.msra.mxu0 0.0
        %3943 = vmatprep.subr.mxu0 0.0
        %3944 = vmatpush1.msra.mxu0 0.0
        %3945 = vmatprep.subr.mxu0 0.0
        %3946 = vmatpush1.msra.mxu0 0.0
        %3947 = vmatprep.subr.mxu0 0.0
        %3948 = vmatpush1.msra.mxu0 0.0
        %3949 = vmatprep.subr.mxu0 0.0
        %3950 = vmatpush1.msra.mxu0 0.0
        %3951 = vmatprep.subr.mxu0 0.0
        %3952 = vmatpush1.msra.mxu0 0.0
        %3953 = vmatprep.subr.mxu0 0.0
        %3954 = vmatpush1.msra.mxu0 0.0
        %3955 = vmatprep.subr.mxu0 0.0
        %3956 = vmatpush1.msra.mxu0 0.0
        %3957 = vmatprep.subr.mxu0 0.0
        %3958 = vmatpush1.msra.mxu0 0.0
        %3959 = vmatprep.mubr.f32.mxu0 0.0
        %v3960 = vand.u32 %v1794, 4294901760
        %v3961 = vsub.f32 %v1794, %v3960
        %3962 = vmatmul.mubr.f32.gmra.mrb[0].mxu0 %v3961
        %v3963 = vpop.f32.mrb[0].mxu0
        %v3964 = vadd.f32 %v3875, %v3963
        %v3965 = vpop.f32.mrb[0].mxu0
        %v3966 = vadd.f32 %v3877, %v3965
        %3967 = vdwg.mxu0
        %v3968 = vand.u32 %v3676, 4294901760
        %3969 = vmatprep.subr.mxu0 %v3968
        %v3970 = vand.u32 %v3675, 4294901760
        %3971 = vmatpush1.msra.mxu0 %v3970
        %v3972 = vand.u32 %v3678, 4294901760
        %3973 = vmatprep.subr.mxu0 %v3972
        %v3974 = vand.u32 %v3677, 4294901760
        %3975 = vmatpush1.msra.mxu0 %v3974
        %v3976 = vand.u32 %v3680, 4294901760
        %3977 = vmatprep.subr.mxu0 %v3976
        %v3978 = vand.u32 %v3679, 4294901760
        %3979 = vmatpush1.msra.mxu0 %v3978
        %v3980 = vand.u32 %v3682, 4294901760
        %3981 = vmatprep.subr.mxu0 %v3980
        %v3982 = vand.u32 %v3681, 4294901760
        %3983 = vmatpush1.msra.mxu0 %v3982
        %3984 = vmatprep.subr.mxu0 0.0
        %3985 = vmatpush1.msra.mxu0 0.0
        %3986 = vmatprep.subr.mxu0 0.0
        %3987 = vmatpush1.msra.mxu0 0.0
        %3988 = vmatprep.subr.mxu0 0.0
        %3989 = vmatpush1.msra.mxu0 0.0
        %3990 = vmatprep.subr.mxu0 0.0
        %3991 = vmatpush1.msra.mxu0 0.0
        %3992 = vmatprep.subr.mxu0 0.0
        %3993 = vmatpush1.msra.mxu0 0.0
        %3994 = vmatprep.subr.mxu0 0.0
        %3995 = vmatpush1.msra.mxu0 0.0
        %3996 = vmatprep.subr.mxu0 0.0
        %3997 = vmatpush1.msra.mxu0 0.0
        %3998 = vmatprep.subr.mxu0 0.0
        %3999 = vmatpush1.msra.mxu0 0.0
        %4000 = vmatprep.subr.mxu0 0.0
        %4001 = vmatpush1.msra.mxu0 0.0
        %4002 = vmatprep.subr.mxu0 0.0
        %4003 = vmatpush1.msra.mxu0 0.0
        %4004 = vmatprep.subr.mxu0 0.0
        %4005 = vmatpush1.msra.mxu0 0.0
        %4006 = vmatprep.subr.mxu0 0.0
        %4007 = vmatpush1.msra.mxu0 0.0
        %4008 = vmatprep.subr.mxu0 0.0
        %4009 = vmatpush1.msra.mxu0 0.0
        %4010 = vmatprep.subr.mxu0 0.0
        %4011 = vmatpush1.msra.mxu0 0.0
        %4012 = vmatprep.subr.mxu0 0.0
        %4013 = vmatpush1.msra.mxu0 0.0
        %4014 = vmatprep.subr.mxu0 0.0
        %4015 = vmatpush1.msra.mxu0 0.0
        %4016 = vmatprep.subr.mxu0 0.0
        %4017 = vmatpush1.msra.mxu0 0.0
        %4018 = vmatprep.subr.mxu0 0.0
        %4019 = vmatpush1.msra.mxu0 0.0
        %4020 = vmatprep.subr.mxu0 0.0
        %4021 = vmatpush1.msra.mxu0 0.0
        %4022 = vmatprep.subr.mxu0 0.0
        %4023 = vmatpush1.msra.mxu0 0.0
        %4024 = vmatprep.subr.mxu0 0.0
        %4025 = vmatpush1.msra.mxu0 0.0
        %4026 = vmatprep.subr.mxu0 0.0
        %4027 = vmatpush1.msra.mxu0 0.0
        %4028 = vmatprep.subr.mxu0 0.0
        %4029 = vmatpush1.msra.mxu0 0.0
        %4030 = vmatprep.subr.mxu0 0.0
        %4031 = vmatpush1.msra.mxu0 0.0
        %4032 = vmatprep.subr.mxu0 0.0
        %4033 = vmatpush1.msra.mxu0 0.0
        %4034 = vmatprep.subr.mxu0 0.0
        %4035 = vmatpush1.msra.mxu0 0.0
        %4036 = vmatprep.subr.mxu0 0.0
        %4037 = vmatpush1.msra.mxu0 0.0
        %4038 = vmatprep.subr.mxu0 0.0
        %4039 = vmatpush1.msra.mxu0 0.0
        %4040 = vmatprep.mubr.f32.mxu0 0.0
        %v4041 = vand.u32 %v1794, 4294901760
        %v4042 = vsub.f32 %v1794, %v4041
        %v4043 = vand.u32 %v4042, 4294901760
        %4044 = vmatmul.mubr.f32.gmra.mrb[0].mxu0 %v4043
        %v4045 = vpop.f32.mrb[0].mxu0
        %v4046 = vadd.f32 %v3964, %v4045
        %v4047 = vpop.f32.mrb[0].mxu0
        %v4048 = vadd.f32 %v3966, %v4047
        %4049 = vdwg.mxu0
        %v4050 = vand.u32 %v3676, 4294901760
        %v4051 = vsub.f32 %v3676, %v4050
        %v4052 = vand.u32 %v4051, 4294901760
        %4053 = vmatprep.subr.mxu0 %v4052
        %v4054 = vand.u32 %v3675, 4294901760
        %v4055 = vsub.f32 %v3675, %v4054
        %v4056 = vand.u32 %v4055, 4294901760
        %4057 = vmatpush1.msra.mxu0 %v4056
        %v4058 = vand.u32 %v3678, 4294901760
        %v4059 = vsub.f32 %v3678, %v4058
        %v4060 = vand.u32 %v4059, 4294901760
        %4061 = vmatprep.subr.mxu0 %v4060
        %v4062 = vand.u32 %v3677, 4294901760
        %v4063 = vsub.f32 %v3677, %v4062
        %v4064 = vand.u32 %v4063, 4294901760
        %4065 = vmatpush1.msra.mxu0 %v4064
        %v4066 = vand.u32 %v3680, 4294901760
        %v4067 = vsub.f32 %v3680, %v4066
        %v4068 = vand.u32 %v4067, 4294901760
        %4069 = vmatprep.subr.mxu0 %v4068
        %v4070 = vand.u32 %v3679, 4294901760
        %v4071 = vsub.f32 %v3679, %v4070
        %v4072 = vand.u32 %v4071, 4294901760
        %4073 = vmatpush1.msra.mxu0 %v4072
        %v4074 = vand.u32 %v3682, 4294901760
        %v4075 = vsub.f32 %v3682, %v4074
        %v4076 = vand.u32 %v4075, 4294901760
        %4077 = vmatprep.subr.mxu0 %v4076
        %v4078 = vand.u32 %v3681, 4294901760
        %v4079 = vsub.f32 %v3681, %v4078
        %v4080 = vand.u32 %v4079, 4294901760
        %4081 = vmatpush1.msra.mxu0 %v4080
        %4082 = vmatprep.subr.mxu0 0.0
        %4083 = vmatpush1.msra.mxu0 0.0
        %4084 = vmatprep.subr.mxu0 0.0
        %4085 = vmatpush1.msra.mxu0 0.0
        %4086 = vmatprep.subr.mxu0 0.0
        %4087 = vmatpush1.msra.mxu0 0.0
        %4088 = vmatprep.subr.mxu0 0.0
        %4089 = vmatpush1.msra.mxu0 0.0
        %4090 = vmatprep.subr.mxu0 0.0
        %4091 = vmatpush1.msra.mxu0 0.0
        %4092 = vmatprep.subr.mxu0 0.0
        %4093 = vmatpush1.msra.mxu0 0.0
        %4094 = vmatprep.subr.mxu0 0.0
        %4095 = vmatpush1.msra.mxu0 0.0
        %4096 = vmatprep.subr.mxu0 0.0
        %4097 = vmatpush1.msra.mxu0 0.0
        %4098 = vmatprep.subr.mxu0 0.0
        %4099 = vmatpush1.msra.mxu0 0.0
        %4100 = vmatprep.subr.mxu0 0.0
        %4101 = vmatpush1.msra.mxu0 0.0
        %4102 = vmatprep.subr.mxu0 0.0
        %4103 = vmatpush1.msra.mxu0 0.0
        %4104 = vmatprep.subr.mxu0 0.0
        %4105 = vmatpush1.msra.mxu0 0.0
        %4106 = vmatprep.subr.mxu0 0.0
        %4107 = vmatpush1.msra.mxu0 0.0
        %4108 = vmatprep.subr.mxu0 0.0
        %4109 = vmatpush1.msra.mxu0 0.0
        %4110 = vmatprep.subr.mxu0 0.0
        %4111 = vmatpush1.msra.mxu0 0.0
        %4112 = vmatprep.subr.mxu0 0.0
        %4113 = vmatpush1.msra.mxu0 0.0
        %4114 = vmatprep.subr.mxu0 0.0
        %4115 = vmatpush1.msra.mxu0 0.0
        %4116 = vmatprep.subr.mxu0 0.0
        %4117 = vmatpush1.msra.mxu0 0.0
        %4118 = vmatprep.subr.mxu0 0.0
        %4119 = vmatpush1.msra.mxu0 0.0
        %4120 = vmatprep.subr.mxu0 0.0
        %4121 = vmatpush1.msra.mxu0 0.0
        %4122 = vmatprep.subr.mxu0 0.0
        %4123 = vmatpush1.msra.mxu0 0.0
        %4124 = vmatprep.subr.mxu0 0.0
        %4125 = vmatpush1.msra.mxu0 0.0
        %4126 = vmatprep.subr.mxu0 0.0
        %4127 = vmatpush1.msra.mxu0 0.0
        %4128 = vmatprep.subr.mxu0 0.0
        %4129 = vmatpush1.msra.mxu0 0.0
        %4130 = vmatprep.subr.mxu0 0.0
        %4131 = vmatpush1.msra.mxu0 0.0
        %4132 = vmatprep.subr.mxu0 0.0
        %4133 = vmatpush1.msra.mxu0 0.0
        %4134 = vmatprep.subr.mxu0 0.0
        %4135 = vmatpush1.msra.mxu0 0.0
        %4136 = vmatprep.subr.mxu0 0.0
        %4137 = vmatpush1.msra.mxu0 0.0
        %4138 = vmatprep.mubr.f32.mxu0 0.0
        %v4139 = vand.u32 %v1794, 4294901760
        %4140 = vmatmul.mubr.f32.gmra.mrb[0].mxu0 %v4139
        %v4141 = vpop.f32.mrb[0].mxu0
        %v4142 = vadd.f32 %v4046, %v4141
        %v4143 = vpop.f32.mrb[0].mxu0
        %v4144 = vadd.f32 %v4048, %v4143
        %4145 = vdwg.mxu0
        %v4146 = vand.u32 %v3676, 4294901760
        %4147 = vmatprep.subr.mxu0 %v4146
        %v4148 = vand.u32 %v3675, 4294901760
        %4149 = vmatpush1.msra.mxu0 %v4148
        %v4150 = vand.u32 %v3678, 4294901760
        %4151 = vmatprep.subr.mxu0 %v4150
        %v4152 = vand.u32 %v3677, 4294901760
        %4153 = vmatpush1.msra.mxu0 %v4152
        %v4154 = vand.u32 %v3680, 4294901760
        %4155 = vmatprep.subr.mxu0 %v4154
        %v4156 = vand.u32 %v3679, 4294901760
        %4157 = vmatpush1.msra.mxu0 %v4156
        %v4158 = vand.u32 %v3682, 4294901760
        %4159 = vmatprep.subr.mxu0 %v4158
        %v4160 = vand.u32 %v3681, 4294901760
        %4161 = vmatpush1.msra.mxu0 %v4160
        %4162 = vmatprep.subr.mxu0 0.0
        %4163 = vmatpush1.msra.mxu0 0.0
        %4164 = vmatprep.subr.mxu0 0.0
        %4165 = vmatpush1.msra.mxu0 0.0
        %4166 = vmatprep.subr.mxu0 0.0
        %4167 = vmatpush1.msra.mxu0 0.0
        %4168 = vmatprep.subr.mxu0 0.0
        %4169 = vmatpush1.msra.mxu0 0.0
        %4170 = vmatprep.subr.mxu0 0.0
        %4171 = vmatpush1.msra.mxu0 0.0
        %4172 = vmatprep.subr.mxu0 0.0
        %4173 = vmatpush1.msra.mxu0 0.0
        %4174 = vmatprep.subr.mxu0 0.0
        %4175 = vmatpush1.msra.mxu0 0.0
        %4176 = vmatprep.subr.mxu0 0.0
        %4177 = vmatpush1.msra.mxu0 0.0
        %4178 = vmatprep.subr.mxu0 0.0
        %4179 = vmatpush1.msra.mxu0 0.0
        %4180 = vmatprep.subr.mxu0 0.0
        %4181 = vmatpush1.msra.mxu0 0.0
        %4182 = vmatprep.subr.mxu0 0.0
        %4183 = vmatpush1.msra.mxu0 0.0
        %4184 = vmatprep.subr.mxu0 0.0
        %4185 = vmatpush1.msra.mxu0 0.0
        %4186 = vmatprep.subr.mxu0 0.0
        %4187 = vmatpush1.msra.mxu0 0.0
        %4188 = vmatprep.subr.mxu0 0.0
        %4189 = vmatpush1.msra.mxu0 0.0
        %4190 = vmatprep.subr.mxu0 0.0
        %4191 = vmatpush1.msra.mxu0 0.0
        %4192 = vmatprep.subr.mxu0 0.0
        %4193 = vmatpush1.msra.mxu0 0.0
        %4194 = vmatprep.subr.mxu0 0.0
        %4195 = vmatpush1.msra.mxu0 0.0
        %4196 = vmatprep.subr.mxu0 0.0
        %4197 = vmatpush1.msra.mxu0 0.0
        %4198 = vmatprep.subr.mxu0 0.0
        %4199 = vmatpush1.msra.mxu0 0.0
        %4200 = vmatprep.subr.mxu0 0.0
        %4201 = vmatpush1.msra.mxu0 0.0
        %4202 = vmatprep.subr.mxu0 0.0
        %4203 = vmatpush1.msra.mxu0 0.0
        %4204 = vmatprep.subr.mxu0 0.0
        %4205 = vmatpush1.msra.mxu0 0.0
        %4206 = vmatprep.subr.mxu0 0.0
        %4207 = vmatpush1.msra.mxu0 0.0
        %4208 = vmatprep.subr.mxu0 0.0
        %4209 = vmatpush1.msra.mxu0 0.0
        %4210 = vmatprep.subr.mxu0 0.0
        %4211 = vmatpush1.msra.mxu0 0.0
        %4212 = vmatprep.subr.mxu0 0.0
        %4213 = vmatpush1.msra.mxu0 0.0
        %4214 = vmatprep.subr.mxu0 0.0
        %4215 = vmatpush1.msra.mxu0 0.0
        %4216 = vmatprep.subr.mxu0 0.0
        %4217 = vmatpush1.msra.mxu0 0.0
        %4218 = vmatprep.mubr.f32.mxu0 0.0
        %v4219 = vand.u32 %v1794, 4294901760
        %4220 = vmatmul.mubr.f32.gmra.mrb[0].mxu0 %v4219
        %v4221 = vpop.f32.mrb[0].mxu0
        %v4222 = vadd.f32 %v4142, %v4221
        %v4223 = vpop.f32.mrb[0].mxu0
        %v4224 = vadd.f32 %v4144, %v4223
        %4225 = vdwg.mxu0
        %v4228 = vcombine.low %v4222, %v4224
        %v4230 = vunpack.c.l.s4 1966171168
        %v4231 = vunpack.c.0.s8 %v4230
        %v4232 = vlaneseq
        %v4233 = vshrl.u32 %v4232, 7
        %v4234 = vsub.s32 %v4231, %v4233
        %v4235 = vrot.slane %v4228, %v4234
        %v4237 = vunpack.c.l.s4 1966171168
        %v4238 = vunpack.c.0.s8 %v4237
        %v4239 = vlaneseq
        %v4240 = vshrl.u32 %v4239, 7
        %v4241 = vsub.s32 %v4238, %v4240
        %v4242 = vrot.slane %v4235, %v4241
        %s4244 = scalar_lea.vmem %s328, 2 [#allocation3]
        %4245 = vst.msk [vmem:[%s4244] sm:$0x3] %vm2360, %v4242
        %s4246 = sand.u32 %s227, 1
        %s4247 = scalar_lea.sflag [#allocation4], %s4246
        %s4248 = sand.u32 %s227, 1
        %s4249 = smul.addr %s4248, 4
        %s4250 = scalar_lea.vmem [#allocation3], %s4249
        // Predicated region
        $region57: #{pinn_forward_t.1} parent=55 // pred_check
          %p4251 = pneg %p237
        $region58: #{pinn_forward_t.1} parent=55 // pred_check_branch
          %4253 = sbr.rel (%p4251) target = $region60
        $region59: #{pinn_forward_t.1} parent=55 // pred_region
          %s4254 = smul.u32 4, %s25
          %s4256 = ssub.s32 64, 64
          %4257 = vsyncadd %s4247, %s4256
          %s4258 = smul.addr %s4254, 16
          %s4259 = scalar_lea.hbm %s9, %s4258
          %s4261 = sshll.u32 %s4250, 4
          %s4262 = int_to_ptr.vmem [resolvable:$true] %s4261
          %4264 = dma.vmem_to_hbm [thread:$0]  %s4262, 64, %s4259, %s4247
        $region60: #{pinn_forward_t.1} parent=55 // pred_fallthru
          _
      $region56: #{pinn_forward_t.1} parent=5 // pred_fallthru
        _
      %p4265 = scmp.le.s32.totalorder 2, %s20
      // Predicated region
      $region61: #{pinn_forward_t.1} parent=5 // pred_check
        %p4266 = pneg %p4265
      $region62: #{pinn_forward_t.1} parent=5 // pred_check_branch
        %4268 = sbr.rel (%p4266) target = $region64
      $region63: #{pinn_forward_t.1} parent=5 // pred_region
        %s4269 = ssub.s32 %s20, 2
        // Predicated region
        $region65: #{pinn_forward_t.1} parent=63 // pred_check
          %p4270 = pneg %p243
        $region66: #{pinn_forward_t.1} parent=63 // pred_check_branch
          %4272 = sbr.rel (%p4270) target = $region68
        $region67: #{pinn_forward_t.1} parent=63 // pred_region
          %s4273 = sand.u32 %s228, 1
          %s4274 = scalar_lea.sflag [#allocation4], %s4273
          %s4275 = sand.u32 %s228, 1
          %s4276 = smul.addr %s4275, 4
          %s4277 = scalar_lea.vmem [#allocation3], %s4276
          %4278 = dma.done %s4274, 64
        $region68: #{pinn_forward_t.1} parent=63 // pred_fallthru
          _
      $region64: #{pinn_forward_t.1} parent=5 // pred_fallthru
        _
    $region6: #{pinn_forward_t.1} parent=1 // loop_footer
      %s24 = sadd.s32 1, %s20
    $region7: #{pinn_forward_t.1} parent=1 // loop_footer_branch
      %19 = sbr.rel target = $region3
    $region8: #{pinn_forward_t.1} parent=1 // loop_exit
      _
    %4279 = vsyncpa [#allocation4], 1
    %s4280 = scalar_lea.sflag [#allocation4], 1
    %4281 = vsyncpa %s4280, 1

</llo_original>
